<compile_context>
chip_gen: v6e
topology: v6e:2x2x1
jax: 0.10.0
libtpu: 0.0.40
codegen_flags: <defaults>
</compile_context>

<pallas_src>
import jax
import jax.numpy as jnp
from jax.experimental import pallas as pl
from jax.experimental.pallas import tpu as pltpu

# ---------------- model hyper-parameters --------------------------------------------------
IN_FEATS = 3          # (preprocessed grad: 2 cols) + (flat param: 1 col)
HIDDEN = 32           # hidden_size
NUM_LAYERS = 2        # num_layers
EPS = 1e-5


# ---------------- LayerNorm helpers --------------------------------------------------------
def _layer_norm_bm(x, w, b, eps=EPS):
    """Batch-major LayerNorm1D (features on axis 1). Host-side / reference use."""
    n = x.shape[1]
    mean = jnp.mean(x, axis=1, keepdims=True)
    var = jnp.sum((x - mean) ** 2, axis=1, keepdims=True) / (n - 1)   # unbiased std (torch)
    return (x - mean) / (jnp.sqrt(var) + eps) * w[None, :] + b[None, :]


def _layer_norm_fm(x, w_col, b_col, eps=EPS):
    """Feature-major LayerNorm1D (features on axis 0 / sublanes). w_col/b_col are (F, 1)."""
    n = x.shape[0]
    mean = jnp.mean(x, axis=0, keepdims=True)
    var = jnp.sum((x - mean) ** 2, axis=0, keepdims=True) / (n - 1)
    denom = jnp.sqrt(var) + eps
    # EUP approximate reciprocal + one Newton step: divide stays off the VPU, accuracy ~f32.
    inv = pl.reciprocal(denom, approx=True)
    inv = inv * (2.0 - denom * inv)
    return (x - mean) * inv * w_col + b_col


# ---------------- kernel -------------------------------------------------------------------
def meta_optimizer_kernel(
    x_ref,                                   # (IN_FEATS, TILE_N)           f32
    w1_ref, b1_ref, ln1w_ref, ln1b_ref,      # (H,3), (H,1), (H,1), (H,1)   f32
    wi_ref, bi_ref, lniw_ref, lnib_ref,      # (L,4H,H) bf16, (L,4H,1) f32 x3
    lnow_ref, lnob_ref,                      # (L,H,1), (L,H,1)             f32
    w2_ref, b2_ref,                          # (H,1), (1,1)                 f32
    o_ref,                                   # (1, TILE_N)                  f32
):
    H = HIDDEN
    x = x_ref[...]                                                           # (3, Tn)

    # linear1 + ln1 + tanh (feature-major; PyTorch (out,in) weight used as-is, no .T).
    # K=3 so this dot is tiny; kept in exact f32.
    # TODO(synk): move this K=3 dot to VPU mul-adds if a bundle dump shows the MXU push
    # slot binding (perf review: low priority, verify first).
    h = jnp.dot(w1_ref[...], x, preferred_element_type=jnp.float32) + b1_ref[...]
    h = jnp.tanh(_layer_norm_fm(h, ln1w_ref[...], ln1b_ref[...]))            # (H, Tn) f32

    for l in range(NUM_LAYERS):                                              # unrolled (static)
        # hx = cx = 0 on the single step the module runs:
        #   LN(h2h(hx)) == LN(b_h2h)  -> constant row, folded into lnib on the host
        #   forget_gate * cx == 0     -> dropped
        # i2h matmul on the MXU in bf16 (weights pre-cast on host) with f32 accumulation.
        i2h = jnp.dot(wi_ref[l], h.astype(jnp.bfloat16),
                      preferred_element_type=jnp.float32) + bi_ref[l]        # (4H, Tn) f32

        # LayerNorm statistics over the full 4H feature axis (required for correctness),
        # but scale/shift + activation applied only to the three consumed gate slices
        # (forget-gate rows H:2H are dead because cx == 0).
        mean = jnp.mean(i2h, axis=0, keepdims=True)                          # (1, Tn)
        d = i2h - mean
        var = jnp.sum(d * d, axis=0, keepdims=True) / (4 * H - 1)            # unbiased (torch)
        denom = jnp.sqrt(var) + EPS
        inv = pl.reciprocal(denom, approx=True)                              # EUP
        inv = inv * (2.0 - denom * inv)                                      # Newton step

        lniw = lniw_ref[l]                                                   # (4H, 1)
        lnib = lnib_ref[l]                                                   # (4H, 1) = ln_b + LN(b_h2h)

        def gate(lo, hi):
            return d[lo:hi, :] * inv * lniw[lo:hi, :] + lnib[lo:hi, :]

        in_gate = jax.nn.sigmoid(gate(0 * H, 1 * H))
        out_gate = jax.nn.sigmoid(gate(2 * H, 3 * H))
        in_transform = jnp.tanh(gate(3 * H, 4 * H))

        cx = in_gate * in_transform                                          # forget*cx == 0
        h = out_gate * jnp.tanh(_layer_norm_fm(cx, lnow_ref[l], lnob_ref[l]))  # (H, Tn)

    # linear2 (H -> 1): broadcast-multiply + sublane reduce; output is lane-dense (1, Tn).
    o_ref[...] = jnp.sum(w2_ref[...] * h, axis=0, keepdims=True) + b2_ref[...]


# ---------------- wrapper ------------------------------------------------------------------
def _choose_tile_n(n):
    """Batch (lane) tile: as big as is useful to amortize the ~0.35us per-grid-step overhead
    and widen the unmasked lane-dense output store, but capped so the grid keeps >=2 steps
    when there is enough work (v7x has 2 TensorCores splitting the parallel axis).
    VMEM is never the binding resource for this kernel, so no per-generation shrinkage."""
    half = pl.cdiv(n, 2 * 128) * 128           # smallest multiple of 128 >= n/2
    return int(max(256, min(2048, half)))


def meta_optimizer_forward(x, params):
    """x: (N, 3) float32 batch-major (as the module receives it). Returns (N,) float32."""
    N = x.shape[0]
    L, H = NUM_LAYERS, HIDDEN
    tile_n = _choose_tile_n(N)
    n_pad = pl.cdiv(N, tile_n) * tile_n
    # TODO(synk): this pad+transpose is one avoidable HBM round-trip of x; keep x
    # feature-major upstream if chasing the last few percent.
    x_fm = jnp.pad(x, ((0, n_pad - N), (0, 0))).T                            # (3, n_pad)

    # Constant h2h contribution (hx == 0 => h2h pre-activation is just its bias row),
    # folded into the LN_i2h bias so the kernel never adds it explicitly.
    g_h = jnp.stack([
        _layer_norm_bm(params["b_h2h"][l][None, :],
                       params["ln_h2h_w"][l], params["ln_h2h_b"][l])[0]
        for l in range(L)
    ])                                                                        # (L, 4H)

    col = lambda a: a[..., None]                                              # (..., F) -> (..., F, 1)
    args = (
        x_fm,
        params["w1"], col(params["b1"]), col(params["ln1_w"]), col(params["ln1_b"]),
        params["w_i2h"].astype(jnp.bfloat16),                                 # MXU operand: bf16
        col(params["b_i2h"]),
        col(params["ln_i2h_w"]), col(params["ln_i2h_b"] + g_h),               # gh folded in
        col(params["ln_h2o_w"]), col(params["ln_h2o_b"]),
        params["w2"].reshape(H, 1), params["b2"].reshape(1, 1),
    )

    def _const_spec(a):
        nd = a.ndim
        return pl.BlockSpec(a.shape, lambda i, _nd=nd: (0,) * _nd)            # VMEM-resident

    in_specs = ([pl.BlockSpec((IN_FEATS, tile_n), lambda i: (0, i))]
                + [_const_spec(a) for a in args[1:]])

    out = pl.pallas_call(
        meta_optimizer_kernel,
        out_shape=jax.ShapeDtypeStruct((1, n_pad), jnp.float32),
        grid=(n_pad // tile_n,),
        in_specs=in_specs,
        out_specs=pl.BlockSpec((1, tile_n), lambda i: (0, i)),
        compiler_params=pltpu.CompilerParams(dimension_semantics=("parallel",)),
    )(*args)
    return out[0, :N]                                                         # (N,)


# ---------------- pure-JAX reference (full un-eliminated math) -----------------------------
def meta_optimizer_reference(x, params, matmul_dtype=jnp.float32):
    """Full reference with zero LSTM states. matmul_dtype controls only the i2h dot
    operand precision (accumulation always f32), to allow a matched-precision check."""
    H = HIDDEN
    md = matmul_dtype
    h = x @ params["w1"].T + params["b1"][None, :]
    h = jnp.tanh(_layer_norm_bm(h, params["ln1_w"], params["ln1_b"]))
    n = h.shape[0]
    for l in range(NUM_LAYERS):
        hx = jnp.zeros((n, H), jnp.float32)
        cx = jnp.zeros((n, H), jnp.float32)
        i2h = jnp.dot(h.astype(md), params["w_i2h"][l].T.astype(md),
                      preferred_element_type=jnp.float32) + params["b_i2h"][l][None, :]
        h2h = hx @ params["w_h2h"][l].T + params["b_h2h"][l][None, :]
        g = (_layer_norm_bm(i2h, params["ln_i2h_w"][l], params["ln_i2h_b"][l])
             + _layer_norm_bm(h2h, params["ln_h2h_w"][l], params["ln_h2h_b"][l]))
        ig = jax.nn.sigmoid(g[:, 0 * H:1 * H])
        fg = jax.nn.sigmoid(g[:, 1 * H:2 * H])
        og = jax.nn.sigmoid(g[:, 2 * H:3 * H])
        it = jnp.tanh(g[:, 3 * H:4 * H])
        cx = fg * cx + ig * it
        hx = og * jnp.tanh(_layer_norm_bm(cx, params["ln_h2o_w"][l], params["ln_h2o_b"][l]))
        h = hx
    out = h @ params["w2"].T + params["b2"][None, :]
    return jnp.squeeze(out, axis=-1)


# ---------------- parameter init (mimics PyTorch defaults) ---------------------------------
def init_params(key):
    H, L, I = HIDDEN, NUM_LAYERS, IN_FEATS
    ks = jax.random.split(key, 8)

    def lin(k, in_f, shape_w, shape_b):
        bound = 1.0 / jnp.sqrt(jnp.float32(in_f))
        kw, kb = jax.random.split(k)
        w = jax.random.uniform(kw, shape_w, jnp.float32, -bound, bound)
        b = jax.random.uniform(kb, shape_b, jnp.float32, -bound, bound)
        return w, b

    w1, b1 = lin(ks[0], I, (H, I), (H,))
    w_i2h, b_i2h = lin(ks[1], H, (L, 4 * H, H), (L, 4 * H))
    w_h2h, b_h2h = lin(ks[2], H, (L, 4 * H, H), (L, 4 * H))
    w2_raw, _ = lin(ks[3], H, (1, H), (1,))
    return dict(
        w1=w1, b1=b1,
        ln1_w=jnp.ones((H,), jnp.float32), ln1_b=jnp.zeros((H,), jnp.float32),
        w_i2h=w_i2h, b_i2h=b_i2h, w_h2h=w_h2h, b_h2h=b_h2h,
        ln_i2h_w=jnp.ones((L, 4 * H), jnp.float32), ln_i2h_b=jnp.zeros((L, 4 * H), jnp.float32),
        ln_h2h_w=jnp.ones((L, 4 * H), jnp.float32), ln_h2h_b=jnp.zeros((L, 4 * H), jnp.float32),
        ln_h2o_w=jnp.ones((L, H), jnp.float32), ln_h2o_b=jnp.zeros((L, H), jnp.float32),
        w2=w2_raw * 0.1,                                   # linear2.weight.data.mul_(0.1)
        b2=jnp.zeros((1,), jnp.float32),                   # linear2.bias.data.fill_(0.0)
    )


if __name__ == "__main__":
    key = jax.random.PRNGKey(0)
    k_x, k_p = jax.random.split(key)
    # Input: rows of [preprocessed_grad(2), flat_param(1)] -> (N, 3).
    # N not a tile multiple -> exercises padding; tile chooser gives TILE_N=512, grid=2.
    N = 1000
    x = jax.random.normal(k_x, (N, IN_FEATS), jnp.float32)
    params = init_params(k_p)

    y = jax.block_until_ready(meta_optimizer_forward(x, params))
    # Matched-precision reference (bf16 i2h-matmul operands, f32 everywhere else):
    # validates the kernel structure (zero-state elimination, gh folding, LN tail trim).
    y_ref_mp = jax.block_until_ready(meta_optimizer_reference(x, params, jnp.bfloat16))
    # Full-f32 reference: sanity check that the deliberate bf16 MXU cast stays small.
    y_ref_f32 = jax.block_until_ready(meta_optimizer_reference(x, params, jnp.float32))

    assert y.shape == (N,), y.shape
    assert jnp.allclose(y, y_ref_mp, atol=1e-3, rtol=1e-3), float(jnp.max(jnp.abs(y - y_ref_mp)))
    assert jnp.allclose(y, y_ref_f32, atol=2e-2, rtol=2e-2), float(jnp.max(jnp.abs(y - y_ref_f32)))
    print("KERNEL_OK")
</pallas_src>

<mosaic_0001>
module attributes {stable_mosaic.version = 11 : i64} {
  func.func @meta_optimizer_kernel(%arg0: i32, %arg1: memref<3x512xf32, #tpu.memory_space<vmem>>, %arg2: memref<32x3xf32, #tpu.memory_space<vmem>>, %arg3: memref<32x1xf32, #tpu.memory_space<vmem>>, %arg4: memref<32x1xf32, #tpu.memory_space<vmem>>, %arg5: memref<32x1xf32, #tpu.memory_space<vmem>>, %arg6: memref<2x128x32xbf16, #tpu.memory_space<vmem>>, %arg7: memref<2x128x1xf32, #tpu.memory_space<vmem>>, %arg8: memref<2x128x1xf32, #tpu.memory_space<vmem>>, %arg9: memref<2x128x1xf32, #tpu.memory_space<vmem>>, %arg10: memref<2x32x1xf32, #tpu.memory_space<vmem>>, %arg11: memref<2x32x1xf32, #tpu.memory_space<vmem>>, %arg12: memref<32x1xf32, #tpu.memory_space<vmem>>, %arg13: memref<1x1xf32, #tpu.memory_space<vmem>>, %arg14: memref<1x512xf32, #tpu.memory_space<vmem>>) attributes {dimension_semantics = [#tpu.dimension_semantics<parallel>], iteration_bounds = array<i64: 2>, scalar_prefetch = 0 : i64, scratch_operands = 0 : i64, tpu.core_type = #tpu.core_type<tc>, window_params = [{transform_indices = @transform_0, window_bounds = array<i64: 3, 512>}, {pipeline_mode = #tpu.pipeline_mode<synchronous>, transform_indices = @transform_1, window_bounds = array<i64: 32, 3>}, {pipeline_mode = #tpu.pipeline_mode<synchronous>, transform_indices = @transform_2, window_bounds = array<i64: 32, 1>}, {pipeline_mode = #tpu.pipeline_mode<synchronous>, transform_indices = @transform_3, window_bounds = array<i64: 32, 1>}, {pipeline_mode = #tpu.pipeline_mode<synchronous>, transform_indices = @transform_4, window_bounds = array<i64: 32, 1>}, {pipeline_mode = #tpu.pipeline_mode<synchronous>, transform_indices = @transform_5, window_bounds = array<i64: 2, 128, 32>}, {pipeline_mode = #tpu.pipeline_mode<synchronous>, transform_indices = @transform_6, window_bounds = array<i64: 2, 128, 1>}, {pipeline_mode = #tpu.pipeline_mode<synchronous>, transform_indices = @transform_7, window_bounds = array<i64: 2, 128, 1>}, {pipeline_mode = #tpu.pipeline_mode<synchronous>, transform_indices = @transform_8, window_bounds = array<i64: 2, 128, 1>}, {pipeline_mode = #tpu.pipeline_mode<synchronous>, transform_indices = @transform_9, window_bounds = array<i64: 2, 32, 1>}, {pipeline_mode = #tpu.pipeline_mode<synchronous>, transform_indices = @transform_10, window_bounds = array<i64: 2, 32, 1>}, {pipeline_mode = #tpu.pipeline_mode<synchronous>, transform_indices = @transform_11, window_bounds = array<i64: 32, 1>}, {pipeline_mode = #tpu.pipeline_mode<synchronous>, transform_indices = @transform_12, window_bounds = array<i64: 1, 1>}, {transform_indices = @transform_13, window_bounds = array<i64: 1, 512>}]} {
    %c0 = arith.constant 0 : index
    %c0_0 = arith.constant 0 : index
    %0 = vector.load %arg1[%c0, %c0_0] : memref<3x512xf32, #tpu.memory_space<vmem>>, vector<3x512xf32>
    %c0_1 = arith.constant 0 : index
    %c0_2 = arith.constant 0 : index
    %1 = vector.load %arg2[%c0_1, %c0_2] : memref<32x3xf32, #tpu.memory_space<vmem>>, vector<32x3xf32>
    %cst = arith.constant dense<0.000000e+00> : vector<32x512xf32>
    %2 = tpu.matmul %1, %0, %cst {dimension_numbers = #tpu.dot_dimension_numbers<[1], [0], [0], [1], [0, 0, 1, 1], [], []>} : vector<32x3xf32>, vector<3x512xf32>, vector<32x512xf32> -> vector<32x512xf32>
    %c0_3 = arith.constant 0 : index
    %c0_4 = arith.constant 0 : index
    %3 = vector.load %arg3[%c0_3, %c0_4] : memref<32x1xf32, #tpu.memory_space<vmem>>, vector<32x1xf32>
    %4 = vector.broadcast %3 : vector<32x1xf32> to vector<32x512xf32>
    %5 = arith.addf %2, %4 : vector<32x512xf32>
    %c0_5 = arith.constant 0 : index
    %c0_6 = arith.constant 0 : index
    %6 = vector.load %arg4[%c0_5, %c0_6] : memref<32x1xf32, #tpu.memory_space<vmem>>, vector<32x1xf32>
    %c0_7 = arith.constant 0 : index
    %c0_8 = arith.constant 0 : index
    %7 = vector.load %arg5[%c0_7, %c0_8] : memref<32x1xf32, #tpu.memory_space<vmem>>, vector<32x1xf32>
    %cst_9 = arith.constant dense<0.000000e+00> : vector<512xf32>
    %8 = vector.multi_reduction <add>, %5, %cst_9 [0] : vector<32x512xf32> to vector<512xf32>
    %9 = vector.shape_cast %8 : vector<512xf32> to vector<1x512xf32>
    %cst_10 = arith.constant 3.200000e+01 : f32
    %10 = vector.broadcast %cst_10 : f32 to vector<1x512xf32>
    %11 = arith.divf %9, %10 : vector<1x512xf32>
    %12 = vector.broadcast %11 : vector<1x512xf32> to vector<32x512xf32>
    %13 = arith.subf %5, %12 : vector<32x512xf32>
    %14 = arith.mulf %13, %13 : vector<32x512xf32>
    %cst_11 = arith.constant dense<0.000000e+00> : vector<512xf32>
    %15 = vector.multi_reduction <add>, %14, %cst_11 [0] : vector<32x512xf32> to vector<512xf32>
    %16 = vector.shape_cast %15 : vector<512xf32> to vector<1x512xf32>
    %cst_12 = arith.constant 3.100000e+01 : f32
    %17 = vector.broadcast %cst_12 : f32 to vector<1x512xf32>
    %18 = arith.divf %16, %17 : vector<1x512xf32>
    %19 = math.sqrt %18 : vector<1x512xf32>
    %cst_13 = arith.constant 9.99999974E-6 : f32
    %20 = vector.broadcast %cst_13 : f32 to vector<1x512xf32>
    %21 = arith.addf %19, %20 : vector<1x512xf32>
    %22 = tpu.reciprocal %21 {approx = true} : vector<1x512xf32> -> vector<1x512xf32>
    %23 = arith.mulf %21, %22 : vector<1x512xf32>
    %cst_14 = arith.constant 2.000000e+00 : f32
    %24 = vector.broadcast %cst_14 : f32 to vector<1x512xf32>
    %25 = arith.subf %24, %23 : vector<1x512xf32>
    %26 = arith.mulf %22, %25 : vector<1x512xf32>
    %27 = vector.broadcast %11 : vector<1x512xf32> to vector<32x512xf32>
    %28 = arith.subf %5, %27 : vector<32x512xf32>
    %29 = vector.broadcast %26 : vector<1x512xf32> to vector<32x512xf32>
    %30 = arith.mulf %28, %29 : vector<32x512xf32>
    %31 = vector.broadcast %6 : vector<32x1xf32> to vector<32x512xf32>
    %32 = arith.mulf %30, %31 : vector<32x512xf32>
    %33 = vector.broadcast %7 : vector<32x1xf32> to vector<32x512xf32>
    %34 = arith.addf %32, %33 : vector<32x512xf32>
    %35 = math.tanh %34 : vector<32x512xf32>
    %c0_15 = arith.constant 0 : index
    %c0_16 = arith.constant 0 : index
    %c0_17 = arith.constant 0 : index
    %36 = vector.load %arg6[%c0_15, %c0_16, %c0_17] : memref<2x128x32xbf16, #tpu.memory_space<vmem>>, vector<1x128x32xbf16>
    %37 = vector.shape_cast %36 : vector<1x128x32xbf16> to vector<128x32xbf16>
    %38 = arith.truncf %35 : vector<32x512xf32> to vector<32x512xbf16>
    %cst_18 = arith.constant dense<0.000000e+00> : vector<128x512xf32>
    %39 = tpu.matmul %37, %38, %cst_18 {dimension_numbers = #tpu.dot_dimension_numbers<[1], [0], [0], [1], [0, 0, 1, 1], [], []>} : vector<128x32xbf16>, vector<32x512xbf16>, vector<128x512xf32> -> vector<128x512xf32>
    %c0_19 = arith.constant 0 : index
    %c0_20 = arith.constant 0 : index
    %c0_21 = arith.constant 0 : index
    %40 = vector.load %arg7[%c0_19, %c0_20, %c0_21] : memref<2x128x1xf32, #tpu.memory_space<vmem>>, vector<1x128x1xf32>
    %41 = vector.shape_cast %40 : vector<1x128x1xf32> to vector<128x1xf32>
    %42 = vector.broadcast %41 : vector<128x1xf32> to vector<128x512xf32>
    %43 = arith.addf %39, %42 : vector<128x512xf32>
    %cst_22 = arith.constant dense<0.000000e+00> : vector<512xf32>
    %44 = vector.multi_reduction <add>, %43, %cst_22 [0] : vector<128x512xf32> to vector<512xf32>
    %45 = vector.shape_cast %44 : vector<512xf32> to vector<1x512xf32>
    %cst_23 = arith.constant 1.280000e+02 : f32
    %46 = vector.broadcast %cst_23 : f32 to vector<1x512xf32>
    %47 = arith.divf %45, %46 : vector<1x512xf32>
    %48 = vector.broadcast %47 : vector<1x512xf32> to vector<128x512xf32>
    %49 = arith.subf %43, %48 : vector<128x512xf32>
    %50 = arith.mulf %49, %49 : vector<128x512xf32>
    %cst_24 = arith.constant dense<0.000000e+00> : vector<512xf32>
    %51 = vector.multi_reduction <add>, %50, %cst_24 [0] : vector<128x512xf32> to vector<512xf32>
    %52 = vector.shape_cast %51 : vector<512xf32> to vector<1x512xf32>
    %cst_25 = arith.constant 1.270000e+02 : f32
    %53 = vector.broadcast %cst_25 : f32 to vector<1x512xf32>
    %54 = arith.divf %52, %53 : vector<1x512xf32>
    %55 = math.sqrt %54 : vector<1x512xf32>
    %cst_26 = arith.constant 9.99999974E-6 : f32
    %56 = vector.broadcast %cst_26 : f32 to vector<1x512xf32>
    %57 = arith.addf %55, %56 : vector<1x512xf32>
    %58 = tpu.reciprocal %57 {approx = true} : vector<1x512xf32> -> vector<1x512xf32>
    %59 = arith.mulf %57, %58 : vector<1x512xf32>
    %cst_27 = arith.constant 2.000000e+00 : f32
    %60 = vector.broadcast %cst_27 : f32 to vector<1x512xf32>
    %61 = arith.subf %60, %59 : vector<1x512xf32>
    %62 = arith.mulf %58, %61 : vector<1x512xf32>
    %c0_28 = arith.constant 0 : index
    %c0_29 = arith.constant 0 : index
    %c0_30 = arith.constant 0 : index
    %63 = vector.load %arg8[%c0_28, %c0_29, %c0_30] : memref<2x128x1xf32, #tpu.memory_space<vmem>>, vector<1x128x1xf32>
    %64 = vector.shape_cast %63 : vector<1x128x1xf32> to vector<128x1xf32>
    %c0_31 = arith.constant 0 : index
    %c0_32 = arith.constant 0 : index
    %c0_33 = arith.constant 0 : index
    %65 = vector.load %arg9[%c0_31, %c0_32, %c0_33] : memref<2x128x1xf32, #tpu.memory_space<vmem>>, vector<1x128x1xf32>
    %66 = vector.shape_cast %65 : vector<1x128x1xf32> to vector<128x1xf32>
    %67 = vector.extract_strided_slice %49 {offsets = [0, 0], sizes = [32, 512], strides = [1, 1]} : vector<128x512xf32> to vector<32x512xf32>
    %68 = vector.broadcast %62 : vector<1x512xf32> to vector<32x512xf32>
    %69 = arith.mulf %67, %68 : vector<32x512xf32>
    %70 = vector.extract_strided_slice %64 {offsets = [0, 0], sizes = [32, 1], strides = [1, 1]} : vector<128x1xf32> to vector<32x1xf32>
    %71 = vector.broadcast %70 : vector<32x1xf32> to vector<32x512xf32>
    %72 = arith.mulf %69, %71 : vector<32x512xf32>
    %73 = vector.extract_strided_slice %66 {offsets = [0, 0], sizes = [32, 1], strides = [1, 1]} : vector<128x1xf32> to vector<32x1xf32>
    %74 = vector.broadcast %73 : vector<32x1xf32> to vector<32x512xf32>
    %75 = arith.addf %72, %74 : vector<32x512xf32>
    %76 = arith.negf %75 : vector<32x512xf32>
    %77 = math.exp %76 : vector<32x512xf32>
    %cst_34 = arith.constant 1.000000e+00 : f32
    %78 = vector.broadcast %cst_34 : f32 to vector<32x512xf32>
    %79 = arith.addf %78, %77 : vector<32x512xf32>
    %80 = arith.divf %78, %79 : vector<32x512xf32>
    %81 = vector.extract_strided_slice %49 {offsets = [64, 0], sizes = [32, 512], strides = [1, 1]} : vector<128x512xf32> to vector<32x512xf32>
    %82 = vector.broadcast %62 : vector<1x512xf32> to vector<32x512xf32>
    %83 = arith.mulf %81, %82 : vector<32x512xf32>
    %84 = vector.extract_strided_slice %64 {offsets = [64, 0], sizes = [32, 1], strides = [1, 1]} : vector<128x1xf32> to vector<32x1xf32>
    %85 = vector.broadcast %84 : vector<32x1xf32> to vector<32x512xf32>
    %86 = arith.mulf %83, %85 : vector<32x512xf32>
    %87 = vector.extract_strided_slice %66 {offsets = [64, 0], sizes = [32, 1], strides = [1, 1]} : vector<128x1xf32> to vector<32x1xf32>
    %88 = vector.broadcast %87 : vector<32x1xf32> to vector<32x512xf32>
    %89 = arith.addf %86, %88 : vector<32x512xf32>
    %90 = arith.negf %89 : vector<32x512xf32>
    %91 = math.exp %90 : vector<32x512xf32>
    %cst_35 = arith.constant 1.000000e+00 : f32
    %92 = vector.broadcast %cst_35 : f32 to vector<32x512xf32>
    %93 = arith.addf %92, %91 : vector<32x512xf32>
    %94 = arith.divf %92, %93 : vector<32x512xf32>
    %95 = vector.extract_strided_slice %49 {offsets = [96, 0], sizes = [32, 512], strides = [1, 1]} : vector<128x512xf32> to vector<32x512xf32>
    %96 = vector.broadcast %62 : vector<1x512xf32> to vector<32x512xf32>
    %97 = arith.mulf %95, %96 : vector<32x512xf32>
    %98 = vector.extract_strided_slice %64 {offsets = [96, 0], sizes = [32, 1], strides = [1, 1]} : vector<128x1xf32> to vector<32x1xf32>
    %99 = vector.broadcast %98 : vector<32x1xf32> to vector<32x512xf32>
    %100 = arith.mulf %97, %99 : vector<32x512xf32>
    %101 = vector.extract_strided_slice %66 {offsets = [96, 0], sizes = [32, 1], strides = [1, 1]} : vector<128x1xf32> to vector<32x1xf32>
    %102 = vector.broadcast %101 : vector<32x1xf32> to vector<32x512xf32>
    %103 = arith.addf %100, %102 : vector<32x512xf32>
    %104 = math.tanh %103 : vector<32x512xf32>
    %105 = arith.mulf %80, %104 : vector<32x512xf32>
    %c0_36 = arith.constant 0 : index
    %c0_37 = arith.constant 0 : index
    %c0_38 = arith.constant 0 : index
    %106 = vector.load %arg10[%c0_36, %c0_37, %c0_38] : memref<2x32x1xf32, #tpu.memory_space<vmem>>, vector<1x32x1xf32>
    %107 = vector.shape_cast %106 : vector<1x32x1xf32> to vector<32x1xf32>
    %c0_39 = arith.constant 0 : index
    %c0_40 = arith.constant 0 : index
    %c0_41 = arith.constant 0 : index
    %108 = vector.load %arg11[%c0_39, %c0_40, %c0_41] : memref<2x32x1xf32, #tpu.memory_space<vmem>>, vector<1x32x1xf32>
    %109 = vector.shape_cast %108 : vector<1x32x1xf32> to vector<32x1xf32>
    %cst_42 = arith.constant dense<0.000000e+00> : vector<512xf32>
    %110 = vector.multi_reduction <add>, %105, %cst_42 [0] : vector<32x512xf32> to vector<512xf32>
    %111 = vector.shape_cast %110 : vector<512xf32> to vector<1x512xf32>
    %cst_43 = arith.constant 3.200000e+01 : f32
    %112 = vector.broadcast %cst_43 : f32 to vector<1x512xf32>
    %113 = arith.divf %111, %112 : vector<1x512xf32>
    %114 = vector.broadcast %113 : vector<1x512xf32> to vector<32x512xf32>
    %115 = arith.subf %105, %114 : vector<32x512xf32>
    %116 = arith.mulf %115, %115 : vector<32x512xf32>
    %cst_44 = arith.constant dense<0.000000e+00> : vector<512xf32>
    %117 = vector.multi_reduction <add>, %116, %cst_44 [0] : vector<32x512xf32> to vector<512xf32>
    %118 = vector.shape_cast %117 : vector<512xf32> to vector<1x512xf32>
    %cst_45 = arith.constant 3.100000e+01 : f32
    %119 = vector.broadcast %cst_45 : f32 to vector<1x512xf32>
    %120 = arith.divf %118, %119 : vector<1x512xf32>
    %121 = math.sqrt %120 : vector<1x512xf32>
    %cst_46 = arith.constant 9.99999974E-6 : f32
    %122 = vector.broadcast %cst_46 : f32 to vector<1x512xf32>
    %123 = arith.addf %121, %122 : vector<1x512xf32>
    %124 = tpu.reciprocal %123 {approx = true} : vector<1x512xf32> -> vector<1x512xf32>
    %125 = arith.mulf %123, %124 : vector<1x512xf32>
    %cst_47 = arith.constant 2.000000e+00 : f32
    %126 = vector.broadcast %cst_47 : f32 to vector<1x512xf32>
    %127 = arith.subf %126, %125 : vector<1x512xf32>
    %128 = arith.mulf %124, %127 : vector<1x512xf32>
    %129 = vector.broadcast %113 : vector<1x512xf32> to vector<32x512xf32>
    %130 = arith.subf %105, %129 : vector<32x512xf32>
    %131 = vector.broadcast %128 : vector<1x512xf32> to vector<32x512xf32>
    %132 = arith.mulf %130, %131 : vector<32x512xf32>
    %133 = vector.broadcast %107 : vector<32x1xf32> to vector<32x512xf32>
    %134 = arith.mulf %132, %133 : vector<32x512xf32>
    %135 = vector.broadcast %109 : vector<32x1xf32> to vector<32x512xf32>
    %136 = arith.addf %134, %135 : vector<32x512xf32>
    %137 = math.tanh %136 : vector<32x512xf32>
    %138 = arith.mulf %94, %137 : vector<32x512xf32>
    %c1 = arith.constant 1 : index
    %c0_48 = arith.constant 0 : index
    %c0_49 = arith.constant 0 : index
    %139 = vector.load %arg6[%c1, %c0_48, %c0_49] : memref<2x128x32xbf16, #tpu.memory_space<vmem>>, vector<1x128x32xbf16>
    %140 = vector.shape_cast %139 : vector<1x128x32xbf16> to vector<128x32xbf16>
    %141 = arith.truncf %138 : vector<32x512xf32> to vector<32x512xbf16>
    %cst_50 = arith.constant dense<0.000000e+00> : vector<128x512xf32>
    %142 = tpu.matmul %140, %141, %cst_50 {dimension_numbers = #tpu.dot_dimension_numbers<[1], [0], [0], [1], [0, 0, 1, 1], [], []>} : vector<128x32xbf16>, vector<32x512xbf16>, vector<128x512xf32> -> vector<128x512xf32>
    %c1_51 = arith.constant 1 : index
    %c0_52 = arith.constant 0 : index
    %c0_53 = arith.constant 0 : index
    %143 = vector.load %arg7[%c1_51, %c0_52, %c0_53] : memref<2x128x1xf32, #tpu.memory_space<vmem>>, vector<1x128x1xf32>
    %144 = vector.shape_cast %143 : vector<1x128x1xf32> to vector<128x1xf32>
    %145 = vector.broadcast %144 : vector<128x1xf32> to vector<128x512xf32>
    %146 = arith.addf %142, %145 : vector<128x512xf32>
    %cst_54 = arith.constant dense<0.000000e+00> : vector<512xf32>
    %147 = vector.multi_reduction <add>, %146, %cst_54 [0] : vector<128x512xf32> to vector<512xf32>
    %148 = vector.shape_cast %147 : vector<512xf32> to vector<1x512xf32>
    %cst_55 = arith.constant 1.280000e+02 : f32
    %149 = vector.broadcast %cst_55 : f32 to vector<1x512xf32>
    %150 = arith.divf %148, %149 : vector<1x512xf32>
    %151 = vector.broadcast %150 : vector<1x512xf32> to vector<128x512xf32>
    %152 = arith.subf %146, %151 : vector<128x512xf32>
    %153 = arith.mulf %152, %152 : vector<128x512xf32>
    %cst_56 = arith.constant dense<0.000000e+00> : vector<512xf32>
    %154 = vector.multi_reduction <add>, %153, %cst_56 [0] : vector<128x512xf32> to vector<512xf32>
    %155 = vector.shape_cast %154 : vector<512xf32> to vector<1x512xf32>
    %cst_57 = arith.constant 1.270000e+02 : f32
    %156 = vector.broadcast %cst_57 : f32 to vector<1x512xf32>
    %157 = arith.divf %155, %156 : vector<1x512xf32>
    %158 = math.sqrt %157 : vector<1x512xf32>
    %cst_58 = arith.constant 9.99999974E-6 : f32
    %159 = vector.broadcast %cst_58 : f32 to vector<1x512xf32>
    %160 = arith.addf %158, %159 : vector<1x512xf32>
    %161 = tpu.reciprocal %160 {approx = true} : vector<1x512xf32> -> vector<1x512xf32>
    %162 = arith.mulf %160, %161 : vector<1x512xf32>
    %cst_59 = arith.constant 2.000000e+00 : f32
    %163 = vector.broadcast %cst_59 : f32 to vector<1x512xf32>
    %164 = arith.subf %163, %162 : vector<1x512xf32>
    %165 = arith.mulf %161, %164 : vector<1x512xf32>
    %c1_60 = arith.constant 1 : index
    %c0_61 = arith.constant 0 : index
    %c0_62 = arith.constant 0 : index
    %166 = vector.load %arg8[%c1_60, %c0_61, %c0_62] : memref<2x128x1xf32, #tpu.memory_space<vmem>>, vector<1x128x1xf32>
    %167 = vector.shape_cast %166 : vector<1x128x1xf32> to vector<128x1xf32>
    %c1_63 = arith.constant 1 : index
    %c0_64 = arith.constant 0 : index
    %c0_65 = arith.constant 0 : index
    %168 = vector.load %arg9[%c1_63, %c0_64, %c0_65] : memref<2x128x1xf32, #tpu.memory_space<vmem>>, vector<1x128x1xf32>
    %169 = vector.shape_cast %168 : vector<1x128x1xf32> to vector<128x1xf32>
    %170 = vector.extract_strided_slice %152 {offsets = [0, 0], sizes = [32, 512], strides = [1, 1]} : vector<128x512xf32> to vector<32x512xf32>
    %171 = vector.broadcast %165 : vector<1x512xf32> to vector<32x512xf32>
    %172 = arith.mulf %170, %171 : vector<32x512xf32>
    %173 = vector.extract_strided_slice %167 {offsets = [0, 0], sizes = [32, 1], strides = [1, 1]} : vector<128x1xf32> to vector<32x1xf32>
    %174 = vector.broadcast %173 : vector<32x1xf32> to vector<32x512xf32>
    %175 = arith.mulf %172, %174 : vector<32x512xf32>
    %176 = vector.extract_strided_slice %169 {offsets = [0, 0], sizes = [32, 1], strides = [1, 1]} : vector<128x1xf32> to vector<32x1xf32>
    %177 = vector.broadcast %176 : vector<32x1xf32> to vector<32x512xf32>
    %178 = arith.addf %175, %177 : vector<32x512xf32>
    %179 = arith.negf %178 : vector<32x512xf32>
    %180 = math.exp %179 : vector<32x512xf32>
    %cst_66 = arith.constant 1.000000e+00 : f32
    %181 = vector.broadcast %cst_66 : f32 to vector<32x512xf32>
    %182 = arith.addf %181, %180 : vector<32x512xf32>
    %183 = arith.divf %181, %182 : vector<32x512xf32>
    %184 = vector.extract_strided_slice %152 {offsets = [64, 0], sizes = [32, 512], strides = [1, 1]} : vector<128x512xf32> to vector<32x512xf32>
    %185 = vector.broadcast %165 : vector<1x512xf32> to vector<32x512xf32>
    %186 = arith.mulf %184, %185 : vector<32x512xf32>
    %187 = vector.extract_strided_slice %167 {offsets = [64, 0], sizes = [32, 1], strides = [1, 1]} : vector<128x1xf32> to vector<32x1xf32>
    %188 = vector.broadcast %187 : vector<32x1xf32> to vector<32x512xf32>
    %189 = arith.mulf %186, %188 : vector<32x512xf32>
    %190 = vector.extract_strided_slice %169 {offsets = [64, 0], sizes = [32, 1], strides = [1, 1]} : vector<128x1xf32> to vector<32x1xf32>
    %191 = vector.broadcast %190 : vector<32x1xf32> to vector<32x512xf32>
    %192 = arith.addf %189, %191 : vector<32x512xf32>
    %193 = arith.negf %192 : vector<32x512xf32>
    %194 = math.exp %193 : vector<32x512xf32>
    %cst_67 = arith.constant 1.000000e+00 : f32
    %195 = vector.broadcast %cst_67 : f32 to vector<32x512xf32>
    %196 = arith.addf %195, %194 : vector<32x512xf32>
    %197 = arith.divf %195, %196 : vector<32x512xf32>
    %198 = vector.extract_strided_slice %152 {offsets = [96, 0], sizes = [32, 512], strides = [1, 1]} : vector<128x512xf32> to vector<32x512xf32>
    %199 = vector.broadcast %165 : vector<1x512xf32> to vector<32x512xf32>
    %200 = arith.mulf %198, %199 : vector<32x512xf32>
    %201 = vector.extract_strided_slice %167 {offsets = [96, 0], sizes = [32, 1], strides = [1, 1]} : vector<128x1xf32> to vector<32x1xf32>
    %202 = vector.broadcast %201 : vector<32x1xf32> to vector<32x512xf32>
    %203 = arith.mulf %200, %202 : vector<32x512xf32>
    %204 = vector.extract_strided_slice %169 {offsets = [96, 0], sizes = [32, 1], strides = [1, 1]} : vector<128x1xf32> to vector<32x1xf32>
    %205 = vector.broadcast %204 : vector<32x1xf32> to vector<32x512xf32>
    %206 = arith.addf %203, %205 : vector<32x512xf32>
    %207 = math.tanh %206 : vector<32x512xf32>
    %208 = arith.mulf %183, %207 : vector<32x512xf32>
    %c1_68 = arith.constant 1 : index
    %c0_69 = arith.constant 0 : index
    %c0_70 = arith.constant 0 : index
    %209 = vector.load %arg10[%c1_68, %c0_69, %c0_70] : memref<2x32x1xf32, #tpu.memory_space<vmem>>, vector<1x32x1xf32>
    %210 = vector.shape_cast %209 : vector<1x32x1xf32> to vector<32x1xf32>
    %c1_71 = arith.constant 1 : index
    %c0_72 = arith.constant 0 : index
    %c0_73 = arith.constant 0 : index
    %211 = vector.load %arg11[%c1_71, %c0_72, %c0_73] : memref<2x32x1xf32, #tpu.memory_space<vmem>>, vector<1x32x1xf32>
    %212 = vector.shape_cast %211 : vector<1x32x1xf32> to vector<32x1xf32>
    %cst_74 = arith.constant dense<0.000000e+00> : vector<512xf32>
    %213 = vector.multi_reduction <add>, %208, %cst_74 [0] : vector<32x512xf32> to vector<512xf32>
    %214 = vector.shape_cast %213 : vector<512xf32> to vector<1x512xf32>
    %cst_75 = arith.constant 3.200000e+01 : f32
    %215 = vector.broadcast %cst_75 : f32 to vector<1x512xf32>
    %216 = arith.divf %214, %215 : vector<1x512xf32>
    %217 = vector.broadcast %216 : vector<1x512xf32> to vector<32x512xf32>
    %218 = arith.subf %208, %217 : vector<32x512xf32>
    %219 = arith.mulf %218, %218 : vector<32x512xf32>
    %cst_76 = arith.constant dense<0.000000e+00> : vector<512xf32>
    %220 = vector.multi_reduction <add>, %219, %cst_76 [0] : vector<32x512xf32> to vector<512xf32>
    %221 = vector.shape_cast %220 : vector<512xf32> to vector<1x512xf32>
    %cst_77 = arith.constant 3.100000e+01 : f32
    %222 = vector.broadcast %cst_77 : f32 to vector<1x512xf32>
    %223 = arith.divf %221, %222 : vector<1x512xf32>
    %224 = math.sqrt %223 : vector<1x512xf32>
    %cst_78 = arith.constant 9.99999974E-6 : f32
    %225 = vector.broadcast %cst_78 : f32 to vector<1x512xf32>
    %226 = arith.addf %224, %225 : vector<1x512xf32>
    %227 = tpu.reciprocal %226 {approx = true} : vector<1x512xf32> -> vector<1x512xf32>
    %228 = arith.mulf %226, %227 : vector<1x512xf32>
    %cst_79 = arith.constant 2.000000e+00 : f32
    %229 = vector.broadcast %cst_79 : f32 to vector<1x512xf32>
    %230 = arith.subf %229, %228 : vector<1x512xf32>
    %231 = arith.mulf %227, %230 : vector<1x512xf32>
    %232 = vector.broadcast %216 : vector<1x512xf32> to vector<32x512xf32>
    %233 = arith.subf %208, %232 : vector<32x512xf32>
    %234 = vector.broadcast %231 : vector<1x512xf32> to vector<32x512xf32>
    %235 = arith.mulf %233, %234 : vector<32x512xf32>
    %236 = vector.broadcast %210 : vector<32x1xf32> to vector<32x512xf32>
    %237 = arith.mulf %235, %236 : vector<32x512xf32>
    %238 = vector.broadcast %212 : vector<32x1xf32> to vector<32x512xf32>
    %239 = arith.addf %237, %238 : vector<32x512xf32>
    %240 = math.tanh %239 : vector<32x512xf32>
    %241 = arith.mulf %197, %240 : vector<32x512xf32>
    %c0_80 = arith.constant 0 : index
    %c0_81 = arith.constant 0 : index
    %242 = vector.load %arg12[%c0_80, %c0_81] : memref<32x1xf32, #tpu.memory_space<vmem>>, vector<32x1xf32>
    %243 = vector.broadcast %242 : vector<32x1xf32> to vector<32x512xf32>
    %244 = arith.mulf %243, %241 : vector<32x512xf32>
    %cst_82 = arith.constant dense<0.000000e+00> : vector<512xf32>
    %245 = vector.multi_reduction <add>, %244, %cst_82 [0] : vector<32x512xf32> to vector<512xf32>
    %246 = vector.shape_cast %245 : vector<512xf32> to vector<1x512xf32>
    %c0_83 = arith.constant 0 : index
    %c0_84 = arith.constant 0 : index
    %247 = vector.load %arg13[%c0_83, %c0_84] : memref<1x1xf32, #tpu.memory_space<vmem>>, vector<1x1xf32>
    %248 = vector.broadcast %247 : vector<1x1xf32> to vector<1x512xf32>
    %249 = arith.addf %246, %248 : vector<1x512xf32>
    %c0_85 = arith.constant 0 : index
    %c0_86 = arith.constant 0 : index
    %250 = vector.load %arg14[%c0_85, %c0_86] : memref<1x512xf32, #tpu.memory_space<vmem>>, vector<1x512xf32>
    tpu.vector_store %arg14[%c0_85, %c0_86], %249 {strides = array<i32>} : memref<1x512xf32, #tpu.memory_space<vmem>>, vector<1x512xf32>,
    return
  }
  func.func @transform_0(%arg0: i32) -> (i32, i32) {
    %c0_i32 = arith.constant 0 : i32
    %c0_i32_0 = arith.constant 0 : i32
    return %c0_i32, %arg0 : i32, i32
  }
  func.func @transform_1(%arg0: i32) -> (i32, i32) {
    %c0_i32 = arith.constant 0 : i32
    %c0_i32_0 = arith.constant 0 : i32
    %c0_i32_1 = arith.constant 0 : i32
    return %c0_i32, %c0_i32_0 : i32, i32
  }
  func.func @transform_2(%arg0: i32) -> (i32, i32) {
    %c0_i32 = arith.constant 0 : i32
    %c0_i32_0 = arith.constant 0 : i32
    %c0_i32_1 = arith.constant 0 : i32
    return %c0_i32, %c0_i32_0 : i32, i32
  }
  func.func @transform_3(%arg0: i32) -> (i32, i32) {
    %c0_i32 = arith.constant 0 : i32
    %c0_i32_0 = arith.constant 0 : i32
    %c0_i32_1 = arith.constant 0 : i32
    return %c0_i32, %c0_i32_0 : i32, i32
  }
  func.func @transform_4(%arg0: i32) -> (i32, i32) {
    %c0_i32 = arith.constant 0 : i32
    %c0_i32_0 = arith.constant 0 : i32
    %c0_i32_1 = arith.constant 0 : i32
    return %c0_i32, %c0_i32_0 : i32, i32
  }
  func.func @transform_5(%arg0: i32) -> (i32, i32, i32) {
    %c0_i32 = arith.constant 0 : i32
    %c0_i32_0 = arith.constant 0 : i32
    %c0_i32_1 = arith.constant 0 : i32
    %c0_i32_2 = arith.constant 0 : i32
    return %c0_i32, %c0_i32_0, %c0_i32_1 : i32, i32, i32
  }
  func.func @transform_6(%arg0: i32) -> (i32, i32, i32) {
    %c0_i32 = arith.constant 0 : i32
    %c0_i32_0 = arith.constant 0 : i32
    %c0_i32_1 = arith.constant 0 : i32
    %c0_i32_2 = arith.constant 0 : i32
    return %c0_i32, %c0_i32_0, %c0_i32_1 : i32, i32, i32
  }
  func.func @transform_7(%arg0: i32) -> (i32, i32, i32) {
    %c0_i32 = arith.constant 0 : i32
    %c0_i32_0 = arith.constant 0 : i32
    %c0_i32_1 = arith.constant 0 : i32
    %c0_i32_2 = arith.constant 0 : i32
    return %c0_i32, %c0_i32_0, %c0_i32_1 : i32, i32, i32
  }
  func.func @transform_8(%arg0: i32) -> (i32, i32, i32) {
    %c0_i32 = arith.constant 0 : i32
    %c0_i32_0 = arith.constant 0 : i32
    %c0_i32_1 = arith.constant 0 : i32
    %c0_i32_2 = arith.constant 0 : i32
    return %c0_i32, %c0_i32_0, %c0_i32_1 : i32, i32, i32
  }
  func.func @transform_9(%arg0: i32) -> (i32, i32, i32) {
    %c0_i32 = arith.constant 0 : i32
    %c0_i32_0 = arith.constant 0 : i32
    %c0_i32_1 = arith.constant 0 : i32
    %c0_i32_2 = arith.constant 0 : i32
    return %c0_i32, %c0_i32_0, %c0_i32_1 : i32, i32, i32
  }
  func.func @transform_10(%arg0: i32) -> (i32, i32, i32) {
    %c0_i32 = arith.constant 0 : i32
    %c0_i32_0 = arith.constant 0 : i32
    %c0_i32_1 = arith.constant 0 : i32
    %c0_i32_2 = arith.constant 0 : i32
    return %c0_i32, %c0_i32_0, %c0_i32_1 : i32, i32, i32
  }
  func.func @transform_11(%arg0: i32) -> (i32, i32) {
    %c0_i32 = arith.constant 0 : i32
    %c0_i32_0 = arith.constant 0 : i32
    %c0_i32_1 = arith.constant 0 : i32
    return %c0_i32, %c0_i32_0 : i32, i32
  }
  func.func @transform_12(%arg0: i32) -> (i32, i32) {
    %c0_i32 = arith.constant 0 : i32
    %c0_i32_0 = arith.constant 0 : i32
    %c0_i32_1 = arith.constant 0 : i32
    return %c0_i32, %c0_i32_0 : i32, i32
  }
  func.func @transform_13(%arg0: i32) -> (i32, i32) {
    %c0_i32 = arith.constant 0 : i32
    %c0_i32_0 = arith.constant 0 : i32
    return %c0_i32, %arg0 : i32, i32
  }
}

</mosaic_0001>

<llo_original>
// kernel: tpu_custom_call.1
$region0: #{tpu_custom_call.1}
  #allocation0 [shape = 'u32[]', space=smem, size = 0x4, offset = 0x4, fixed_abs, tag = 'smem constant byte address 0x4 - core index']
  #allocation1 [shape = 'u32[144,128]{1,0:T(1,128)}', space=vmem, size = 0x12000, scoped, tag = 'internal scratch']
  #allocation2 [shape = 'f32[1,1]{1,0:T(1,128)S(1)}', space=vmem, size = 0x200, scoped, tag = 'scoped memory for tpu_custom_call.1']
  %s0 = inlined_call_operand.vmem [shape: f32[3,1024], index: 0, kind: input, shape index: {}]
  %s1 = inlined_call_operand.vmem [shape: f32[32,3], index: 1, kind: input, shape index: {}]
  %s2 = inlined_call_operand.vmem [shape: f32[32,1], index: 2, kind: input, shape index: {}]
  %s3 = inlined_call_operand.vmem [shape: f32[32,1], index: 3, kind: input, shape index: {}]
  %s4 = inlined_call_operand.vmem [shape: f32[32,1], index: 4, kind: input, shape index: {}]
  %s5 = inlined_call_operand.vmem [shape: bf16[2,128,32], index: 5, kind: input, shape index: {}]
  %s6 = inlined_call_operand.vmem [shape: f32[2,128,1], index: 6, kind: input, shape index: {}]
  %s7 = inlined_call_operand.vmem [shape: f32[2,128,1], index: 7, kind: input, shape index: {}]
  %s8 = inlined_call_operand.vmem [shape: f32[2,128,1], index: 8, kind: input, shape index: {}]
  %s9 = inlined_call_operand.vmem [shape: f32[2,32,1], index: 9, kind: input, shape index: {}]
  %s10 = inlined_call_operand.vmem [shape: f32[2,32,1], index: 10, kind: input, shape index: {}]
  %s11 = inlined_call_operand.vmem [shape: f32[32,1], index: 11, kind: input, shape index: {}]
  %s12 = inlined_call_operand.<no memory space> [shape: f32[1,1], index: 12, kind: input, shape index: {}]
  %s13 = inlined_call_operand.hbm [shape: f32[1,1024], index: 13, kind: output, shape index: {}]
  %s14 = sld [smem:[#allocation0]]
  $region85: #{tpu_custom_call.1} parent=0
    _
  %s16 = ssub.s32 1, %s14
  %s17 = scalar_select 0, %s16, %s14
  %v18 = vstv %s12
  %19 = vst [vmem:[#allocation2] sm:$0x1] %v18
  $region1: #{tpu_custom_call.1} parent=0
    #allocation3 [shape = 'u8[4096]{0}', space=vmem, size = 0x1000, scoped, tag = 'output window, operand 0']
    #allocation4 [shape = 's32[2]{0}', space=sflag, size = 0x8, scoped, tag = 'scoped memory for tpu_custom_call.1']
    %20 = vsyncpa [#allocation4], 0
    %s21 = scalar_lea.sflag [#allocation4], 1
    %22 = vsyncpa %s21, 0
    loop: start=0, step=1, limit=4
    $region2: #{tpu_custom_call.1} parent=1 // loop_pre_header
      _
    $region3: #{tpu_custom_call.1} parent=1 // loop_header
      %s24 = sphi 0, %s28
      %p25 = scmp.ge.s32.totalorder %s24, 4
      %s34 = sphi 0, %s36
      %s37 = sphi 0, %s34
      %s38 = sphi 0, %s37
      %s54 = sphi 0, %s38
      %s58 = sphi 0, %s58
      %s60 = sphi 0, %s58
      %s61 = sphi 0, %s60
      %s75 = sphi 0, %s61
      %s79 = sphi 0, %s79
      %s81 = sphi 0, %s79
      %s82 = sphi 0, %s81
      %s96 = sphi 0, %s82
      %s100 = sphi 0, %s100
      %s102 = sphi 0, %s100
      %s103 = sphi 0, %s102
      %s117 = sphi 0, %s103
      %s121 = sphi 0, %s121
      %s123 = sphi 0, %s121
      %s124 = sphi 0, %s123
      %s138 = sphi 0, %s124
      %s142 = sphi 0, %s142
      %s144 = sphi 0, %s142
      %s145 = sphi 0, %s144
      %s159 = sphi 0, %s145
      %s163 = sphi 0, %s163
      %s165 = sphi 0, %s163
      %s166 = sphi 0, %s165
      %s180 = sphi 0, %s166
      %s184 = sphi 0, %s184
      %s186 = sphi 0, %s184
      %s187 = sphi 0, %s186
      %s201 = sphi 0, %s187
      %s205 = sphi 0, %s205
      %s207 = sphi 0, %s205
      %s208 = sphi 0, %s207
      %s222 = sphi 0, %s208
      %s226 = sphi 0, %s226
      %s228 = sphi 0, %s226
      %s229 = sphi 0, %s228
      %s243 = sphi 0, %s229
      %s247 = sphi 0, %s247
      %s249 = sphi 0, %s247
      %s250 = sphi 0, %s249
      %s264 = sphi 0, %s250
      %s268 = sphi 0, %s268
      %s270 = sphi 0, %s268
      %s271 = sphi 0, %s270
      %s285 = sphi 0, %s271
      %s289 = sphi 0, %s289
      %s291 = sphi 0, %s289
      %s292 = sphi 0, %s291
      %s306 = sphi 0, %s292
      %s312 = sphi 0, %s314
      %s315 = sphi 0, %s312
      %s316 = sphi 0, %s315
      %s332 = sphi 0, %s316
    $region4: #{tpu_custom_call.1} parent=1 // loop_header_branch
      %27 = sbr.rel (%p25) target = $region8
    $region5: #{tpu_custom_call.1} parent=1 // loop_body
      %s29 = ssub.s32 %s24, 1
      %s30 = ssub.s32 %s24, 2
      %s31 = sadd.s32 %s24, 1
      %s32 = ssub.s32 %s24, %s31
      %p33 = scmp.eq.s32.totalorder %s32, 0
      %s35 = sadd.s32 %s34, 1
      %s36 = scalar_select %p33, %s34, %s35
      %p39 = pneg %p33
      %p40 = scmp.eq.s32.totalorder %s24, 1
      %p41 = por %p39, %p40
      %p42 = scmp.ne.s32.totalorder %s34, %s37
      %p43 = scmp.eq.s32.totalorder %s24, 0
      %p44 = por %p42, %p43
      %p45 = scmp.ne.s32.totalorder %s34, %s37
      %p46 = scmp.eq.s32.totalorder %s29, 1
      %p47 = por %p45, %p46
      %p48 = scmp.ne.s32.totalorder %s37, %s38
      %p49 = scmp.eq.s32.totalorder %s29, 0
      %p50 = por %p48, %p49
      %p51 = scmp.ne.s32.totalorder %s37, %s38
      %p52 = scmp.eq.s32.totalorder %s30, 1
      %p53 = por %p51, %p52
      %p55 = scmp.ne.s32.totalorder %s38, %s54
      %p56 = scmp.eq.s32.totalorder %s30, 0
      %p57 = por %p55, %p56
      %s59 = sadd.s32 %s58, 1
      %p62 = scmp.eq.s32.totalorder %s24, 1
      %p63 = scmp.ne.s32.totalorder %s58, %s60
      %p64 = scmp.eq.s32.totalorder %s24, 0
      %p65 = por %p63, %p64
      %p66 = scmp.ne.s32.totalorder %s58, %s60
      %p67 = scmp.eq.s32.totalorder %s29, 1
      %p68 = por %p66, %p67
      %p69 = scmp.ne.s32.totalorder %s60, %s61
      %p70 = scmp.eq.s32.totalorder %s29, 0
      %p71 = por %p69, %p70
      %p72 = scmp.ne.s32.totalorder %s60, %s61
      %p73 = scmp.eq.s32.totalorder %s30, 1
      %p74 = por %p72, %p73
      %p76 = scmp.ne.s32.totalorder %s61, %s75
      %p77 = scmp.eq.s32.totalorder %s30, 0
      %p78 = por %p76, %p77
      %s80 = sadd.s32 %s79, 1
      %p83 = scmp.eq.s32.totalorder %s24, 1
      %p84 = scmp.ne.s32.totalorder %s79, %s81
      %p85 = scmp.eq.s32.totalorder %s24, 0
      %p86 = por %p84, %p85
      %p87 = scmp.ne.s32.totalorder %s79, %s81
      %p88 = scmp.eq.s32.totalorder %s29, 1
      %p89 = por %p87, %p88
      %p90 = scmp.ne.s32.totalorder %s81, %s82
      %p91 = scmp.eq.s32.totalorder %s29, 0
      %p92 = por %p90, %p91
      %p93 = scmp.ne.s32.totalorder %s81, %s82
      %p94 = scmp.eq.s32.totalorder %s30, 1
      %p95 = por %p93, %p94
      %p97 = scmp.ne.s32.totalorder %s82, %s96
      %p98 = scmp.eq.s32.totalorder %s30, 0
      %p99 = por %p97, %p98
      %s101 = sadd.s32 %s100, 1
      %p104 = scmp.eq.s32.totalorder %s24, 1
      %p105 = scmp.ne.s32.totalorder %s100, %s102
      %p106 = scmp.eq.s32.totalorder %s24, 0
      %p107 = por %p105, %p106
      %p108 = scmp.ne.s32.totalorder %s100, %s102
      %p109 = scmp.eq.s32.totalorder %s29, 1
      %p110 = por %p108, %p109
      %p111 = scmp.ne.s32.totalorder %s102, %s103
      %p112 = scmp.eq.s32.totalorder %s29, 0
      %p113 = por %p111, %p112
      %p114 = scmp.ne.s32.totalorder %s102, %s103
      %p115 = scmp.eq.s32.totalorder %s30, 1
      %p116 = por %p114, %p115
      %p118 = scmp.ne.s32.totalorder %s103, %s117
      %p119 = scmp.eq.s32.totalorder %s30, 0
      %p120 = por %p118, %p119
      %s122 = sadd.s32 %s121, 1
      %p125 = scmp.eq.s32.totalorder %s24, 1
      %p126 = scmp.ne.s32.totalorder %s121, %s123
      %p127 = scmp.eq.s32.totalorder %s24, 0
      %p128 = por %p126, %p127
      %p129 = scmp.ne.s32.totalorder %s121, %s123
      %p130 = scmp.eq.s32.totalorder %s29, 1
      %p131 = por %p129, %p130
      %p132 = scmp.ne.s32.totalorder %s123, %s124
      %p133 = scmp.eq.s32.totalorder %s29, 0
      %p134 = por %p132, %p133
      %p135 = scmp.ne.s32.totalorder %s123, %s124
      %p136 = scmp.eq.s32.totalorder %s30, 1
      %p137 = por %p135, %p136
      %p139 = scmp.ne.s32.totalorder %s124, %s138
      %p140 = scmp.eq.s32.totalorder %s30, 0
      %p141 = por %p139, %p140
      %s143 = sadd.s32 %s142, 1
      %p146 = scmp.eq.s32.totalorder %s24, 1
      %p147 = scmp.ne.s32.totalorder %s142, %s144
      %p148 = scmp.eq.s32.totalorder %s24, 0
      %p149 = por %p147, %p148
      %p150 = scmp.ne.s32.totalorder %s142, %s144
      %p151 = scmp.eq.s32.totalorder %s29, 1
      %p152 = por %p150, %p151
      %p153 = scmp.ne.s32.totalorder %s144, %s145
      %p154 = scmp.eq.s32.totalorder %s29, 0
      %p155 = por %p153, %p154
      %p156 = scmp.ne.s32.totalorder %s144, %s145
      %p157 = scmp.eq.s32.totalorder %s30, 1
      %p158 = por %p156, %p157
      %p160 = scmp.ne.s32.totalorder %s145, %s159
      %p161 = scmp.eq.s32.totalorder %s30, 0
      %p162 = por %p160, %p161
      %s164 = sadd.s32 %s163, 1
      %p167 = scmp.eq.s32.totalorder %s24, 1
      %p168 = scmp.ne.s32.totalorder %s163, %s165
      %p169 = scmp.eq.s32.totalorder %s24, 0
      %p170 = por %p168, %p169
      %p171 = scmp.ne.s32.totalorder %s163, %s165
      %p172 = scmp.eq.s32.totalorder %s29, 1
      %p173 = por %p171, %p172
      %p174 = scmp.ne.s32.totalorder %s165, %s166
      %p175 = scmp.eq.s32.totalorder %s29, 0
      %p176 = por %p174, %p175
      %p177 = scmp.ne.s32.totalorder %s165, %s166
      %p178 = scmp.eq.s32.totalorder %s30, 1
      %p179 = por %p177, %p178
      %p181 = scmp.ne.s32.totalorder %s166, %s180
      %p182 = scmp.eq.s32.totalorder %s30, 0
      %p183 = por %p181, %p182
      %s185 = sadd.s32 %s184, 1
      %p188 = scmp.eq.s32.totalorder %s24, 1
      %p189 = scmp.ne.s32.totalorder %s184, %s186
      %p190 = scmp.eq.s32.totalorder %s24, 0
      %p191 = por %p189, %p190
      %p192 = scmp.ne.s32.totalorder %s184, %s186
      %p193 = scmp.eq.s32.totalorder %s29, 1
      %p194 = por %p192, %p193
      %p195 = scmp.ne.s32.totalorder %s186, %s187
      %p196 = scmp.eq.s32.totalorder %s29, 0
      %p197 = por %p195, %p196
      %p198 = scmp.ne.s32.totalorder %s186, %s187
      %p199 = scmp.eq.s32.totalorder %s30, 1
      %p200 = por %p198, %p199
      %p202 = scmp.ne.s32.totalorder %s187, %s201
      %p203 = scmp.eq.s32.totalorder %s30, 0
      %p204 = por %p202, %p203
      %s206 = sadd.s32 %s205, 1
      %p209 = scmp.eq.s32.totalorder %s24, 1
      %p210 = scmp.ne.s32.totalorder %s205, %s207
      %p211 = scmp.eq.s32.totalorder %s24, 0
      %p212 = por %p210, %p211
      %p213 = scmp.ne.s32.totalorder %s205, %s207
      %p214 = scmp.eq.s32.totalorder %s29, 1
      %p215 = por %p213, %p214
      %p216 = scmp.ne.s32.totalorder %s207, %s208
      %p217 = scmp.eq.s32.totalorder %s29, 0
      %p218 = por %p216, %p217
      %p219 = scmp.ne.s32.totalorder %s207, %s208
      %p220 = scmp.eq.s32.totalorder %s30, 1
      %p221 = por %p219, %p220
      %p223 = scmp.ne.s32.totalorder %s208, %s222
      %p224 = scmp.eq.s32.totalorder %s30, 0
      %p225 = por %p223, %p224
      %s227 = sadd.s32 %s226, 1
      %p230 = scmp.eq.s32.totalorder %s24, 1
      %p231 = scmp.ne.s32.totalorder %s226, %s228
      %p232 = scmp.eq.s32.totalorder %s24, 0
      %p233 = por %p231, %p232
      %p234 = scmp.ne.s32.totalorder %s226, %s228
      %p235 = scmp.eq.s32.totalorder %s29, 1
      %p236 = por %p234, %p235
      %p237 = scmp.ne.s32.totalorder %s228, %s229
      %p238 = scmp.eq.s32.totalorder %s29, 0
      %p239 = por %p237, %p238
      %p240 = scmp.ne.s32.totalorder %s228, %s229
      %p241 = scmp.eq.s32.totalorder %s30, 1
      %p242 = por %p240, %p241
      %p244 = scmp.ne.s32.totalorder %s229, %s243
      %p245 = scmp.eq.s32.totalorder %s30, 0
      %p246 = por %p244, %p245
      %s248 = sadd.s32 %s247, 1
      %p251 = scmp.eq.s32.totalorder %s24, 1
      %p252 = scmp.ne.s32.totalorder %s247, %s249
      %p253 = scmp.eq.s32.totalorder %s24, 0
      %p254 = por %p252, %p253
      %p255 = scmp.ne.s32.totalorder %s247, %s249
      %p256 = scmp.eq.s32.totalorder %s29, 1
      %p257 = por %p255, %p256
      %p258 = scmp.ne.s32.totalorder %s249, %s250
      %p259 = scmp.eq.s32.totalorder %s29, 0
      %p260 = por %p258, %p259
      %p261 = scmp.ne.s32.totalorder %s249, %s250
      %p262 = scmp.eq.s32.totalorder %s30, 1
      %p263 = por %p261, %p262
      %p265 = scmp.ne.s32.totalorder %s250, %s264
      %p266 = scmp.eq.s32.totalorder %s30, 0
      %p267 = por %p265, %p266
      %s269 = sadd.s32 %s268, 1
      %p272 = scmp.eq.s32.totalorder %s24, 1
      %p273 = scmp.ne.s32.totalorder %s268, %s270
      %p274 = scmp.eq.s32.totalorder %s24, 0
      %p275 = por %p273, %p274
      %p276 = scmp.ne.s32.totalorder %s268, %s270
      %p277 = scmp.eq.s32.totalorder %s29, 1
      %p278 = por %p276, %p277
      %p279 = scmp.ne.s32.totalorder %s270, %s271
      %p280 = scmp.eq.s32.totalorder %s29, 0
      %p281 = por %p279, %p280
      %p282 = scmp.ne.s32.totalorder %s270, %s271
      %p283 = scmp.eq.s32.totalorder %s30, 1
      %p284 = por %p282, %p283
      %p286 = scmp.ne.s32.totalorder %s271, %s285
      %p287 = scmp.eq.s32.totalorder %s30, 0
      %p288 = por %p286, %p287
      %s290 = sadd.s32 %s289, 1
      %p293 = scmp.eq.s32.totalorder %s24, 1
      %p294 = scmp.ne.s32.totalorder %s289, %s291
      %p295 = scmp.eq.s32.totalorder %s24, 0
      %p296 = por %p294, %p295
      %p297 = scmp.ne.s32.totalorder %s289, %s291
      %p298 = scmp.eq.s32.totalorder %s29, 1
      %p299 = por %p297, %p298
      %p300 = scmp.ne.s32.totalorder %s291, %s292
      %p301 = scmp.eq.s32.totalorder %s29, 0
      %p302 = por %p300, %p301
      %p303 = scmp.ne.s32.totalorder %s291, %s292
      %p304 = scmp.eq.s32.totalorder %s30, 1
      %p305 = por %p303, %p304
      %p307 = scmp.ne.s32.totalorder %s292, %s306
      %p308 = scmp.eq.s32.totalorder %s30, 0
      %p309 = por %p307, %p308
      %s310 = ssub.s32 %s24, %s31
      %p311 = scmp.eq.s32.totalorder %s310, 0
      %s313 = sadd.s32 %s312, 1
      %s314 = scalar_select %p311, %s312, %s313
      %p317 = pneg %p311
      %p318 = scmp.eq.s32.totalorder %s24, 1
      %p319 = por %p317, %p318
      %p320 = scmp.ne.s32.totalorder %s312, %s315
      %p321 = scmp.eq.s32.totalorder %s24, 0
      %p322 = por %p320, %p321
      %p323 = scmp.ne.s32.totalorder %s312, %s315
      %p324 = scmp.eq.s32.totalorder %s29, 1
      %p325 = por %p323, %p324
      %p326 = scmp.ne.s32.totalorder %s315, %s316
      %p327 = scmp.eq.s32.totalorder %s29, 0
      %p328 = por %p326, %p327
      %p329 = scmp.ne.s32.totalorder %s315, %s316
      %p330 = scmp.eq.s32.totalorder %s30, 1
      %p331 = por %p329, %p330
      %p333 = scmp.ne.s32.totalorder %s316, %s332
      %p334 = scmp.eq.s32.totalorder %s30, 0
      %p335 = por %p333, %p334
      %p336 = scmp.le.s32.totalorder 1, %s24
      %p337 = scmp.lt.s32.totalorder %s24, 3
      %p338 = pnand %p336, %p337
      %p339 = pneg %p338
      // Predicated region
      $region9: #{tpu_custom_call.1} parent=5 // pred_check
        _
      $region10: #{tpu_custom_call.1} parent=5 // pred_check_branch
        %341 = sbr.rel (%p338) target = $region12
      $region11: #{tpu_custom_call.1} parent=5 // pred_region
        %s342 = ssub.s32 %s24, 1
        // Predicated region
        $region13: #{tpu_custom_call.1} parent=11 // pred_check
          %p343 = pneg %p71
        $region14: #{tpu_custom_call.1} parent=11 // pred_check_branch
          %345 = sbr.rel (%p343) target = $region16
        $region15: #{tpu_custom_call.1} parent=11 // pred_region
          _
        $region16: #{tpu_custom_call.1} parent=11 // pred_fallthru
          _
        // Predicated region
        $region17: #{tpu_custom_call.1} parent=11 // pred_check
          %p346 = pneg %p92
        $region18: #{tpu_custom_call.1} parent=11 // pred_check_branch
          %348 = sbr.rel (%p346) target = $region20
        $region19: #{tpu_custom_call.1} parent=11 // pred_region
          _
        $region20: #{tpu_custom_call.1} parent=11 // pred_fallthru
          _
        // Predicated region
        $region21: #{tpu_custom_call.1} parent=11 // pred_check
          %p349 = pneg %p113
        $region22: #{tpu_custom_call.1} parent=11 // pred_check_branch
          %351 = sbr.rel (%p349) target = $region24
        $region23: #{tpu_custom_call.1} parent=11 // pred_region
          _
        $region24: #{tpu_custom_call.1} parent=11 // pred_fallthru
          _
        // Predicated region
        $region25: #{tpu_custom_call.1} parent=11 // pred_check
          %p352 = pneg %p134
        $region26: #{tpu_custom_call.1} parent=11 // pred_check_branch
          %354 = sbr.rel (%p352) target = $region28
        $region27: #{tpu_custom_call.1} parent=11 // pred_region
          _
        $region28: #{tpu_custom_call.1} parent=11 // pred_fallthru
          _
        // Predicated region
        $region29: #{tpu_custom_call.1} parent=11 // pred_check
          %p355 = pneg %p155
        $region30: #{tpu_custom_call.1} parent=11 // pred_check_branch
          %357 = sbr.rel (%p355) target = $region32
        $region31: #{tpu_custom_call.1} parent=11 // pred_region
          _
        $region32: #{tpu_custom_call.1} parent=11 // pred_fallthru
          _
        // Predicated region
        $region33: #{tpu_custom_call.1} parent=11 // pred_check
          %p358 = pneg %p176
        $region34: #{tpu_custom_call.1} parent=11 // pred_check_branch
          %360 = sbr.rel (%p358) target = $region36
        $region35: #{tpu_custom_call.1} parent=11 // pred_region
          _
        $region36: #{tpu_custom_call.1} parent=11 // pred_fallthru
          _
        // Predicated region
        $region37: #{tpu_custom_call.1} parent=11 // pred_check
          %p361 = pneg %p197
        $region38: #{tpu_custom_call.1} parent=11 // pred_check_branch
          %363 = sbr.rel (%p361) target = $region40
        $region39: #{tpu_custom_call.1} parent=11 // pred_region
          _
        $region40: #{tpu_custom_call.1} parent=11 // pred_fallthru
          _
        // Predicated region
        $region41: #{tpu_custom_call.1} parent=11 // pred_check
          %p364 = pneg %p218
        $region42: #{tpu_custom_call.1} parent=11 // pred_check_branch
          %366 = sbr.rel (%p364) target = $region44
        $region43: #{tpu_custom_call.1} parent=11 // pred_region
          _
        $region44: #{tpu_custom_call.1} parent=11 // pred_fallthru
          _
        // Predicated region
        $region45: #{tpu_custom_call.1} parent=11 // pred_check
          %p367 = pneg %p239
        $region46: #{tpu_custom_call.1} parent=11 // pred_check_branch
          %369 = sbr.rel (%p367) target = $region48
        $region47: #{tpu_custom_call.1} parent=11 // pred_region
          _
        $region48: #{tpu_custom_call.1} parent=11 // pred_fallthru
          _
        // Predicated region
        $region49: #{tpu_custom_call.1} parent=11 // pred_check
          %p370 = pneg %p260
        $region50: #{tpu_custom_call.1} parent=11 // pred_check_branch
          %372 = sbr.rel (%p370) target = $region52
        $region51: #{tpu_custom_call.1} parent=11 // pred_region
          _
        $region52: #{tpu_custom_call.1} parent=11 // pred_fallthru
          _
        // Predicated region
        $region53: #{tpu_custom_call.1} parent=11 // pred_check
          %p373 = pneg %p281
        $region54: #{tpu_custom_call.1} parent=11 // pred_check_branch
          %375 = sbr.rel (%p373) target = $region56
        $region55: #{tpu_custom_call.1} parent=11 // pred_region
          _
        $region56: #{tpu_custom_call.1} parent=11 // pred_fallthru
          _
        // Predicated region
        $region57: #{tpu_custom_call.1} parent=11 // pred_check
          %p376 = pneg %p302
        $region58: #{tpu_custom_call.1} parent=11 // pred_check_branch
          %378 = sbr.rel (%p376) target = $region60
        $region59: #{tpu_custom_call.1} parent=11 // pred_region
          _
        $region60: #{tpu_custom_call.1} parent=11 // pred_fallthru
          _
      $region12: #{tpu_custom_call.1} parent=5 // pred_fallthru
        _
      %p379 = scmp.lt.s32.totalorder %s24, 2
      // Predicated region
      $region61: #{tpu_custom_call.1} parent=5 // pred_check
        %p380 = pneg %p379
      $region62: #{tpu_custom_call.1} parent=5 // pred_check_branch
        %382 = sbr.rel (%p380) target = $region64
      $region63: #{tpu_custom_call.1} parent=5 // pred_region
        // Predicated region
        $region65: #{tpu_custom_call.1} parent=63 // pred_check
          %p383 = pneg %p44
        $region66: #{tpu_custom_call.1} parent=63 // pred_check_branch
          %385 = sbr.rel (%p383) target = $region68
        $region67: #{tpu_custom_call.1} parent=63 // pred_region
          %s386 = smul.u32 4, %s24
          %p387 = scmp.lt.s32.totalorder %s386, 7
          %s388 = scalar_select %p387, %s386, 7
          %s389 = smul.addr %s388, 4
          %s390 = scalar_lea.vmem %s0, %s389
          %s391 = smul.u32 4, %s24
        $region68: #{tpu_custom_call.1} parent=63 // pred_fallthru
          _
      $region64: #{tpu_custom_call.1} parent=5 // pred_fallthru
        _
      %p392 = scmp.le.s32.totalorder 1, %s24
      %p393 = scmp.lt.s32.totalorder %s24, 3
      %p394 = pnand %p392, %p393
      %p395 = pneg %p394
      // Predicated region
      $region69: #{tpu_custom_call.1} parent=5 // pred_check
        _
      $region70: #{tpu_custom_call.1} parent=5 // pred_check_branch
        %397 = sbr.rel (%p394) target = $region72
      $region71: #{tpu_custom_call.1} parent=5 // pred_region
        %s398 = ssub.s32 %s24, 1
        %s399 = smul.u32 4, %s29
        %p400 = scmp.lt.s32.totalorder %s399, 7
        %s401 = scalar_select %p400, %s399, 7
        %s402 = smul.addr %s401, 4
        %s403 = scalar_lea.vmem %s0, %s402
        %p404 = pneg %p50
        %p405 = pneg %p47
        %p406 = pneg %p71
        %p407 = pneg %p68
        %p408 = pneg %p92
        %p409 = pneg %p89
        %p410 = pneg %p113
        %p411 = pneg %p110
        %p412 = pneg %p134
        %p413 = pneg %p131
        %p414 = pneg %p155
        %p415 = pneg %p152
        %p416 = pneg %p176
        %p417 = pneg %p173
        %p418 = pneg %p197
        %p419 = pneg %p194
        %p420 = pneg %p218
        %p421 = pneg %p215
        %p422 = pneg %p239
        %p423 = pneg %p236
        %p424 = pneg %p260
        %p425 = pneg %p257
        %p426 = pneg %p281
        %p427 = pneg %p278
        %p428 = pneg %p302
        %p429 = pneg %p299
        %p430 = pneg %p328
        %p431 = pneg %p325
        %s432 = sand.u32 %s315, 1
        %s433 = scalar_lea.sflag [#allocation4], %s432
        %s434 = sand.u32 %s315, 1
        %s435 = smul.addr %s434, 4
        %s436 = scalar_lea.vmem [#allocation3], %s435
        %s437 = smul.u32 4, %s29
        %p438 = scmp.lt.s32.totalorder %s437, 7
        %s439 = scalar_select %p438, %s437, 7
        %s440 = smul.addr %s439, 4
        %s441 = scalar_lea.vmem %s0, %s440
        %s442 = smul.u32 4, %s29
        %s443 = smul.u32 4, %s29
        %v445 = vld [vmem:[%s441] sm:$0x77]
        %v446 = vld [vmem:[%s441 + $0x8] sm:$0x77]
        %v447 = vld [vmem:[%s1] sm:$0xff]
        %v448 = vld [vmem:[%s1 + $0x8] sm:$0xff]
        %v449 = vld [vmem:[%s1 + $0x10] sm:$0xff]
        %v450 = vld [vmem:[%s1 + $0x18] sm:$0xff]
        %v451 = vld [vmem:[%s2] sm:$0xff]
        %v452 = vld [vmem:[%s2 + $0x8] sm:$0xff]
        %v453 = vld [vmem:[%s2 + $0x10] sm:$0xff]
        %v454 = vld [vmem:[%s2 + $0x18] sm:$0xff]
        %456 = vset.pattern.permute.xlu0 0
        %457 = vperm.xlu0 %456, %v451
        %v458 = vpop.permute.xlu0 %457
        %461 = vset.pattern.permute.xlu0 0
        %462 = vperm.xlu0 %461, %v452
        %v463 = vpop.permute.xlu0 %462
        %466 = vset.pattern.permute.xlu0 0
        %467 = vperm.xlu0 %466, %v453
        %v468 = vpop.permute.xlu0 %467
        %471 = vset.pattern.permute.xlu0 0
        %472 = vperm.xlu0 %471, %v454
        %v473 = vpop.permute.xlu0 %472
        %v477 = vcombine.high %v445, %v445
        %v478 = vcombine.high %v446, %v446
        %vm479 = vcmask 23552
        %v481 = vsel %vm479, %v447, 0
        %v484 = vsel %vm479, %v448, 0
        %v487 = vsel %vm479, %v449, 0
        %v490 = vsel %vm479, %v450, 0
        %vm492 = vcmask 1042432
        %v493 = vsel %vm492, %v445, 0
        %v495 = vsel %vm492, %v477, 0
        %v497 = vsel %vm492, %v446, 0
        %v499 = vsel %vm492, %v478, 0
        %501 = vmatprep.subr.mxu0 0.0
        %502 = vmatpush1.msra.mxu0 0.0
        %503 = vmatprep.subr.mxu0 0.0
        %504 = vmatpush1.msra.mxu0 0.0
        %505 = vmatprep.subr.mxu0 0.0
        %506 = vmatpush1.msra.mxu0 0.0
        %507 = vmatprep.subr.mxu0 0.0
        %508 = vmatpush1.msra.mxu0 0.0
        %509 = vmatprep.subr.mxu0 0.0
        %510 = vmatpush1.msra.mxu0 0.0
        %511 = vmatprep.subr.mxu0 0.0
        %512 = vmatpush1.msra.mxu0 0.0
        %513 = vmatprep.subr.mxu0 0.0
        %514 = vmatpush1.msra.mxu0 0.0
        %515 = vmatprep.subr.mxu0 0.0
        %516 = vmatpush1.msra.mxu0 0.0
        %517 = vmatprep.subr.mxu0 0.0
        %518 = vmatpush1.msra.mxu0 0.0
        %519 = vmatprep.subr.mxu0 0.0
        %520 = vmatpush1.msra.mxu0 0.0
        %521 = vmatprep.subr.mxu0 0.0
        %522 = vmatpush1.msra.mxu0 0.0
        %523 = vmatprep.subr.mxu0 0.0
        %524 = vmatpush1.msra.mxu0 0.0
        %525 = vmatprep.subr.mxu0 0.0
        %526 = vmatpush1.msra.mxu0 0.0
        %527 = vmatprep.subr.mxu0 0.0
        %528 = vmatpush1.msra.mxu0 0.0
        %529 = vmatprep.subr.mxu0 0.0
        %530 = vmatpush1.msra.mxu0 0.0
        %531 = vmatprep.subr.mxu0 %v495
        %532 = vmatpush1.msra.mxu0 %v493
        %533 = vmatprep.subr.mxu0 0.0
        %534 = vmatpush2.msra.mxu0 0.0
        %535 = vmatprep.subr.mxu0 0.0
        %536 = vmatpush2.msra.mxu0 0.0
        %537 = vmatprep.subr.mxu0 0.0
        %538 = vmatpush2.msra.mxu0 0.0
        %539 = vmatprep.subr.mxu0 0.0
        %540 = vmatpush2.msra.mxu0 0.0
        %541 = vmatprep.subr.mxu0 0.0
        %542 = vmatpush2.msra.mxu0 0.0
        %543 = vmatprep.subr.mxu0 0.0
        %544 = vmatpush2.msra.mxu0 0.0
        %545 = vmatprep.subr.mxu0 0.0
        %546 = vmatpush2.msra.mxu0 0.0
        %547 = vmatprep.subr.mxu0 0.0
        %548 = vmatpush2.msra.mxu0 0.0
        %549 = vmatprep.subr.mxu0 0.0
        %550 = vmatpush2.msra.mxu0 0.0
        %551 = vmatprep.subr.mxu0 0.0
        %552 = vmatpush2.msra.mxu0 0.0
        %553 = vmatprep.subr.mxu0 0.0
        %554 = vmatpush2.msra.mxu0 0.0
        %555 = vmatprep.subr.mxu0 0.0
        %556 = vmatpush2.msra.mxu0 0.0
        %557 = vmatprep.subr.mxu0 0.0
        %558 = vmatpush2.msra.mxu0 0.0
        %559 = vmatprep.subr.mxu0 0.0
        %560 = vmatpush2.msra.mxu0 0.0
        %561 = vmatprep.subr.mxu0 0.0
        %562 = vmatpush2.msra.mxu0 0.0
        %563 = vmatprep.subr.mxu0 0.0
        %564 = vmatpush2.msra.mxu0 0.0
        %565 = vmatprep.mubr.f32.mxu0 0.0
        %566 = vmatmul.mubr.f32.gmra.mxu0 %v481
        %v567 = vpop.f32.mrf.mxu0
        %v568 = vadd.f32 %v458, %v567
        %v569 = vpop.f32.mrf.mxu0
        %v570 = vadd.f32 %v458, %v569
        %571 = vmatprep.mubr.f32.mxu0 0.0
        %572 = vmatmul.mubr.f32.gmra.mxu0 %v484
        %v573 = vpop.f32.mrf.mxu0
        %v574 = vadd.f32 %v463, %v573
        %v575 = vpop.f32.mrf.mxu0
        %v576 = vadd.f32 %v463, %v575
        %577 = vmatprep.mubr.f32.mxu0 0.0
        %578 = vmatmul.mubr.f32.gmra.mxu0 %v487
        %v579 = vpop.f32.mrf.mxu0
        %v580 = vadd.f32 %v468, %v579
        %v581 = vpop.f32.mrf.mxu0
        %v582 = vadd.f32 %v468, %v581
        %583 = vmatprep.mubr.f32.mxu0 0.0
        %584 = vmatmul.mubr.f32.gmra.mxu0 %v490
        %v585 = vpop.f32.mrf.mxu0
        %v586 = vadd.f32 %v473, %v585
        %v587 = vpop.f32.mrf.mxu0
        %v588 = vadd.f32 %v473, %v587
        %589 = vdwg.mxu0
        %590 = vmatprep.subr.mxu0 0.0
        %591 = vmatpush1.msra.mxu0 0.0
        %592 = vmatprep.subr.mxu0 0.0
        %593 = vmatpush1.msra.mxu0 0.0
        %594 = vmatprep.subr.mxu0 0.0
        %595 = vmatpush1.msra.mxu0 0.0
        %596 = vmatprep.subr.mxu0 0.0
        %597 = vmatpush1.msra.mxu0 0.0
        %598 = vmatprep.subr.mxu0 0.0
        %599 = vmatpush1.msra.mxu0 0.0
        %600 = vmatprep.subr.mxu0 0.0
        %601 = vmatpush1.msra.mxu0 0.0
        %602 = vmatprep.subr.mxu0 0.0
        %603 = vmatpush1.msra.mxu0 0.0
        %604 = vmatprep.subr.mxu0 0.0
        %605 = vmatpush1.msra.mxu0 0.0
        %606 = vmatprep.subr.mxu0 0.0
        %607 = vmatpush1.msra.mxu0 0.0
        %608 = vmatprep.subr.mxu0 0.0
        %609 = vmatpush1.msra.mxu0 0.0
        %610 = vmatprep.subr.mxu0 0.0
        %611 = vmatpush1.msra.mxu0 0.0
        %612 = vmatprep.subr.mxu0 0.0
        %613 = vmatpush1.msra.mxu0 0.0
        %614 = vmatprep.subr.mxu0 0.0
        %615 = vmatpush1.msra.mxu0 0.0
        %616 = vmatprep.subr.mxu0 0.0
        %617 = vmatpush1.msra.mxu0 0.0
        %618 = vmatprep.subr.mxu0 0.0
        %619 = vmatpush1.msra.mxu0 0.0
        %620 = vmatprep.subr.mxu0 %v499
        %621 = vmatpush1.msra.mxu0 %v497
        %622 = vmatprep.subr.mxu0 0.0
        %623 = vmatpush2.msra.mxu0 0.0
        %624 = vmatprep.subr.mxu0 0.0
        %625 = vmatpush2.msra.mxu0 0.0
        %626 = vmatprep.subr.mxu0 0.0
        %627 = vmatpush2.msra.mxu0 0.0
        %628 = vmatprep.subr.mxu0 0.0
        %629 = vmatpush2.msra.mxu0 0.0
        %630 = vmatprep.subr.mxu0 0.0
        %631 = vmatpush2.msra.mxu0 0.0
        %632 = vmatprep.subr.mxu0 0.0
        %633 = vmatpush2.msra.mxu0 0.0
        %634 = vmatprep.subr.mxu0 0.0
        %635 = vmatpush2.msra.mxu0 0.0
        %636 = vmatprep.subr.mxu0 0.0
        %637 = vmatpush2.msra.mxu0 0.0
        %638 = vmatprep.subr.mxu0 0.0
        %639 = vmatpush2.msra.mxu0 0.0
        %640 = vmatprep.subr.mxu0 0.0
        %641 = vmatpush2.msra.mxu0 0.0
        %642 = vmatprep.subr.mxu0 0.0
        %643 = vmatpush2.msra.mxu0 0.0
        %644 = vmatprep.subr.mxu0 0.0
        %645 = vmatpush2.msra.mxu0 0.0
        %646 = vmatprep.subr.mxu0 0.0
        %647 = vmatpush2.msra.mxu0 0.0
        %648 = vmatprep.subr.mxu0 0.0
        %649 = vmatpush2.msra.mxu0 0.0
        %650 = vmatprep.subr.mxu0 0.0
        %651 = vmatpush2.msra.mxu0 0.0
        %652 = vmatprep.subr.mxu0 0.0
        %653 = vmatpush2.msra.mxu0 0.0
        %654 = vmatprep.mubr.f32.mxu0 0.0
        %655 = vmatmul.mubr.f32.gmra.mxu0 %v481
        %v656 = vpop.f32.mrf.mxu0
        %v657 = vadd.f32 %v458, %v656
        %v658 = vpop.f32.mrf.mxu0
        %v659 = vadd.f32 %v458, %v658
        %660 = vmatprep.mubr.f32.mxu0 0.0
        %661 = vmatmul.mubr.f32.gmra.mxu0 %v484
        %v662 = vpop.f32.mrf.mxu0
        %v663 = vadd.f32 %v463, %v662
        %v664 = vpop.f32.mrf.mxu0
        %v665 = vadd.f32 %v463, %v664
        %666 = vmatprep.mubr.f32.mxu0 0.0
        %667 = vmatmul.mubr.f32.gmra.mxu0 %v487
        %v668 = vpop.f32.mrf.mxu0
        %v669 = vadd.f32 %v468, %v668
        %v670 = vpop.f32.mrf.mxu0
        %v671 = vadd.f32 %v468, %v670
        %672 = vmatprep.mubr.f32.mxu0 0.0
        %673 = vmatmul.mubr.f32.gmra.mxu0 %v490
        %v674 = vpop.f32.mrf.mxu0
        %v675 = vadd.f32 %v473, %v674
        %v676 = vpop.f32.mrf.mxu0
        %v677 = vadd.f32 %v473, %v676
        %678 = vdwg.mxu0
        %v679 = vld [vmem:[%s3] sm:$0xff]
        %v680 = vld [vmem:[%s3 + $0x8] sm:$0xff]
        %v681 = vld [vmem:[%s3 + $0x10] sm:$0xff]
        %v682 = vld [vmem:[%s3 + $0x18] sm:$0xff]
        %v683 = vld [vmem:[%s4] sm:$0xff]
        %v684 = vld [vmem:[%s4 + $0x8] sm:$0xff]
        %v685 = vld [vmem:[%s4 + $0x10] sm:$0xff]
        %v686 = vld [vmem:[%s4 + $0x18] sm:$0xff]
        %v687 = vadd.f32 %v568, %v574
        %v688 = vadd.f32 %v687, %v580
        %v689 = vadd.f32 %v688, %v586
        %v690 = vrot.slane %v689, 4
        %v691 = vadd.f32 %v689, %v690
        %v692 = vrot.slane %v691, 2
        %v693 = vadd.f32 %v691, %v692
        %v694 = vrot.slane %v693, 1
        %v695 = vadd.f32 %v693, %v694
        %v696 = vadd.f32 %v570, %v576
        %v697 = vadd.f32 %v696, %v582
        %v698 = vadd.f32 %v697, %v588
        %v699 = vrot.slane %v698, 4
        %v700 = vadd.f32 %v698, %v699
        %v701 = vrot.slane %v700, 2
        %v702 = vadd.f32 %v700, %v701
        %v703 = vrot.slane %v702, 1
        %v704 = vadd.f32 %v702, %v703
        %v705 = vadd.f32 %v657, %v663
        %v706 = vadd.f32 %v705, %v669
        %v707 = vadd.f32 %v706, %v675
        %v708 = vrot.slane %v707, 4
        %v709 = vadd.f32 %v707, %v708
        %v710 = vrot.slane %v709, 2
        %v711 = vadd.f32 %v709, %v710
        %v712 = vrot.slane %v711, 1
        %v713 = vadd.f32 %v711, %v712
        %v714 = vadd.f32 %v659, %v665
        %v715 = vadd.f32 %v714, %v671
        %v716 = vadd.f32 %v715, %v677
        %v717 = vrot.slane %v716, 4
        %v718 = vadd.f32 %v716, %v717
        %v719 = vrot.slane %v718, 2
        %v720 = vadd.f32 %v718, %v719
        %v721 = vrot.slane %v720, 1
        %v722 = vadd.f32 %v720, %v721
        %v723 = vrcp.pop 32.0
        %v724 = vmul.f32 %v695, %v723
        %v725 = vmul.f32 %v704, %v723
        %v726 = vmul.f32 %v713, %v723
        %v727 = vmul.f32 %v722, %v723
        %v728 = vsub.f32 %v568, %v724
        %v729 = vsub.f32 %v570, %v725
        %v730 = vsub.f32 %v657, %v726
        %v731 = vsub.f32 %v659, %v727
        %v732 = vsub.f32 %v574, %v724
        %v733 = vsub.f32 %v576, %v725
        %v734 = vsub.f32 %v663, %v726
        %v735 = vsub.f32 %v665, %v727
        %v736 = vsub.f32 %v580, %v724
        %v737 = vsub.f32 %v582, %v725
        %v738 = vsub.f32 %v669, %v726
        %v739 = vsub.f32 %v671, %v727
        %v740 = vsub.f32 %v586, %v724
        %v741 = vsub.f32 %v588, %v725
        %v742 = vsub.f32 %v675, %v726
        %v743 = vsub.f32 %v677, %v727
        %v744 = vmul.f32 %v728, %v728
        %v745 = vmul.f32 %v729, %v729
        %v746 = vmul.f32 %v730, %v730
        %v747 = vmul.f32 %v731, %v731
        %v748 = vmul.f32 %v732, %v732
        %v749 = vmul.f32 %v733, %v733
        %v750 = vmul.f32 %v734, %v734
        %v751 = vmul.f32 %v735, %v735
        %v752 = vmul.f32 %v736, %v736
        %v753 = vmul.f32 %v737, %v737
        %v754 = vmul.f32 %v738, %v738
        %v755 = vmul.f32 %v739, %v739
        %v756 = vmul.f32 %v740, %v740
        %v757 = vmul.f32 %v741, %v741
        %v758 = vmul.f32 %v742, %v742
        %v759 = vmul.f32 %v743, %v743
        %v760 = vadd.f32 %v744, %v748
        %v761 = vadd.f32 %v760, %v752
        %v762 = vadd.f32 %v761, %v756
        %v763 = vrot.slane %v762, 4
        %v764 = vadd.f32 %v762, %v763
        %v765 = vrot.slane %v764, 2
        %v766 = vadd.f32 %v764, %v765
        %v767 = vrot.slane %v766, 1
        %v768 = vadd.f32 %v766, %v767
        %v769 = vadd.f32 %v745, %v749
        %v770 = vadd.f32 %v769, %v753
        %v771 = vadd.f32 %v770, %v757
        %v772 = vrot.slane %v771, 4
        %v773 = vadd.f32 %v771, %v772
        %v774 = vrot.slane %v773, 2
        %v775 = vadd.f32 %v773, %v774
        %v776 = vrot.slane %v775, 1
        %v777 = vadd.f32 %v775, %v776
        %v778 = vadd.f32 %v746, %v750
        %v779 = vadd.f32 %v778, %v754
        %v780 = vadd.f32 %v779, %v758
        %v781 = vrot.slane %v780, 4
        %v782 = vadd.f32 %v780, %v781
        %v783 = vrot.slane %v782, 2
        %v784 = vadd.f32 %v782, %v783
        %v785 = vrot.slane %v784, 1
        %v786 = vadd.f32 %v784, %v785
        %v787 = vadd.f32 %v747, %v751
        %v788 = vadd.f32 %v787, %v755
        %v789 = vadd.f32 %v788, %v759
        %v790 = vrot.slane %v789, 4
        %v791 = vadd.f32 %v789, %v790
        %v792 = vrot.slane %v791, 2
        %v793 = vadd.f32 %v791, %v792
        %v794 = vrot.slane %v793, 1
        %v795 = vadd.f32 %v793, %v794
        %v796 = vrcp.pop 31.0
        %v797 = vmul.f32 %v768, %v796
        %v798 = vmul.f32 %v777, %v796
        %v799 = vmul.f32 %v786, %v796
        %v800 = vmul.f32 %v795, %v796
        %v801 = vrsqrt.pop %v797
        %v802 = vmul.f32 %v797, %v801
        %vm803 = vcmp.eq.f32.partialorder %v797, inf
        %v804 = vsel %vm803, %v797, %v802
        %vm805 = vcmp.eq.f32.partialorder %v797, 0.0
        %v806 = vand.u32 %v797, 2147483648
        %v807 = vsel %vm805, %v806, %v804
        %v808 = vrsqrt.pop %v798
        %v809 = vmul.f32 %v798, %v808
        %vm810 = vcmp.eq.f32.partialorder %v798, inf
        %v811 = vsel %vm810, %v798, %v809
        %vm812 = vcmp.eq.f32.partialorder %v798, 0.0
        %v813 = vand.u32 %v798, 2147483648
        %v814 = vsel %vm812, %v813, %v811
        %v815 = vrsqrt.pop %v799
        %v816 = vmul.f32 %v799, %v815
        %vm817 = vcmp.eq.f32.partialorder %v799, inf
        %v818 = vsel %vm817, %v799, %v816
        %vm819 = vcmp.eq.f32.partialorder %v799, 0.0
        %v820 = vand.u32 %v799, 2147483648
        %v821 = vsel %vm819, %v820, %v818
        %v822 = vrsqrt.pop %v800
        %v823 = vmul.f32 %v800, %v822
        %vm824 = vcmp.eq.f32.partialorder %v800, inf
        %v825 = vsel %vm824, %v800, %v823
        %vm826 = vcmp.eq.f32.partialorder %v800, 0.0
        %v827 = vand.u32 %v800, 2147483648
        %v828 = vsel %vm826, %v827, %v825
        %v829 = vadd.f32 %v807, 1e-05
        %v830 = vadd.f32 %v814, 1e-05
        %v831 = vadd.f32 %v821, 1e-05
        %v832 = vadd.f32 %v828, 1e-05
        %v833 = vrcp.pop %v829
        %v834 = vrcp.pop %v830
        %v835 = vrcp.pop %v831
        %v836 = vrcp.pop %v832
        %v837 = vmul.f32 %v829, %v833
        %v838 = vmul.f32 %v830, %v834
        %v839 = vmul.f32 %v831, %v835
        %v840 = vmul.f32 %v832, %v836
        %v841 = vsub.f32 2.0, %v837
        %v842 = vsub.f32 2.0, %v838
        %v843 = vsub.f32 2.0, %v839
        %v844 = vsub.f32 2.0, %v840
        %v845 = vmul.f32 %v833, %v841
        %v846 = vmul.f32 %v834, %v842
        %v847 = vmul.f32 %v835, %v843
        %v848 = vmul.f32 %v836, %v844
        %v849 = vmul.f32 %v728, %v845
        %v850 = vmul.f32 %v729, %v846
        %v851 = vmul.f32 %v730, %v847
        %v852 = vmul.f32 %v731, %v848
        %v853 = vmul.f32 %v732, %v845
        %v854 = vmul.f32 %v733, %v846
        %v855 = vmul.f32 %v734, %v847
        %v856 = vmul.f32 %v735, %v848
        %v857 = vmul.f32 %v736, %v845
        %v858 = vmul.f32 %v737, %v846
        %v859 = vmul.f32 %v738, %v847
        %v860 = vmul.f32 %v739, %v848
        %v861 = vmul.f32 %v740, %v845
        %v862 = vmul.f32 %v741, %v846
        %v863 = vmul.f32 %v742, %v847
        %v864 = vmul.f32 %v743, %v848
        %866 = vset.pattern.permute.xlu0 0
        %867 = vperm.xlu0 %866, %v679
        %v868 = vpop.permute.xlu0 %867
        %871 = vset.pattern.permute.xlu0 0
        %872 = vperm.xlu0 %871, %v680
        %v873 = vpop.permute.xlu0 %872
        %876 = vset.pattern.permute.xlu0 0
        %877 = vperm.xlu0 %876, %v681
        %v878 = vpop.permute.xlu0 %877
        %881 = vset.pattern.permute.xlu0 0
        %882 = vperm.xlu0 %881, %v682
        %v883 = vpop.permute.xlu0 %882
        %v885 = vmul.f32 %v849, %v868
        %v886 = vmul.f32 %v850, %v868
        %v887 = vmul.f32 %v851, %v868
        %v888 = vmul.f32 %v852, %v868
        %v889 = vmul.f32 %v853, %v873
        %v890 = vmul.f32 %v854, %v873
        %v891 = vmul.f32 %v855, %v873
        %v892 = vmul.f32 %v856, %v873
        %v893 = vmul.f32 %v857, %v878
        %v894 = vmul.f32 %v858, %v878
        %v895 = vmul.f32 %v859, %v878
        %v896 = vmul.f32 %v860, %v878
        %v897 = vmul.f32 %v861, %v883
        %v898 = vmul.f32 %v862, %v883
        %v899 = vmul.f32 %v863, %v883
        %v900 = vmul.f32 %v864, %v883
        %902 = vset.pattern.permute.xlu0 0
        %903 = vperm.xlu0 %902, %v683
        %v904 = vpop.permute.xlu0 %903
        %907 = vset.pattern.permute.xlu0 0
        %908 = vperm.xlu0 %907, %v684
        %v909 = vpop.permute.xlu0 %908
        %912 = vset.pattern.permute.xlu0 0
        %913 = vperm.xlu0 %912, %v685
        %v914 = vpop.permute.xlu0 %913
        %917 = vset.pattern.permute.xlu0 0
        %918 = vperm.xlu0 %917, %v686
        %v919 = vpop.permute.xlu0 %918
        %v921 = vadd.f32 %v885, %v904
        %v922 = vadd.f32 %v886, %v904
        %v923 = vadd.f32 %v887, %v904
        %v924 = vadd.f32 %v888, %v904
        %v925 = vadd.f32 %v889, %v909
        %v926 = vadd.f32 %v890, %v909
        %v927 = vadd.f32 %v891, %v909
        %v928 = vadd.f32 %v892, %v909
        %v929 = vadd.f32 %v893, %v914
        %v930 = vadd.f32 %v894, %v914
        %v931 = vadd.f32 %v895, %v914
        %v932 = vadd.f32 %v896, %v914
        %v933 = vadd.f32 %v897, %v919
        %v934 = vadd.f32 %v898, %v919
        %v935 = vadd.f32 %v899, %v919
        %v936 = vadd.f32 %v900, %v919
        %v937 = vtanh.pop %v921
        %v938 = vtanh.pop %v922
        %v939 = vtanh.pop %v923
        %v940 = vtanh.pop %v924
        %v941 = vtanh.pop %v925
        %v942 = vtanh.pop %v926
        %v943 = vtanh.pop %v927
        %v944 = vtanh.pop %v928
        %v945 = vtanh.pop %v929
        %v946 = vtanh.pop %v930
        %v947 = vtanh.pop %v931
        %v948 = vtanh.pop %v932
        %v949 = vtanh.pop %v933
        %v950 = vtanh.pop %v934
        %v951 = vtanh.pop %v935
        %v952 = vtanh.pop %v936
        %v953 = vld [vmem:[%s5] sm:$0xf]
        %v954 = vld [vmem:[%s5 + $0x4] sm:$0xf]
        %v955 = vld [vmem:[%s5 + $0x8] sm:$0xf]
        %v956 = vld [vmem:[%s5 + $0xc] sm:$0xf]
        %v957 = vld [vmem:[%s5 + $0x10] sm:$0xf]
        %v958 = vld [vmem:[%s5 + $0x14] sm:$0xf]
        %v959 = vld [vmem:[%s5 + $0x18] sm:$0xf]
        %v960 = vld [vmem:[%s5 + $0x1c] sm:$0xf]
        %v961 = vld [vmem:[%s5 + $0x20] sm:$0xf]
        %v962 = vld [vmem:[%s5 + $0x24] sm:$0xf]
        %v963 = vld [vmem:[%s5 + $0x28] sm:$0xf]
        %v964 = vld [vmem:[%s5 + $0x2c] sm:$0xf]
        %v965 = vld [vmem:[%s5 + $0x30] sm:$0xf]
        %v966 = vld [vmem:[%s5 + $0x34] sm:$0xf]
        %v967 = vld [vmem:[%s5 + $0x38] sm:$0xf]
        %v968 = vld [vmem:[%s5 + $0x3c] sm:$0xf]
        %v969 = vpack.c.bf16 %v941, %v937
        %v970 = vpack.c.bf16 %v942, %v938
        %v971 = vpack.c.bf16 %v943, %v939
        %v972 = vpack.c.bf16 %v944, %v940
        %v973 = vpack.c.bf16 %v949, %v945
        %v974 = vpack.c.bf16 %v950, %v946
        %v975 = vpack.c.bf16 %v951, %v947
        %v976 = vpack.c.bf16 %v952, %v948
        %v977 = vld [vmem:[%s6] sm:$0xff]
        %v978 = vld [vmem:[%s6 + $0x8] sm:$0xff]
        %v979 = vld [vmem:[%s6 + $0x10] sm:$0xff]
        %v980 = vld [vmem:[%s6 + $0x18] sm:$0xff]
        %v981 = vld [vmem:[%s6 + $0x20] sm:$0xff]
        %v982 = vld [vmem:[%s6 + $0x28] sm:$0xff]
        %v983 = vld [vmem:[%s6 + $0x30] sm:$0xff]
        %v984 = vld [vmem:[%s6 + $0x38] sm:$0xff]
        %v985 = vld [vmem:[%s6 + $0x40] sm:$0xff]
        %v986 = vld [vmem:[%s6 + $0x48] sm:$0xff]
        %v987 = vld [vmem:[%s6 + $0x50] sm:$0xff]
        %v988 = vld [vmem:[%s6 + $0x58] sm:$0xff]
        %v989 = vld [vmem:[%s6 + $0x60] sm:$0xff]
        %v990 = vld [vmem:[%s6 + $0x68] sm:$0xff]
        %v991 = vld [vmem:[%s6 + $0x70] sm:$0xff]
        %v992 = vld [vmem:[%s6 + $0x78] sm:$0xff]
        %994 = vset.pattern.permute.xlu0 0
        %995 = vperm.xlu0 %994, %v977
        %v996 = vpop.permute.xlu0 %995
        %999 = vset.pattern.permute.xlu0 0
        %1000 = vperm.xlu0 %999, %v978
        %v1001 = vpop.permute.xlu0 %1000
        %1004 = vset.pattern.permute.xlu0 0
        %1005 = vperm.xlu0 %1004, %v979
        %v1006 = vpop.permute.xlu0 %1005
        %1009 = vset.pattern.permute.xlu0 0
        %1010 = vperm.xlu0 %1009, %v980
        %v1011 = vpop.permute.xlu0 %1010
        %1014 = vset.pattern.permute.xlu0 0
        %1015 = vperm.xlu0 %1014, %v981
        %v1016 = vpop.permute.xlu0 %1015
        %1019 = vset.pattern.permute.xlu0 0
        %1020 = vperm.xlu0 %1019, %v982
        %v1021 = vpop.permute.xlu0 %1020
        %1024 = vset.pattern.permute.xlu0 0
        %1025 = vperm.xlu0 %1024, %v983
        %v1026 = vpop.permute.xlu0 %1025
        %1029 = vset.pattern.permute.xlu0 0
        %1030 = vperm.xlu0 %1029, %v984
        %v1031 = vpop.permute.xlu0 %1030
        %1034 = vset.pattern.permute.xlu0 0
        %1035 = vperm.xlu0 %1034, %v985
        %v1036 = vpop.permute.xlu0 %1035
        %1039 = vset.pattern.permute.xlu0 0
        %1040 = vperm.xlu0 %1039, %v986
        %v1041 = vpop.permute.xlu0 %1040
        %1044 = vset.pattern.permute.xlu0 0
        %1045 = vperm.xlu0 %1044, %v987
        %v1046 = vpop.permute.xlu0 %1045
        %1049 = vset.pattern.permute.xlu0 0
        %1050 = vperm.xlu0 %1049, %v988
        %v1051 = vpop.permute.xlu0 %1050
        %1054 = vset.pattern.permute.xlu0 0
        %1055 = vperm.xlu0 %1054, %v989
        %v1056 = vpop.permute.xlu0 %1055
        %1059 = vset.pattern.permute.xlu0 0
        %1060 = vperm.xlu0 %1059, %v990
        %v1061 = vpop.permute.xlu0 %1060
        %1064 = vset.pattern.permute.xlu0 0
        %1065 = vperm.xlu0 %1064, %v991
        %v1066 = vpop.permute.xlu0 %1065
        %1069 = vset.pattern.permute.xlu0 0
        %1070 = vperm.xlu0 %1069, %v992
        %v1071 = vpop.permute.xlu0 %1070
        %v1089 = vunpack.c.l.b16 %v953
        %v1090 = vunpack.c.l.b16 %v954
        %v1091 = vunpack.c.l.b16 %v955
        %v1092 = vunpack.c.l.b16 %v956
        %v1093 = vunpack.c.l.b16 %v957
        %v1094 = vunpack.c.l.b16 %v958
        %v1095 = vunpack.c.l.b16 %v959
        %v1096 = vunpack.c.l.b16 %v960
        %v1097 = vunpack.c.l.b16 %v961
        %v1098 = vunpack.c.l.b16 %v962
        %v1099 = vunpack.c.l.b16 %v963
        %v1100 = vunpack.c.l.b16 %v964
        %v1101 = vunpack.c.l.b16 %v965
        %v1102 = vunpack.c.l.b16 %v966
        %v1103 = vunpack.c.l.b16 %v967
        %v1104 = vunpack.c.l.b16 %v968
        %v1105 = vpack.c.b16 %v1090, %v1089
        %v1106 = vpack.c.b16 %v1092, %v1091
        %v1107 = vpack.c.b16 %v1094, %v1093
        %v1108 = vpack.c.b16 %v1096, %v1095
        %v1109 = vpack.c.b16 %v1098, %v1097
        %v1110 = vpack.c.b16 %v1100, %v1099
        %v1111 = vpack.c.b16 %v1102, %v1101
        %v1112 = vpack.c.b16 %v1104, %v1103
        %vm1113 = vcmask 261120
        %v1115 = vsel %vm1113, %v1105, 0
        %v1118 = vsel %vm1113, %v1106, 0
        %v1121 = vsel %vm1113, %v1107, 0
        %v1124 = vsel %vm1113, %v1108, 0
        %v1127 = vsel %vm1113, %v1109, 0
        %v1130 = vsel %vm1113, %v1110, 0
        %v1133 = vsel %vm1113, %v1111, 0
        %v1136 = vsel %vm1113, %v1112, 0
        %1138 = vmatprep.subr.bf16.mxu0 0
        %1139 = vmatpush1.bf16.msra.mxu0 0
        %1140 = vmatprep.subr.bf16.mxu0 0
        %1141 = vmatpush1.bf16.msra.mxu0 0
        %1142 = vmatprep.subr.bf16.mxu0 0
        %1143 = vmatpush1.bf16.msra.mxu0 0
        %1144 = vmatprep.subr.bf16.mxu0 0
        %1145 = vmatpush1.bf16.msra.mxu0 0
        %1146 = vmatprep.subr.bf16.mxu0 0
        %1147 = vmatpush1.bf16.msra.mxu0 0
        %1148 = vmatprep.subr.bf16.mxu0 0
        %1149 = vmatpush1.bf16.msra.mxu0 0
        %1150 = vmatprep.subr.bf16.mxu0 %v974
        %1151 = vmatpush1.bf16.msra.mxu0 %v973
        %1152 = vmatprep.subr.bf16.mxu0 %v970
        %1153 = vmatpush1.bf16.msra.mxu0 %v969
        %1154 = vmatprep.subr.bf16.mxu0 0
        %1155 = vmatpush2.bf16.msra.mxu0 0
        %1156 = vmatprep.subr.bf16.mxu0 0
        %1157 = vmatpush2.bf16.msra.mxu0 0
        %1158 = vmatprep.subr.bf16.mxu0 0
        %1159 = vmatpush2.bf16.msra.mxu0 0
        %1160 = vmatprep.subr.bf16.mxu0 0
        %1161 = vmatpush2.bf16.msra.mxu0 0
        %1162 = vmatprep.subr.bf16.mxu0 0
        %1163 = vmatpush2.bf16.msra.mxu0 0
        %1164 = vmatprep.subr.bf16.mxu0 0
        %1165 = vmatpush2.bf16.msra.mxu0 0
        %1166 = vmatprep.subr.bf16.mxu0 0
        %1167 = vmatpush2.bf16.msra.mxu0 0
        %1168 = vmatprep.subr.bf16.mxu0 0
        %1169 = vmatpush2.bf16.msra.mxu0 0
        %1170 = vmatprep.mubr.bf16.mxu0 0
        %1171 = vmatmul.mubr.bf16.gmra.mxu0 %v1115
        %v1172 = vpop.f32.mrf.mxu0
        %v1173 = vadd.f32 %v996, %v1172
        %v1174 = vpop.f32.mrf.mxu0
        %v1175 = vadd.f32 %v996, %v1174
        %v1176 = vpop.f32.mrf.mxu0
        %v1177 = vadd.f32 %v1001, %v1176
        %v1178 = vpop.f32.mrf.mxu0
        %v1179 = vadd.f32 %v1001, %v1178
        %1180 = vmatprep.mubr.bf16.mxu0 0
        %1181 = vmatmul.mubr.bf16.gmra.mxu0 %v1118
        %v1182 = vpop.f32.mrf.mxu0
        %v1183 = vadd.f32 %v1006, %v1182
        %v1184 = vpop.f32.mrf.mxu0
        %v1185 = vadd.f32 %v1006, %v1184
        %v1186 = vpop.f32.mrf.mxu0
        %v1187 = vadd.f32 %v1011, %v1186
        %v1188 = vpop.f32.mrf.mxu0
        %v1189 = vadd.f32 %v1011, %v1188
        %1190 = vmatprep.mubr.bf16.mxu0 0
        %1191 = vmatmul.mubr.bf16.gmra.mxu0 %v1121
        %v1192 = vpop.f32.mrf.mxu0
        %v1193 = vadd.f32 %v1016, %v1192
        %v1194 = vpop.f32.mrf.mxu0
        %v1195 = vadd.f32 %v1016, %v1194
        %v1196 = vpop.f32.mrf.mxu0
        %v1197 = vadd.f32 %v1021, %v1196
        %v1198 = vpop.f32.mrf.mxu0
        %v1199 = vadd.f32 %v1021, %v1198
        %1200 = vmatprep.mubr.bf16.mxu0 0
        %1201 = vmatmul.mubr.bf16.gmra.mxu0 %v1124
        %v1202 = vpop.f32.mrf.mxu0
        %v1203 = vadd.f32 %v1026, %v1202
        %v1204 = vpop.f32.mrf.mxu0
        %v1205 = vadd.f32 %v1026, %v1204
        %v1206 = vpop.f32.mrf.mxu0
        %v1207 = vadd.f32 %v1031, %v1206
        %v1208 = vpop.f32.mrf.mxu0
        %v1209 = vadd.f32 %v1031, %v1208
        %1210 = vmatprep.mubr.bf16.mxu0 0
        %1211 = vmatmul.mubr.bf16.gmra.mxu0 %v1127
        %v1212 = vpop.f32.mrf.mxu0
        %v1213 = vadd.f32 %v1036, %v1212
        %v1214 = vpop.f32.mrf.mxu0
        %v1215 = vadd.f32 %v1036, %v1214
        %v1216 = vpop.f32.mrf.mxu0
        %v1217 = vadd.f32 %v1041, %v1216
        %v1218 = vpop.f32.mrf.mxu0
        %v1219 = vadd.f32 %v1041, %v1218
        %1220 = vmatprep.mubr.bf16.mxu0 0
        %1221 = vmatmul.mubr.bf16.gmra.mxu0 %v1130
        %v1222 = vpop.f32.mrf.mxu0
        %v1223 = vadd.f32 %v1046, %v1222
        %v1224 = vpop.f32.mrf.mxu0
        %v1225 = vadd.f32 %v1046, %v1224
        %v1226 = vpop.f32.mrf.mxu0
        %v1227 = vadd.f32 %v1051, %v1226
        %v1228 = vpop.f32.mrf.mxu0
        %v1229 = vadd.f32 %v1051, %v1228
        %1230 = vmatprep.mubr.bf16.mxu0 0
        %1231 = vmatmul.mubr.bf16.gmra.mxu0 %v1133
        %v1232 = vpop.f32.mrf.mxu0
        %v1233 = vadd.f32 %v1056, %v1232
        %v1234 = vpop.f32.mrf.mxu0
        %v1235 = vadd.f32 %v1056, %v1234
        %v1236 = vpop.f32.mrf.mxu0
        %v1237 = vadd.f32 %v1061, %v1236
        %v1238 = vpop.f32.mrf.mxu0
        %v1239 = vadd.f32 %v1061, %v1238
        %1240 = vmatprep.mubr.bf16.mxu0 0
        %1241 = vmatmul.mubr.bf16.gmra.mxu0 %v1136
        %v1242 = vpop.f32.mrf.mxu0
        %v1243 = vadd.f32 %v1066, %v1242
        %v1244 = vpop.f32.mrf.mxu0
        %v1245 = vadd.f32 %v1066, %v1244
        %v1246 = vpop.f32.mrf.mxu0
        %v1247 = vadd.f32 %v1071, %v1246
        %v1248 = vpop.f32.mrf.mxu0
        %v1249 = vadd.f32 %v1071, %v1248
        %1250 = vdwg.mxu0
        %1251 = vmatprep.subr.bf16.mxu0 0
        %1252 = vmatpush1.bf16.msra.mxu0 0
        %1253 = vmatprep.subr.bf16.mxu0 0
        %1254 = vmatpush1.bf16.msra.mxu0 0
        %1255 = vmatprep.subr.bf16.mxu0 0
        %1256 = vmatpush1.bf16.msra.mxu0 0
        %1257 = vmatprep.subr.bf16.mxu0 0
        %1258 = vmatpush1.bf16.msra.mxu0 0
        %1259 = vmatprep.subr.bf16.mxu0 0
        %1260 = vmatpush1.bf16.msra.mxu0 0
        %1261 = vmatprep.subr.bf16.mxu0 0
        %1262 = vmatpush1.bf16.msra.mxu0 0
        %1263 = vmatprep.subr.bf16.mxu0 %v976
        %1264 = vmatpush1.bf16.msra.mxu0 %v975
        %1265 = vmatprep.subr.bf16.mxu0 %v972
        %1266 = vmatpush1.bf16.msra.mxu0 %v971
        %1267 = vmatprep.subr.bf16.mxu0 0
        %1268 = vmatpush2.bf16.msra.mxu0 0
        %1269 = vmatprep.subr.bf16.mxu0 0
        %1270 = vmatpush2.bf16.msra.mxu0 0
        %1271 = vmatprep.subr.bf16.mxu0 0
        %1272 = vmatpush2.bf16.msra.mxu0 0
        %1273 = vmatprep.subr.bf16.mxu0 0
        %1274 = vmatpush2.bf16.msra.mxu0 0
        %1275 = vmatprep.subr.bf16.mxu0 0
        %1276 = vmatpush2.bf16.msra.mxu0 0
        %1277 = vmatprep.subr.bf16.mxu0 0
        %1278 = vmatpush2.bf16.msra.mxu0 0
        %1279 = vmatprep.subr.bf16.mxu0 0
        %1280 = vmatpush2.bf16.msra.mxu0 0
        %1281 = vmatprep.subr.bf16.mxu0 0
        %1282 = vmatpush2.bf16.msra.mxu0 0
        %1283 = vmatprep.mubr.bf16.mxu0 0
        %1284 = vmatmul.mubr.bf16.gmra.mxu0 %v1115
        %v1285 = vpop.f32.mrf.mxu0
        %v1286 = vadd.f32 %v996, %v1285
        %v1287 = vpop.f32.mrf.mxu0
        %v1288 = vadd.f32 %v996, %v1287
        %v1289 = vpop.f32.mrf.mxu0
        %v1290 = vadd.f32 %v1001, %v1289
        %v1291 = vpop.f32.mrf.mxu0
        %v1292 = vadd.f32 %v1001, %v1291
        %1293 = vmatprep.mubr.bf16.mxu0 0
        %1294 = vmatmul.mubr.bf16.gmra.mxu0 %v1118
        %v1295 = vpop.f32.mrf.mxu0
        %v1296 = vadd.f32 %v1006, %v1295
        %v1297 = vpop.f32.mrf.mxu0
        %v1298 = vadd.f32 %v1006, %v1297
        %v1299 = vpop.f32.mrf.mxu0
        %v1300 = vadd.f32 %v1011, %v1299
        %v1301 = vpop.f32.mrf.mxu0
        %v1302 = vadd.f32 %v1011, %v1301
        %1303 = vmatprep.mubr.bf16.mxu0 0
        %1304 = vmatmul.mubr.bf16.gmra.mxu0 %v1121
        %v1305 = vpop.f32.mrf.mxu0
        %v1306 = vadd.f32 %v1016, %v1305
        %v1307 = vpop.f32.mrf.mxu0
        %v1308 = vadd.f32 %v1016, %v1307
        %v1309 = vpop.f32.mrf.mxu0
        %v1310 = vadd.f32 %v1021, %v1309
        %v1311 = vpop.f32.mrf.mxu0
        %v1312 = vadd.f32 %v1021, %v1311
        %1313 = vmatprep.mubr.bf16.mxu0 0
        %1314 = vmatmul.mubr.bf16.gmra.mxu0 %v1124
        %v1315 = vpop.f32.mrf.mxu0
        %v1316 = vadd.f32 %v1026, %v1315
        %v1317 = vpop.f32.mrf.mxu0
        %v1318 = vadd.f32 %v1026, %v1317
        %v1319 = vpop.f32.mrf.mxu0
        %v1320 = vadd.f32 %v1031, %v1319
        %v1321 = vpop.f32.mrf.mxu0
        %v1322 = vadd.f32 %v1031, %v1321
        %1323 = vmatprep.mubr.bf16.mxu0 0
        %1324 = vmatmul.mubr.bf16.gmra.mxu0 %v1127
        %v1325 = vpop.f32.mrf.mxu0
        %v1326 = vadd.f32 %v1036, %v1325
        %v1327 = vpop.f32.mrf.mxu0
        %v1328 = vadd.f32 %v1036, %v1327
        %v1329 = vpop.f32.mrf.mxu0
        %v1330 = vadd.f32 %v1041, %v1329
        %v1331 = vpop.f32.mrf.mxu0
        %v1332 = vadd.f32 %v1041, %v1331
        %1333 = vmatprep.mubr.bf16.mxu0 0
        %1334 = vmatmul.mubr.bf16.gmra.mxu0 %v1130
        %v1335 = vpop.f32.mrf.mxu0
        %v1336 = vadd.f32 %v1046, %v1335
        %v1337 = vpop.f32.mrf.mxu0
        %v1338 = vadd.f32 %v1046, %v1337
        %v1339 = vpop.f32.mrf.mxu0
        %v1340 = vadd.f32 %v1051, %v1339
        %v1341 = vpop.f32.mrf.mxu0
        %v1342 = vadd.f32 %v1051, %v1341
        %1343 = vmatprep.mubr.bf16.mxu0 0
        %1344 = vmatmul.mubr.bf16.gmra.mxu0 %v1133
        %v1345 = vpop.f32.mrf.mxu0
        %v1346 = vadd.f32 %v1056, %v1345
        %v1347 = vpop.f32.mrf.mxu0
        %v1348 = vadd.f32 %v1056, %v1347
        %v1349 = vpop.f32.mrf.mxu0
        %v1350 = vadd.f32 %v1061, %v1349
        %v1351 = vpop.f32.mrf.mxu0
        %v1352 = vadd.f32 %v1061, %v1351
        %1353 = vmatprep.mubr.bf16.mxu0 0
        %1354 = vmatmul.mubr.bf16.gmra.mxu0 %v1136
        %v1355 = vpop.f32.mrf.mxu0
        %v1356 = vadd.f32 %v1066, %v1355
        %v1357 = vpop.f32.mrf.mxu0
        %v1358 = vadd.f32 %v1066, %v1357
        %v1359 = vpop.f32.mrf.mxu0
        %v1360 = vadd.f32 %v1071, %v1359
        %v1361 = vpop.f32.mrf.mxu0
        %v1362 = vadd.f32 %v1071, %v1361
        %1363 = vdwg.mxu0
        %v1364 = vadd.f32 %v1173, %v1177
        %v1365 = vadd.f32 %v1364, %v1183
        %v1366 = vadd.f32 %v1365, %v1187
        %v1367 = vadd.f32 %v1366, %v1193
        %v1368 = vadd.f32 %v1367, %v1197
        %v1369 = vadd.f32 %v1368, %v1203
        %v1370 = vadd.f32 %v1369, %v1207
        %v1371 = vadd.f32 %v1370, %v1213
        %v1372 = vadd.f32 %v1371, %v1217
        %v1373 = vadd.f32 %v1372, %v1223
        %v1374 = vadd.f32 %v1373, %v1227
        %v1375 = vadd.f32 %v1374, %v1233
        %v1376 = vadd.f32 %v1375, %v1237
        %v1377 = vadd.f32 %v1376, %v1243
        %v1378 = vadd.f32 %v1377, %v1247
        %v1379 = vrot.slane %v1378, 4
        %v1380 = vadd.f32 %v1378, %v1379
        %v1381 = vrot.slane %v1380, 2
        %v1382 = vadd.f32 %v1380, %v1381
        %v1383 = vrot.slane %v1382, 1
        %v1384 = vadd.f32 %v1382, %v1383
        %v1385 = vadd.f32 %v1175, %v1179
        %v1386 = vadd.f32 %v1385, %v1185
        %v1387 = vadd.f32 %v1386, %v1189
        %v1388 = vadd.f32 %v1387, %v1195
        %v1389 = vadd.f32 %v1388, %v1199
        %v1390 = vadd.f32 %v1389, %v1205
        %v1391 = vadd.f32 %v1390, %v1209
        %v1392 = vadd.f32 %v1391, %v1215
        %v1393 = vadd.f32 %v1392, %v1219
        %v1394 = vadd.f32 %v1393, %v1225
        %v1395 = vadd.f32 %v1394, %v1229
        %v1396 = vadd.f32 %v1395, %v1235
        %v1397 = vadd.f32 %v1396, %v1239
        %v1398 = vadd.f32 %v1397, %v1245
        %v1399 = vadd.f32 %v1398, %v1249
        %v1400 = vrot.slane %v1399, 4
        %v1401 = vadd.f32 %v1399, %v1400
        %v1402 = vrot.slane %v1401, 2
        %v1403 = vadd.f32 %v1401, %v1402
        %v1404 = vrot.slane %v1403, 1
        %v1405 = vadd.f32 %v1403, %v1404
        %v1406 = vadd.f32 %v1286, %v1290
        %v1407 = vadd.f32 %v1406, %v1296
        %v1408 = vadd.f32 %v1407, %v1300
        %v1409 = vadd.f32 %v1408, %v1306
        %v1410 = vadd.f32 %v1409, %v1310
        %v1411 = vadd.f32 %v1410, %v1316
        %v1412 = vadd.f32 %v1411, %v1320
        %v1413 = vadd.f32 %v1412, %v1326
        %v1414 = vadd.f32 %v1413, %v1330
        %v1415 = vadd.f32 %v1414, %v1336
        %v1416 = vadd.f32 %v1415, %v1340
        %v1417 = vadd.f32 %v1416, %v1346
        %v1418 = vadd.f32 %v1417, %v1350
        %v1419 = vadd.f32 %v1418, %v1356
        %v1420 = vadd.f32 %v1419, %v1360
        %v1421 = vrot.slane %v1420, 4
        %v1422 = vadd.f32 %v1420, %v1421
        %v1423 = vrot.slane %v1422, 2
        %v1424 = vadd.f32 %v1422, %v1423
        %v1425 = vrot.slane %v1424, 1
        %v1426 = vadd.f32 %v1424, %v1425
        %v1427 = vadd.f32 %v1288, %v1292
        %v1428 = vadd.f32 %v1427, %v1298
        %v1429 = vadd.f32 %v1428, %v1302
        %v1430 = vadd.f32 %v1429, %v1308
        %v1431 = vadd.f32 %v1430, %v1312
        %v1432 = vadd.f32 %v1431, %v1318
        %v1433 = vadd.f32 %v1432, %v1322
        %v1434 = vadd.f32 %v1433, %v1328
        %v1435 = vadd.f32 %v1434, %v1332
        %v1436 = vadd.f32 %v1435, %v1338
        %v1437 = vadd.f32 %v1436, %v1342
        %v1438 = vadd.f32 %v1437, %v1348
        %v1439 = vadd.f32 %v1438, %v1352
        %v1440 = vadd.f32 %v1439, %v1358
        %v1441 = vadd.f32 %v1440, %v1362
        %v1442 = vrot.slane %v1441, 4
        %v1443 = vadd.f32 %v1441, %v1442
        %v1444 = vrot.slane %v1443, 2
        %v1445 = vadd.f32 %v1443, %v1444
        %v1446 = vrot.slane %v1445, 1
        %v1447 = vadd.f32 %v1445, %v1446
        %v1448 = vrcp.pop 128.0
        %v1449 = vmul.f32 %v1384, %v1448
        %v1450 = vmul.f32 %v1405, %v1448
        %v1451 = vmul.f32 %v1426, %v1448
        %v1452 = vmul.f32 %v1447, %v1448
        %v1453 = vsub.f32 %v1173, %v1449
        %v1454 = vsub.f32 %v1175, %v1450
        %v1455 = vsub.f32 %v1286, %v1451
        %v1456 = vsub.f32 %v1288, %v1452
        %v1457 = vsub.f32 %v1177, %v1449
        %v1458 = vsub.f32 %v1179, %v1450
        %v1459 = vsub.f32 %v1290, %v1451
        %v1460 = vsub.f32 %v1292, %v1452
        %v1461 = vsub.f32 %v1183, %v1449
        %v1462 = vsub.f32 %v1185, %v1450
        %v1463 = vsub.f32 %v1296, %v1451
        %v1464 = vsub.f32 %v1298, %v1452
        %v1465 = vsub.f32 %v1187, %v1449
        %v1466 = vsub.f32 %v1189, %v1450
        %v1467 = vsub.f32 %v1300, %v1451
        %v1468 = vsub.f32 %v1302, %v1452
        %v1469 = vsub.f32 %v1193, %v1449
        %v1470 = vsub.f32 %v1195, %v1450
        %v1471 = vsub.f32 %v1306, %v1451
        %v1472 = vsub.f32 %v1308, %v1452
        %v1473 = vsub.f32 %v1197, %v1449
        %v1474 = vsub.f32 %v1199, %v1450
        %v1475 = vsub.f32 %v1310, %v1451
        %v1476 = vsub.f32 %v1312, %v1452
        %v1477 = vsub.f32 %v1203, %v1449
        %v1478 = vsub.f32 %v1205, %v1450
        %v1479 = vsub.f32 %v1316, %v1451
        %v1480 = vsub.f32 %v1318, %v1452
        %v1481 = vsub.f32 %v1207, %v1449
        %v1482 = vsub.f32 %v1209, %v1450
        %v1483 = vsub.f32 %v1320, %v1451
        %v1484 = vsub.f32 %v1322, %v1452
        %v1485 = vsub.f32 %v1213, %v1449
        %v1486 = vsub.f32 %v1215, %v1450
        %v1487 = vsub.f32 %v1326, %v1451
        %v1488 = vsub.f32 %v1328, %v1452
        %v1489 = vsub.f32 %v1217, %v1449
        %v1490 = vsub.f32 %v1219, %v1450
        %v1491 = vsub.f32 %v1330, %v1451
        %v1492 = vsub.f32 %v1332, %v1452
        %v1493 = vsub.f32 %v1223, %v1449
        %v1494 = vsub.f32 %v1225, %v1450
        %v1495 = vsub.f32 %v1336, %v1451
        %v1496 = vsub.f32 %v1338, %v1452
        %v1497 = vsub.f32 %v1227, %v1449
        %v1498 = vsub.f32 %v1229, %v1450
        %v1499 = vsub.f32 %v1340, %v1451
        %v1500 = vsub.f32 %v1342, %v1452
        %v1501 = vsub.f32 %v1233, %v1449
        %v1502 = vsub.f32 %v1235, %v1450
        %v1503 = vsub.f32 %v1346, %v1451
        %v1504 = vsub.f32 %v1348, %v1452
        %v1505 = vsub.f32 %v1237, %v1449
        %v1506 = vsub.f32 %v1239, %v1450
        %v1507 = vsub.f32 %v1350, %v1451
        %v1508 = vsub.f32 %v1352, %v1452
        %v1509 = vsub.f32 %v1243, %v1449
        %v1510 = vsub.f32 %v1245, %v1450
        %v1511 = vsub.f32 %v1356, %v1451
        %v1512 = vsub.f32 %v1358, %v1452
        %v1513 = vsub.f32 %v1247, %v1449
        %v1514 = vsub.f32 %v1249, %v1450
        %v1515 = vsub.f32 %v1360, %v1451
        %v1516 = vsub.f32 %v1362, %v1452
        %v1517 = vmul.f32 %v1453, %v1453
        %v1518 = vmul.f32 %v1454, %v1454
        %v1519 = vmul.f32 %v1455, %v1455
        %v1520 = vmul.f32 %v1456, %v1456
        %v1521 = vmul.f32 %v1457, %v1457
        %v1522 = vmul.f32 %v1458, %v1458
        %v1523 = vmul.f32 %v1459, %v1459
        %v1524 = vmul.f32 %v1460, %v1460
        %v1525 = vmul.f32 %v1461, %v1461
        %v1526 = vmul.f32 %v1462, %v1462
        %v1527 = vmul.f32 %v1463, %v1463
        %v1528 = vmul.f32 %v1464, %v1464
        %v1529 = vmul.f32 %v1465, %v1465
        %v1530 = vmul.f32 %v1466, %v1466
        %v1531 = vmul.f32 %v1467, %v1467
        %v1532 = vmul.f32 %v1468, %v1468
        %v1533 = vmul.f32 %v1469, %v1469
        %v1534 = vmul.f32 %v1470, %v1470
        %v1535 = vmul.f32 %v1471, %v1471
        %v1536 = vmul.f32 %v1472, %v1472
        %v1537 = vmul.f32 %v1473, %v1473
        %v1538 = vmul.f32 %v1474, %v1474
        %v1539 = vmul.f32 %v1475, %v1475
        %v1540 = vmul.f32 %v1476, %v1476
        %v1541 = vmul.f32 %v1477, %v1477
        %v1542 = vmul.f32 %v1478, %v1478
        %v1543 = vmul.f32 %v1479, %v1479
        %v1544 = vmul.f32 %v1480, %v1480
        %v1545 = vmul.f32 %v1481, %v1481
        %v1546 = vmul.f32 %v1482, %v1482
        %v1547 = vmul.f32 %v1483, %v1483
        %v1548 = vmul.f32 %v1484, %v1484
        %v1549 = vmul.f32 %v1485, %v1485
        %v1550 = vmul.f32 %v1486, %v1486
        %v1551 = vmul.f32 %v1487, %v1487
        %v1552 = vmul.f32 %v1488, %v1488
        %v1553 = vmul.f32 %v1489, %v1489
        %v1554 = vmul.f32 %v1490, %v1490
        %v1555 = vmul.f32 %v1491, %v1491
        %v1556 = vmul.f32 %v1492, %v1492
        %v1557 = vmul.f32 %v1493, %v1493
        %v1558 = vmul.f32 %v1494, %v1494
        %v1559 = vmul.f32 %v1495, %v1495
        %v1560 = vmul.f32 %v1496, %v1496
        %v1561 = vmul.f32 %v1497, %v1497
        %v1562 = vmul.f32 %v1498, %v1498
        %v1563 = vmul.f32 %v1499, %v1499
        %v1564 = vmul.f32 %v1500, %v1500
        %v1565 = vmul.f32 %v1501, %v1501
        %v1566 = vmul.f32 %v1502, %v1502
        %v1567 = vmul.f32 %v1503, %v1503
        %v1568 = vmul.f32 %v1504, %v1504
        %v1569 = vmul.f32 %v1505, %v1505
        %v1570 = vmul.f32 %v1506, %v1506
        %v1571 = vmul.f32 %v1507, %v1507
        %v1572 = vmul.f32 %v1508, %v1508
        %v1573 = vmul.f32 %v1509, %v1509
        %v1574 = vmul.f32 %v1510, %v1510
        %v1575 = vmul.f32 %v1511, %v1511
        %v1576 = vmul.f32 %v1512, %v1512
        %v1577 = vmul.f32 %v1513, %v1513
        %v1578 = vmul.f32 %v1514, %v1514
        %v1579 = vmul.f32 %v1515, %v1515
        %v1580 = vmul.f32 %v1516, %v1516
        %v1581 = vadd.f32 %v1517, %v1521
        %v1582 = vadd.f32 %v1581, %v1525
        %v1583 = vadd.f32 %v1582, %v1529
        %v1584 = vadd.f32 %v1583, %v1533
        %v1585 = vadd.f32 %v1584, %v1537
        %v1586 = vadd.f32 %v1585, %v1541
        %v1587 = vadd.f32 %v1586, %v1545
        %v1588 = vadd.f32 %v1587, %v1549
        %v1589 = vadd.f32 %v1588, %v1553
        %v1590 = vadd.f32 %v1589, %v1557
        %v1591 = vadd.f32 %v1590, %v1561
        %v1592 = vadd.f32 %v1591, %v1565
        %v1593 = vadd.f32 %v1592, %v1569
        %v1594 = vadd.f32 %v1593, %v1573
        %v1595 = vadd.f32 %v1594, %v1577
        %v1596 = vrot.slane %v1595, 4
        %v1597 = vadd.f32 %v1595, %v1596
        %v1598 = vrot.slane %v1597, 2
        %v1599 = vadd.f32 %v1597, %v1598
        %v1600 = vrot.slane %v1599, 1
        %v1601 = vadd.f32 %v1599, %v1600
        %v1602 = vadd.f32 %v1518, %v1522
        %v1603 = vadd.f32 %v1602, %v1526
        %v1604 = vadd.f32 %v1603, %v1530
        %v1605 = vadd.f32 %v1604, %v1534
        %v1606 = vadd.f32 %v1605, %v1538
        %v1607 = vadd.f32 %v1606, %v1542
        %v1608 = vadd.f32 %v1607, %v1546
        %v1609 = vadd.f32 %v1608, %v1550
        %v1610 = vadd.f32 %v1609, %v1554
        %v1611 = vadd.f32 %v1610, %v1558
        %v1612 = vadd.f32 %v1611, %v1562
        %v1613 = vadd.f32 %v1612, %v1566
        %v1614 = vadd.f32 %v1613, %v1570
        %v1615 = vadd.f32 %v1614, %v1574
        %v1616 = vadd.f32 %v1615, %v1578
        %v1617 = vrot.slane %v1616, 4
        %v1618 = vadd.f32 %v1616, %v1617
        %v1619 = vrot.slane %v1618, 2
        %v1620 = vadd.f32 %v1618, %v1619
        %v1621 = vrot.slane %v1620, 1
        %v1622 = vadd.f32 %v1620, %v1621
        %v1623 = vadd.f32 %v1519, %v1523
        %v1624 = vadd.f32 %v1623, %v1527
        %v1625 = vadd.f32 %v1624, %v1531
        %v1626 = vadd.f32 %v1625, %v1535
        %v1627 = vadd.f32 %v1626, %v1539
        %v1628 = vadd.f32 %v1627, %v1543
        %v1629 = vadd.f32 %v1628, %v1547
        %v1630 = vadd.f32 %v1629, %v1551
        %v1631 = vadd.f32 %v1630, %v1555
        %v1632 = vadd.f32 %v1631, %v1559
        %v1633 = vadd.f32 %v1632, %v1563
        %v1634 = vadd.f32 %v1633, %v1567
        %v1635 = vadd.f32 %v1634, %v1571
        %v1636 = vadd.f32 %v1635, %v1575
        %v1637 = vadd.f32 %v1636, %v1579
        %v1638 = vrot.slane %v1637, 4
        %v1639 = vadd.f32 %v1637, %v1638
        %v1640 = vrot.slane %v1639, 2
        %v1641 = vadd.f32 %v1639, %v1640
        %v1642 = vrot.slane %v1641, 1
        %v1643 = vadd.f32 %v1641, %v1642
        %v1644 = vadd.f32 %v1520, %v1524
        %v1645 = vadd.f32 %v1644, %v1528
        %v1646 = vadd.f32 %v1645, %v1532
        %v1647 = vadd.f32 %v1646, %v1536
        %v1648 = vadd.f32 %v1647, %v1540
        %v1649 = vadd.f32 %v1648, %v1544
        %v1650 = vadd.f32 %v1649, %v1548
        %v1651 = vadd.f32 %v1650, %v1552
        %v1652 = vadd.f32 %v1651, %v1556
        %v1653 = vadd.f32 %v1652, %v1560
        %v1654 = vadd.f32 %v1653, %v1564
        %v1655 = vadd.f32 %v1654, %v1568
        %v1656 = vadd.f32 %v1655, %v1572
        %v1657 = vadd.f32 %v1656, %v1576
        %v1658 = vadd.f32 %v1657, %v1580
        %v1659 = vrot.slane %v1658, 4
        %v1660 = vadd.f32 %v1658, %v1659
        %v1661 = vrot.slane %v1660, 2
        %v1662 = vadd.f32 %v1660, %v1661
        %v1663 = vrot.slane %v1662, 1
        %v1664 = vadd.f32 %v1662, %v1663
        %v1665 = vrcp.pop 127.0
        %v1666 = vmul.f32 %v1601, %v1665
        %v1667 = vmul.f32 %v1622, %v1665
        %v1668 = vmul.f32 %v1643, %v1665
        %v1669 = vmul.f32 %v1664, %v1665
        %v1670 = vrsqrt.pop %v1666
        %v1671 = vmul.f32 %v1666, %v1670
        %vm1672 = vcmp.eq.f32.partialorder %v1666, inf
        %v1673 = vsel %vm1672, %v1666, %v1671
        %vm1674 = vcmp.eq.f32.partialorder %v1666, 0.0
        %v1675 = vand.u32 %v1666, 2147483648
        %v1676 = vsel %vm1674, %v1675, %v1673
        %v1677 = vrsqrt.pop %v1667
        %v1678 = vmul.f32 %v1667, %v1677
        %vm1679 = vcmp.eq.f32.partialorder %v1667, inf
        %v1680 = vsel %vm1679, %v1667, %v1678
        %vm1681 = vcmp.eq.f32.partialorder %v1667, 0.0
        %v1682 = vand.u32 %v1667, 2147483648
        %v1683 = vsel %vm1681, %v1682, %v1680
        %v1684 = vrsqrt.pop %v1668
        %v1685 = vmul.f32 %v1668, %v1684
        %vm1686 = vcmp.eq.f32.partialorder %v1668, inf
        %v1687 = vsel %vm1686, %v1668, %v1685
        %vm1688 = vcmp.eq.f32.partialorder %v1668, 0.0
        %v1689 = vand.u32 %v1668, 2147483648
        %v1690 = vsel %vm1688, %v1689, %v1687
        %v1691 = vrsqrt.pop %v1669
        %v1692 = vmul.f32 %v1669, %v1691
        %vm1693 = vcmp.eq.f32.partialorder %v1669, inf
        %v1694 = vsel %vm1693, %v1669, %v1692
        %vm1695 = vcmp.eq.f32.partialorder %v1669, 0.0
        %v1696 = vand.u32 %v1669, 2147483648
        %v1697 = vsel %vm1695, %v1696, %v1694
        %v1698 = vadd.f32 %v1676, 1e-05
        %v1699 = vadd.f32 %v1683, 1e-05
        %v1700 = vadd.f32 %v1690, 1e-05
        %v1701 = vadd.f32 %v1697, 1e-05
        %v1702 = vrcp.pop %v1698
        %v1703 = vrcp.pop %v1699
        %v1704 = vrcp.pop %v1700
        %v1705 = vrcp.pop %v1701
        %v1706 = vmul.f32 %v1698, %v1702
        %v1707 = vmul.f32 %v1699, %v1703
        %v1708 = vmul.f32 %v1700, %v1704
        %v1709 = vmul.f32 %v1701, %v1705
        %v1710 = vsub.f32 2.0, %v1706
        %v1711 = vsub.f32 2.0, %v1707
        %v1712 = vsub.f32 2.0, %v1708
        %v1713 = vsub.f32 2.0, %v1709
        %v1714 = vmul.f32 %v1702, %v1710
        %v1715 = vmul.f32 %v1703, %v1711
        %v1716 = vmul.f32 %v1704, %v1712
        %v1717 = vmul.f32 %v1705, %v1713
        %v1718 = vld [vmem:[%s7] sm:$0xff]
        %v1719 = vld [vmem:[%s7 + $0x8] sm:$0xff]
        %v1720 = vld [vmem:[%s7 + $0x10] sm:$0xff]
        %v1721 = vld [vmem:[%s7 + $0x18] sm:$0xff]
        %v1722 = vld [vmem:[%s7 + $0x40] sm:$0xff]
        %v1723 = vld [vmem:[%s7 + $0x48] sm:$0xff]
        %v1724 = vld [vmem:[%s7 + $0x50] sm:$0xff]
        %v1725 = vld [vmem:[%s7 + $0x58] sm:$0xff]
        %v1726 = vld [vmem:[%s7 + $0x60] sm:$0xff]
        %v1727 = vld [vmem:[%s7 + $0x68] sm:$0xff]
        %v1728 = vld [vmem:[%s7 + $0x70] sm:$0xff]
        %v1729 = vld [vmem:[%s7 + $0x78] sm:$0xff]
        %v1730 = vld [vmem:[%s8] sm:$0xff]
        %v1731 = vld [vmem:[%s8 + $0x8] sm:$0xff]
        %v1732 = vld [vmem:[%s8 + $0x10] sm:$0xff]
        %v1733 = vld [vmem:[%s8 + $0x18] sm:$0xff]
        %v1734 = vld [vmem:[%s8 + $0x40] sm:$0xff]
        %v1735 = vld [vmem:[%s8 + $0x48] sm:$0xff]
        %v1736 = vld [vmem:[%s8 + $0x50] sm:$0xff]
        %v1737 = vld [vmem:[%s8 + $0x58] sm:$0xff]
        %v1738 = vld [vmem:[%s8 + $0x60] sm:$0xff]
        %v1739 = vld [vmem:[%s8 + $0x68] sm:$0xff]
        %v1740 = vld [vmem:[%s8 + $0x70] sm:$0xff]
        %v1741 = vld [vmem:[%s8 + $0x78] sm:$0xff]
        %v1742 = vmul.f32 %v1453, %v1714
        %v1743 = vmul.f32 %v1454, %v1715
        %v1744 = vmul.f32 %v1455, %v1716
        %v1745 = vmul.f32 %v1456, %v1717
        %v1746 = vmul.f32 %v1457, %v1714
        %v1747 = vmul.f32 %v1458, %v1715
        %v1748 = vmul.f32 %v1459, %v1716
        %v1749 = vmul.f32 %v1460, %v1717
        %v1750 = vmul.f32 %v1461, %v1714
        %v1751 = vmul.f32 %v1462, %v1715
        %v1752 = vmul.f32 %v1463, %v1716
        %v1753 = vmul.f32 %v1464, %v1717
        %v1754 = vmul.f32 %v1465, %v1714
        %v1755 = vmul.f32 %v1466, %v1715
        %v1756 = vmul.f32 %v1467, %v1716
        %v1757 = vmul.f32 %v1468, %v1717
        %1759 = vset.pattern.permute.xlu0 0
        %1760 = vperm.xlu0 %1759, %v1718
        %v1761 = vpop.permute.xlu0 %1760
        %1764 = vset.pattern.permute.xlu0 0
        %1765 = vperm.xlu0 %1764, %v1719
        %v1766 = vpop.permute.xlu0 %1765
        %1769 = vset.pattern.permute.xlu0 0
        %1770 = vperm.xlu0 %1769, %v1720
        %v1771 = vpop.permute.xlu0 %1770
        %1774 = vset.pattern.permute.xlu0 0
        %1775 = vperm.xlu0 %1774, %v1721
        %v1776 = vpop.permute.xlu0 %1775
        %v1778 = vmul.f32 %v1742, %v1761
        %v1779 = vmul.f32 %v1743, %v1761
        %v1780 = vmul.f32 %v1744, %v1761
        %v1781 = vmul.f32 %v1745, %v1761
        %v1782 = vmul.f32 %v1746, %v1766
        %v1783 = vmul.f32 %v1747, %v1766
        %v1784 = vmul.f32 %v1748, %v1766
        %v1785 = vmul.f32 %v1749, %v1766
        %v1786 = vmul.f32 %v1750, %v1771
        %v1787 = vmul.f32 %v1751, %v1771
        %v1788 = vmul.f32 %v1752, %v1771
        %v1789 = vmul.f32 %v1753, %v1771
        %v1790 = vmul.f32 %v1754, %v1776
        %v1791 = vmul.f32 %v1755, %v1776
        %v1792 = vmul.f32 %v1756, %v1776
        %v1793 = vmul.f32 %v1757, %v1776
        %1795 = vset.pattern.permute.xlu0 0
        %1796 = vperm.xlu0 %1795, %v1730
        %v1797 = vpop.permute.xlu0 %1796
        %1800 = vset.pattern.permute.xlu0 0
        %1801 = vperm.xlu0 %1800, %v1731
        %v1802 = vpop.permute.xlu0 %1801
        %1805 = vset.pattern.permute.xlu0 0
        %1806 = vperm.xlu0 %1805, %v1732
        %v1807 = vpop.permute.xlu0 %1806
        %1810 = vset.pattern.permute.xlu0 0
        %1811 = vperm.xlu0 %1810, %v1733
        %v1812 = vpop.permute.xlu0 %1811
        %v1814 = vadd.f32 %v1778, %v1797
        %v1815 = vadd.f32 %v1779, %v1797
        %v1816 = vadd.f32 %v1780, %v1797
        %v1817 = vadd.f32 %v1781, %v1797
        %v1818 = vadd.f32 %v1782, %v1802
        %v1819 = vadd.f32 %v1783, %v1802
        %v1820 = vadd.f32 %v1784, %v1802
        %v1821 = vadd.f32 %v1785, %v1802
        %v1822 = vadd.f32 %v1786, %v1807
        %v1823 = vadd.f32 %v1787, %v1807
        %v1824 = vadd.f32 %v1788, %v1807
        %v1825 = vadd.f32 %v1789, %v1807
        %v1826 = vadd.f32 %v1790, %v1812
        %v1827 = vadd.f32 %v1791, %v1812
        %v1828 = vadd.f32 %v1792, %v1812
        %v1829 = vadd.f32 %v1793, %v1812
        %v1830 = vxor.u32 %v1814, 2147483648
        %v1831 = vxor.u32 %v1815, 2147483648
        %v1832 = vxor.u32 %v1816, 2147483648
        %v1833 = vxor.u32 %v1817, 2147483648
        %v1834 = vxor.u32 %v1818, 2147483648
        %v1835 = vxor.u32 %v1819, 2147483648
        %v1836 = vxor.u32 %v1820, 2147483648
        %v1837 = vxor.u32 %v1821, 2147483648
        %v1838 = vxor.u32 %v1822, 2147483648
        %v1839 = vxor.u32 %v1823, 2147483648
        %v1840 = vxor.u32 %v1824, 2147483648
        %v1841 = vxor.u32 %v1825, 2147483648
        %v1842 = vxor.u32 %v1826, 2147483648
        %v1843 = vxor.u32 %v1827, 2147483648
        %v1844 = vxor.u32 %v1828, 2147483648
        %v1845 = vxor.u32 %v1829, 2147483648
        %v1846 = vmul.f32 %v1830, 1.442695
        %v1847 = vpow.pop %v1846
        %v1848 = vmul.f32 %v1831, 1.442695
        %v1849 = vpow.pop %v1848
        %v1850 = vmul.f32 %v1832, 1.442695
        %v1851 = vpow.pop %v1850
        %v1852 = vmul.f32 %v1833, 1.442695
        %v1853 = vpow.pop %v1852
        %v1854 = vmul.f32 %v1834, 1.442695
        %v1855 = vpow.pop %v1854
        %v1856 = vmul.f32 %v1835, 1.442695
        %v1857 = vpow.pop %v1856
        %v1858 = vmul.f32 %v1836, 1.442695
        %v1859 = vpow.pop %v1858
        %v1860 = vmul.f32 %v1837, 1.442695
        %v1861 = vpow.pop %v1860
        %v1862 = vmul.f32 %v1838, 1.442695
        %v1863 = vpow.pop %v1862
        %v1864 = vmul.f32 %v1839, 1.442695
        %v1865 = vpow.pop %v1864
        %v1866 = vmul.f32 %v1840, 1.442695
        %v1867 = vpow.pop %v1866
        %v1868 = vmul.f32 %v1841, 1.442695
        %v1869 = vpow.pop %v1868
        %v1870 = vmul.f32 %v1842, 1.442695
        %v1871 = vpow.pop %v1870
        %v1872 = vmul.f32 %v1843, 1.442695
        %v1873 = vpow.pop %v1872
        %v1874 = vmul.f32 %v1844, 1.442695
        %v1875 = vpow.pop %v1874
        %v1876 = vmul.f32 %v1845, 1.442695
        %v1877 = vpow.pop %v1876
        %v1878 = vadd.f32 %v1847, 1.0
        %v1879 = vadd.f32 %v1849, 1.0
        %v1880 = vadd.f32 %v1851, 1.0
        %v1881 = vadd.f32 %v1853, 1.0
        %v1882 = vadd.f32 %v1855, 1.0
        %v1883 = vadd.f32 %v1857, 1.0
        %v1884 = vadd.f32 %v1859, 1.0
        %v1885 = vadd.f32 %v1861, 1.0
        %v1886 = vadd.f32 %v1863, 1.0
        %v1887 = vadd.f32 %v1865, 1.0
        %v1888 = vadd.f32 %v1867, 1.0
        %v1889 = vadd.f32 %v1869, 1.0
        %v1890 = vadd.f32 %v1871, 1.0
        %v1891 = vadd.f32 %v1873, 1.0
        %v1892 = vadd.f32 %v1875, 1.0
        %v1893 = vadd.f32 %v1877, 1.0
        %v1894 = vrcp.pop %v1878
        %v1895 = vmul.f32 1.0, %v1894
        %v1896 = vrcp.pop %v1879
        %v1897 = vmul.f32 1.0, %v1896
        %v1898 = vrcp.pop %v1880
        %v1899 = vmul.f32 1.0, %v1898
        %v1900 = vrcp.pop %v1881
        %v1901 = vmul.f32 1.0, %v1900
        %v1902 = vrcp.pop %v1882
        %v1903 = vmul.f32 1.0, %v1902
        %v1904 = vrcp.pop %v1883
        %v1905 = vmul.f32 1.0, %v1904
        %v1906 = vrcp.pop %v1884
        %v1907 = vmul.f32 1.0, %v1906
        %v1908 = vrcp.pop %v1885
        %v1909 = vmul.f32 1.0, %v1908
        %v1910 = vrcp.pop %v1886
        %v1911 = vmul.f32 1.0, %v1910
        %v1912 = vrcp.pop %v1887
        %v1913 = vmul.f32 1.0, %v1912
        %v1914 = vrcp.pop %v1888
        %v1915 = vmul.f32 1.0, %v1914
        %v1916 = vrcp.pop %v1889
        %v1917 = vmul.f32 1.0, %v1916
        %v1918 = vrcp.pop %v1890
        %v1919 = vmul.f32 1.0, %v1918
        %v1920 = vrcp.pop %v1891
        %v1921 = vmul.f32 1.0, %v1920
        %v1922 = vrcp.pop %v1892
        %v1923 = vmul.f32 1.0, %v1922
        %v1924 = vrcp.pop %v1893
        %v1925 = vmul.f32 1.0, %v1924
        %v1926 = vmul.f32 %v1485, %v1714
        %v1927 = vmul.f32 %v1486, %v1715
        %v1928 = vmul.f32 %v1487, %v1716
        %v1929 = vmul.f32 %v1488, %v1717
        %v1930 = vmul.f32 %v1489, %v1714
        %v1931 = vmul.f32 %v1490, %v1715
        %v1932 = vmul.f32 %v1491, %v1716
        %v1933 = vmul.f32 %v1492, %v1717
        %v1934 = vmul.f32 %v1493, %v1714
        %v1935 = vmul.f32 %v1494, %v1715
        %v1936 = vmul.f32 %v1495, %v1716
        %v1937 = vmul.f32 %v1496, %v1717
        %v1938 = vmul.f32 %v1497, %v1714
        %v1939 = vmul.f32 %v1498, %v1715
        %v1940 = vmul.f32 %v1499, %v1716
        %v1941 = vmul.f32 %v1500, %v1717
        %1943 = vset.pattern.permute.xlu0 0
        %1944 = vperm.xlu0 %1943, %v1722
        %v1945 = vpop.permute.xlu0 %1944
        %1948 = vset.pattern.permute.xlu0 0
        %1949 = vperm.xlu0 %1948, %v1723
        %v1950 = vpop.permute.xlu0 %1949
        %1953 = vset.pattern.permute.xlu0 0
        %1954 = vperm.xlu0 %1953, %v1724
        %v1955 = vpop.permute.xlu0 %1954
        %1958 = vset.pattern.permute.xlu0 0
        %1959 = vperm.xlu0 %1958, %v1725
        %v1960 = vpop.permute.xlu0 %1959
        %v1962 = vmul.f32 %v1926, %v1945
        %v1963 = vmul.f32 %v1927, %v1945
        %v1964 = vmul.f32 %v1928, %v1945
        %v1965 = vmul.f32 %v1929, %v1945
        %v1966 = vmul.f32 %v1930, %v1950
        %v1967 = vmul.f32 %v1931, %v1950
        %v1968 = vmul.f32 %v1932, %v1950
        %v1969 = vmul.f32 %v1933, %v1950
        %v1970 = vmul.f32 %v1934, %v1955
        %v1971 = vmul.f32 %v1935, %v1955
        %v1972 = vmul.f32 %v1936, %v1955
        %v1973 = vmul.f32 %v1937, %v1955
        %v1974 = vmul.f32 %v1938, %v1960
        %v1975 = vmul.f32 %v1939, %v1960
        %v1976 = vmul.f32 %v1940, %v1960
        %v1977 = vmul.f32 %v1941, %v1960
        %1979 = vset.pattern.permute.xlu0 0
        %1980 = vperm.xlu0 %1979, %v1734
        %v1981 = vpop.permute.xlu0 %1980
        %1984 = vset.pattern.permute.xlu0 0
        %1985 = vperm.xlu0 %1984, %v1735
        %v1986 = vpop.permute.xlu0 %1985
        %1989 = vset.pattern.permute.xlu0 0
        %1990 = vperm.xlu0 %1989, %v1736
        %v1991 = vpop.permute.xlu0 %1990
        %1994 = vset.pattern.permute.xlu0 0
        %1995 = vperm.xlu0 %1994, %v1737
        %v1996 = vpop.permute.xlu0 %1995
        %v1998 = vadd.f32 %v1962, %v1981
        %v1999 = vadd.f32 %v1963, %v1981
        %v2000 = vadd.f32 %v1964, %v1981
        %v2001 = vadd.f32 %v1965, %v1981
        %v2002 = vadd.f32 %v1966, %v1986
        %v2003 = vadd.f32 %v1967, %v1986
        %v2004 = vadd.f32 %v1968, %v1986
        %v2005 = vadd.f32 %v1969, %v1986
        %v2006 = vadd.f32 %v1970, %v1991
        %v2007 = vadd.f32 %v1971, %v1991
        %v2008 = vadd.f32 %v1972, %v1991
        %v2009 = vadd.f32 %v1973, %v1991
        %v2010 = vadd.f32 %v1974, %v1996
        %v2011 = vadd.f32 %v1975, %v1996
        %v2012 = vadd.f32 %v1976, %v1996
        %v2013 = vadd.f32 %v1977, %v1996
        %v2014 = vxor.u32 %v1998, 2147483648
        %v2015 = vxor.u32 %v1999, 2147483648
        %v2016 = vxor.u32 %v2000, 2147483648
        %v2017 = vxor.u32 %v2001, 2147483648
        %v2018 = vxor.u32 %v2002, 2147483648
        %v2019 = vxor.u32 %v2003, 2147483648
        %v2020 = vxor.u32 %v2004, 2147483648
        %v2021 = vxor.u32 %v2005, 2147483648
        %v2022 = vxor.u32 %v2006, 2147483648
        %v2023 = vxor.u32 %v2007, 2147483648
        %v2024 = vxor.u32 %v2008, 2147483648
        %v2025 = vxor.u32 %v2009, 2147483648
        %v2026 = vxor.u32 %v2010, 2147483648
        %v2027 = vxor.u32 %v2011, 2147483648
        %v2028 = vxor.u32 %v2012, 2147483648
        %v2029 = vxor.u32 %v2013, 2147483648
        %v2030 = vmul.f32 %v2014, 1.442695
        %v2031 = vpow.pop %v2030
        %v2032 = vmul.f32 %v2015, 1.442695
        %v2033 = vpow.pop %v2032
        %v2034 = vmul.f32 %v2016, 1.442695
        %v2035 = vpow.pop %v2034
        %v2036 = vmul.f32 %v2017, 1.442695
        %v2037 = vpow.pop %v2036
        %v2038 = vmul.f32 %v2018, 1.442695
        %v2039 = vpow.pop %v2038
        %v2040 = vmul.f32 %v2019, 1.442695
        %v2041 = vpow.pop %v2040
        %v2042 = vmul.f32 %v2020, 1.442695
        %v2043 = vpow.pop %v2042
        %v2044 = vmul.f32 %v2021, 1.442695
        %v2045 = vpow.pop %v2044
        %v2046 = vmul.f32 %v2022, 1.442695
        %v2047 = vpow.pop %v2046
        %v2048 = vmul.f32 %v2023, 1.442695
        %v2049 = vpow.pop %v2048
        %v2050 = vmul.f32 %v2024, 1.442695
        %v2051 = vpow.pop %v2050
        %v2052 = vmul.f32 %v2025, 1.442695
        %v2053 = vpow.pop %v2052
        %v2054 = vmul.f32 %v2026, 1.442695
        %v2055 = vpow.pop %v2054
        %v2056 = vmul.f32 %v2027, 1.442695
        %v2057 = vpow.pop %v2056
        %v2058 = vmul.f32 %v2028, 1.442695
        %v2059 = vpow.pop %v2058
        %v2060 = vmul.f32 %v2029, 1.442695
        %v2061 = vpow.pop %v2060
        %v2062 = vadd.f32 %v2031, 1.0
        %v2063 = vadd.f32 %v2033, 1.0
        %v2064 = vadd.f32 %v2035, 1.0
        %v2065 = vadd.f32 %v2037, 1.0
        %v2066 = vadd.f32 %v2039, 1.0
        %v2067 = vadd.f32 %v2041, 1.0
        %v2068 = vadd.f32 %v2043, 1.0
        %v2069 = vadd.f32 %v2045, 1.0
        %v2070 = vadd.f32 %v2047, 1.0
        %v2071 = vadd.f32 %v2049, 1.0
        %v2072 = vadd.f32 %v2051, 1.0
        %v2073 = vadd.f32 %v2053, 1.0
        %v2074 = vadd.f32 %v2055, 1.0
        %v2075 = vadd.f32 %v2057, 1.0
        %v2076 = vadd.f32 %v2059, 1.0
        %v2077 = vadd.f32 %v2061, 1.0
        %v2078 = vrcp.pop %v2062
        %v2079 = vmul.f32 1.0, %v2078
        %v2080 = vrcp.pop %v2063
        %v2081 = vmul.f32 1.0, %v2080
        %v2082 = vrcp.pop %v2064
        %v2083 = vmul.f32 1.0, %v2082
        %v2084 = vrcp.pop %v2065
        %v2085 = vmul.f32 1.0, %v2084
        %v2086 = vrcp.pop %v2066
        %v2087 = vmul.f32 1.0, %v2086
        %v2088 = vrcp.pop %v2067
        %v2089 = vmul.f32 1.0, %v2088
        %v2090 = vrcp.pop %v2068
        %v2091 = vmul.f32 1.0, %v2090
        %v2092 = vrcp.pop %v2069
        %v2093 = vmul.f32 1.0, %v2092
        %v2094 = vrcp.pop %v2070
        %v2095 = vmul.f32 1.0, %v2094
        %v2096 = vrcp.pop %v2071
        %v2097 = vmul.f32 1.0, %v2096
        %v2098 = vrcp.pop %v2072
        %v2099 = vmul.f32 1.0, %v2098
        %v2100 = vrcp.pop %v2073
        %v2101 = vmul.f32 1.0, %v2100
        %v2102 = vrcp.pop %v2074
        %v2103 = vmul.f32 1.0, %v2102
        %v2104 = vrcp.pop %v2075
        %v2105 = vmul.f32 1.0, %v2104
        %v2106 = vrcp.pop %v2076
        %v2107 = vmul.f32 1.0, %v2106
        %v2108 = vrcp.pop %v2077
        %v2109 = vmul.f32 1.0, %v2108
        %v2110 = vmul.f32 %v1501, %v1714
        %v2111 = vmul.f32 %v1502, %v1715
        %v2112 = vmul.f32 %v1503, %v1716
        %v2113 = vmul.f32 %v1504, %v1717
        %v2114 = vmul.f32 %v1505, %v1714
        %v2115 = vmul.f32 %v1506, %v1715
        %v2116 = vmul.f32 %v1507, %v1716
        %v2117 = vmul.f32 %v1508, %v1717
        %v2118 = vmul.f32 %v1509, %v1714
        %v2119 = vmul.f32 %v1510, %v1715
        %v2120 = vmul.f32 %v1511, %v1716
        %v2121 = vmul.f32 %v1512, %v1717
        %v2122 = vmul.f32 %v1513, %v1714
        %v2123 = vmul.f32 %v1514, %v1715
        %v2124 = vmul.f32 %v1515, %v1716
        %v2125 = vmul.f32 %v1516, %v1717
        %2127 = vset.pattern.permute.xlu0 0
        %2128 = vperm.xlu0 %2127, %v1726
        %v2129 = vpop.permute.xlu0 %2128
        %2132 = vset.pattern.permute.xlu0 0
        %2133 = vperm.xlu0 %2132, %v1727
        %v2134 = vpop.permute.xlu0 %2133
        %2137 = vset.pattern.permute.xlu0 0
        %2138 = vperm.xlu0 %2137, %v1728
        %v2139 = vpop.permute.xlu0 %2138
        %2142 = vset.pattern.permute.xlu0 0
        %2143 = vperm.xlu0 %2142, %v1729
        %v2144 = vpop.permute.xlu0 %2143
        %v2146 = vmul.f32 %v2110, %v2129
        %v2147 = vmul.f32 %v2111, %v2129
        %v2148 = vmul.f32 %v2112, %v2129
        %v2149 = vmul.f32 %v2113, %v2129
        %v2150 = vmul.f32 %v2114, %v2134
        %v2151 = vmul.f32 %v2115, %v2134
        %v2152 = vmul.f32 %v2116, %v2134
        %v2153 = vmul.f32 %v2117, %v2134
        %v2154 = vmul.f32 %v2118, %v2139
        %v2155 = vmul.f32 %v2119, %v2139
        %v2156 = vmul.f32 %v2120, %v2139
        %v2157 = vmul.f32 %v2121, %v2139
        %v2158 = vmul.f32 %v2122, %v2144
        %v2159 = vmul.f32 %v2123, %v2144
        %v2160 = vmul.f32 %v2124, %v2144
        %v2161 = vmul.f32 %v2125, %v2144
        %2163 = vset.pattern.permute.xlu0 0
        %2164 = vperm.xlu0 %2163, %v1738
        %v2165 = vpop.permute.xlu0 %2164
        %2168 = vset.pattern.permute.xlu0 0
        %2169 = vperm.xlu0 %2168, %v1739
        %v2170 = vpop.permute.xlu0 %2169
        %2173 = vset.pattern.permute.xlu0 0
        %2174 = vperm.xlu0 %2173, %v1740
        %v2175 = vpop.permute.xlu0 %2174
        %2178 = vset.pattern.permute.xlu0 0
        %2179 = vperm.xlu0 %2178, %v1741
        %v2180 = vpop.permute.xlu0 %2179
        %v2182 = vadd.f32 %v2146, %v2165
        %v2183 = vadd.f32 %v2147, %v2165
        %v2184 = vadd.f32 %v2148, %v2165
        %v2185 = vadd.f32 %v2149, %v2165
        %v2186 = vadd.f32 %v2150, %v2170
        %v2187 = vadd.f32 %v2151, %v2170
        %v2188 = vadd.f32 %v2152, %v2170
        %v2189 = vadd.f32 %v2153, %v2170
        %v2190 = vadd.f32 %v2154, %v2175
        %v2191 = vadd.f32 %v2155, %v2175
        %v2192 = vadd.f32 %v2156, %v2175
        %v2193 = vadd.f32 %v2157, %v2175
        %v2194 = vadd.f32 %v2158, %v2180
        %v2195 = vadd.f32 %v2159, %v2180
        %v2196 = vadd.f32 %v2160, %v2180
        %v2197 = vadd.f32 %v2161, %v2180
        %v2198 = vtanh.pop %v2182
        %v2199 = vtanh.pop %v2183
        %v2200 = vtanh.pop %v2184
        %v2201 = vtanh.pop %v2185
        %v2202 = vtanh.pop %v2186
        %v2203 = vtanh.pop %v2187
        %v2204 = vtanh.pop %v2188
        %v2205 = vtanh.pop %v2189
        %v2206 = vtanh.pop %v2190
        %v2207 = vtanh.pop %v2191
        %v2208 = vtanh.pop %v2192
        %v2209 = vtanh.pop %v2193
        %v2210 = vtanh.pop %v2194
        %v2211 = vtanh.pop %v2195
        %v2212 = vtanh.pop %v2196
        %v2213 = vtanh.pop %v2197
        %v2214 = vmul.f32 %v1895, %v2198
        %v2215 = vmul.f32 %v1897, %v2199
        %v2216 = vmul.f32 %v1899, %v2200
        %v2217 = vmul.f32 %v1901, %v2201
        %v2218 = vmul.f32 %v1903, %v2202
        %v2219 = vmul.f32 %v1905, %v2203
        %v2220 = vmul.f32 %v1907, %v2204
        %v2221 = vmul.f32 %v1909, %v2205
        %v2222 = vmul.f32 %v1911, %v2206
        %v2223 = vmul.f32 %v1913, %v2207
        %v2224 = vmul.f32 %v1915, %v2208
        %v2225 = vmul.f32 %v1917, %v2209
        %v2226 = vmul.f32 %v1919, %v2210
        %v2227 = vmul.f32 %v1921, %v2211
        %v2228 = vmul.f32 %v1923, %v2212
        %v2229 = vmul.f32 %v1925, %v2213
        %v2230 = vld [vmem:[%s9] sm:$0xff]
        %v2231 = vld [vmem:[%s9 + $0x8] sm:$0xff]
        %v2232 = vld [vmem:[%s9 + $0x10] sm:$0xff]
        %v2233 = vld [vmem:[%s9 + $0x18] sm:$0xff]
        %v2234 = vld [vmem:[%s10] sm:$0xff]
        %v2235 = vld [vmem:[%s10 + $0x8] sm:$0xff]
        %v2236 = vld [vmem:[%s10 + $0x10] sm:$0xff]
        %v2237 = vld [vmem:[%s10 + $0x18] sm:$0xff]
        %v2238 = vadd.f32 %v2214, %v2218
        %v2239 = vadd.f32 %v2238, %v2222
        %v2240 = vadd.f32 %v2239, %v2226
        %v2241 = vrot.slane %v2240, 4
        %v2242 = vadd.f32 %v2240, %v2241
        %v2243 = vrot.slane %v2242, 2
        %v2244 = vadd.f32 %v2242, %v2243
        %v2245 = vrot.slane %v2244, 1
        %v2246 = vadd.f32 %v2244, %v2245
        %v2247 = vadd.f32 %v2215, %v2219
        %v2248 = vadd.f32 %v2247, %v2223
        %v2249 = vadd.f32 %v2248, %v2227
        %v2250 = vrot.slane %v2249, 4
        %v2251 = vadd.f32 %v2249, %v2250
        %v2252 = vrot.slane %v2251, 2
        %v2253 = vadd.f32 %v2251, %v2252
        %v2254 = vrot.slane %v2253, 1
        %v2255 = vadd.f32 %v2253, %v2254
        %v2256 = vadd.f32 %v2216, %v2220
        %v2257 = vadd.f32 %v2256, %v2224
        %v2258 = vadd.f32 %v2257, %v2228
        %v2259 = vrot.slane %v2258, 4
        %v2260 = vadd.f32 %v2258, %v2259
        %v2261 = vrot.slane %v2260, 2
        %v2262 = vadd.f32 %v2260, %v2261
        %v2263 = vrot.slane %v2262, 1
        %v2264 = vadd.f32 %v2262, %v2263
        %v2265 = vadd.f32 %v2217, %v2221
        %v2266 = vadd.f32 %v2265, %v2225
        %v2267 = vadd.f32 %v2266, %v2229
        %v2268 = vrot.slane %v2267, 4
        %v2269 = vadd.f32 %v2267, %v2268
        %v2270 = vrot.slane %v2269, 2
        %v2271 = vadd.f32 %v2269, %v2270
        %v2272 = vrot.slane %v2271, 1
        %v2273 = vadd.f32 %v2271, %v2272
        %v2274 = vmul.f32 %v2246, %v723
        %v2275 = vmul.f32 %v2255, %v723
        %v2276 = vmul.f32 %v2264, %v723
        %v2277 = vmul.f32 %v2273, %v723
        %v2278 = vsub.f32 %v2214, %v2274
        %v2279 = vsub.f32 %v2215, %v2275
        %v2280 = vsub.f32 %v2216, %v2276
        %v2281 = vsub.f32 %v2217, %v2277
        %v2282 = vsub.f32 %v2218, %v2274
        %v2283 = vsub.f32 %v2219, %v2275
        %v2284 = vsub.f32 %v2220, %v2276
        %v2285 = vsub.f32 %v2221, %v2277
        %v2286 = vsub.f32 %v2222, %v2274
        %v2287 = vsub.f32 %v2223, %v2275
        %v2288 = vsub.f32 %v2224, %v2276
        %v2289 = vsub.f32 %v2225, %v2277
        %v2290 = vsub.f32 %v2226, %v2274
        %v2291 = vsub.f32 %v2227, %v2275
        %v2292 = vsub.f32 %v2228, %v2276
        %v2293 = vsub.f32 %v2229, %v2277
        %v2294 = vmul.f32 %v2278, %v2278
        %v2295 = vmul.f32 %v2279, %v2279
        %v2296 = vmul.f32 %v2280, %v2280
        %v2297 = vmul.f32 %v2281, %v2281
        %v2298 = vmul.f32 %v2282, %v2282
        %v2299 = vmul.f32 %v2283, %v2283
        %v2300 = vmul.f32 %v2284, %v2284
        %v2301 = vmul.f32 %v2285, %v2285
        %v2302 = vmul.f32 %v2286, %v2286
        %v2303 = vmul.f32 %v2287, %v2287
        %v2304 = vmul.f32 %v2288, %v2288
        %v2305 = vmul.f32 %v2289, %v2289
        %v2306 = vmul.f32 %v2290, %v2290
        %v2307 = vmul.f32 %v2291, %v2291
        %v2308 = vmul.f32 %v2292, %v2292
        %v2309 = vmul.f32 %v2293, %v2293
        %v2310 = vadd.f32 %v2294, %v2298
        %v2311 = vadd.f32 %v2310, %v2302
        %v2312 = vadd.f32 %v2311, %v2306
        %v2313 = vrot.slane %v2312, 4
        %v2314 = vadd.f32 %v2312, %v2313
        %v2315 = vrot.slane %v2314, 2
        %v2316 = vadd.f32 %v2314, %v2315
        %v2317 = vrot.slane %v2316, 1
        %v2318 = vadd.f32 %v2316, %v2317
        %v2319 = vadd.f32 %v2295, %v2299
        %v2320 = vadd.f32 %v2319, %v2303
        %v2321 = vadd.f32 %v2320, %v2307
        %v2322 = vrot.slane %v2321, 4
        %v2323 = vadd.f32 %v2321, %v2322
        %v2324 = vrot.slane %v2323, 2
        %v2325 = vadd.f32 %v2323, %v2324
        %v2326 = vrot.slane %v2325, 1
        %v2327 = vadd.f32 %v2325, %v2326
        %v2328 = vadd.f32 %v2296, %v2300
        %v2329 = vadd.f32 %v2328, %v2304
        %v2330 = vadd.f32 %v2329, %v2308
        %v2331 = vrot.slane %v2330, 4
        %v2332 = vadd.f32 %v2330, %v2331
        %v2333 = vrot.slane %v2332, 2
        %v2334 = vadd.f32 %v2332, %v2333
        %v2335 = vrot.slane %v2334, 1
        %v2336 = vadd.f32 %v2334, %v2335
        %v2337 = vadd.f32 %v2297, %v2301
        %v2338 = vadd.f32 %v2337, %v2305
        %v2339 = vadd.f32 %v2338, %v2309
        %v2340 = vrot.slane %v2339, 4
        %v2341 = vadd.f32 %v2339, %v2340
        %v2342 = vrot.slane %v2341, 2
        %v2343 = vadd.f32 %v2341, %v2342
        %v2344 = vrot.slane %v2343, 1
        %v2345 = vadd.f32 %v2343, %v2344
        %v2346 = vmul.f32 %v2318, %v796
        %v2347 = vmul.f32 %v2327, %v796
        %v2348 = vmul.f32 %v2336, %v796
        %v2349 = vmul.f32 %v2345, %v796
        %v2350 = vrsqrt.pop %v2346
        %v2351 = vmul.f32 %v2346, %v2350
        %vm2352 = vcmp.eq.f32.partialorder %v2346, inf
        %v2353 = vsel %vm2352, %v2346, %v2351
        %vm2354 = vcmp.eq.f32.partialorder %v2346, 0.0
        %v2355 = vand.u32 %v2346, 2147483648
        %v2356 = vsel %vm2354, %v2355, %v2353
        %v2357 = vrsqrt.pop %v2347
        %v2358 = vmul.f32 %v2347, %v2357
        %vm2359 = vcmp.eq.f32.partialorder %v2347, inf
        %v2360 = vsel %vm2359, %v2347, %v2358
        %vm2361 = vcmp.eq.f32.partialorder %v2347, 0.0
        %v2362 = vand.u32 %v2347, 2147483648
        %v2363 = vsel %vm2361, %v2362, %v2360
        %v2364 = vrsqrt.pop %v2348
        %v2365 = vmul.f32 %v2348, %v2364
        %vm2366 = vcmp.eq.f32.partialorder %v2348, inf
        %v2367 = vsel %vm2366, %v2348, %v2365
        %vm2368 = vcmp.eq.f32.partialorder %v2348, 0.0
        %v2369 = vand.u32 %v2348, 2147483648
        %v2370 = vsel %vm2368, %v2369, %v2367
        %v2371 = vrsqrt.pop %v2349
        %v2372 = vmul.f32 %v2349, %v2371
        %vm2373 = vcmp.eq.f32.partialorder %v2349, inf
        %v2374 = vsel %vm2373, %v2349, %v2372
        %vm2375 = vcmp.eq.f32.partialorder %v2349, 0.0
        %v2376 = vand.u32 %v2349, 2147483648
        %v2377 = vsel %vm2375, %v2376, %v2374
        %v2378 = vadd.f32 %v2356, 1e-05
        %v2379 = vadd.f32 %v2363, 1e-05
        %v2380 = vadd.f32 %v2370, 1e-05
        %v2381 = vadd.f32 %v2377, 1e-05
        %v2382 = vrcp.pop %v2378
        %v2383 = vrcp.pop %v2379
        %v2384 = vrcp.pop %v2380
        %v2385 = vrcp.pop %v2381
        %v2386 = vmul.f32 %v2378, %v2382
        %v2387 = vmul.f32 %v2379, %v2383
        %v2388 = vmul.f32 %v2380, %v2384
        %v2389 = vmul.f32 %v2381, %v2385
        %v2390 = vsub.f32 2.0, %v2386
        %v2391 = vsub.f32 2.0, %v2387
        %v2392 = vsub.f32 2.0, %v2388
        %v2393 = vsub.f32 2.0, %v2389
        %v2394 = vmul.f32 %v2382, %v2390
        %v2395 = vmul.f32 %v2383, %v2391
        %v2396 = vmul.f32 %v2384, %v2392
        %v2397 = vmul.f32 %v2385, %v2393
        %v2398 = vmul.f32 %v2278, %v2394
        %v2399 = vmul.f32 %v2279, %v2395
        %v2400 = vmul.f32 %v2280, %v2396
        %v2401 = vmul.f32 %v2281, %v2397
        %v2402 = vmul.f32 %v2282, %v2394
        %v2403 = vmul.f32 %v2283, %v2395
        %v2404 = vmul.f32 %v2284, %v2396
        %v2405 = vmul.f32 %v2285, %v2397
        %v2406 = vmul.f32 %v2286, %v2394
        %v2407 = vmul.f32 %v2287, %v2395
        %v2408 = vmul.f32 %v2288, %v2396
        %v2409 = vmul.f32 %v2289, %v2397
        %v2410 = vmul.f32 %v2290, %v2394
        %v2411 = vmul.f32 %v2291, %v2395
        %v2412 = vmul.f32 %v2292, %v2396
        %v2413 = vmul.f32 %v2293, %v2397
        %2415 = vset.pattern.permute.xlu0 0
        %2416 = vperm.xlu0 %2415, %v2230
        %v2417 = vpop.permute.xlu0 %2416
        %2420 = vset.pattern.permute.xlu0 0
        %2421 = vperm.xlu0 %2420, %v2231
        %v2422 = vpop.permute.xlu0 %2421
        %2425 = vset.pattern.permute.xlu0 0
        %2426 = vperm.xlu0 %2425, %v2232
        %v2427 = vpop.permute.xlu0 %2426
        %2430 = vset.pattern.permute.xlu0 0
        %2431 = vperm.xlu0 %2430, %v2233
        %v2432 = vpop.permute.xlu0 %2431
        %v2434 = vmul.f32 %v2398, %v2417
        %v2435 = vmul.f32 %v2399, %v2417
        %v2436 = vmul.f32 %v2400, %v2417
        %v2437 = vmul.f32 %v2401, %v2417
        %v2438 = vmul.f32 %v2402, %v2422
        %v2439 = vmul.f32 %v2403, %v2422
        %v2440 = vmul.f32 %v2404, %v2422
        %v2441 = vmul.f32 %v2405, %v2422
        %v2442 = vmul.f32 %v2406, %v2427
        %v2443 = vmul.f32 %v2407, %v2427
        %v2444 = vmul.f32 %v2408, %v2427
        %v2445 = vmul.f32 %v2409, %v2427
        %v2446 = vmul.f32 %v2410, %v2432
        %v2447 = vmul.f32 %v2411, %v2432
        %v2448 = vmul.f32 %v2412, %v2432
        %v2449 = vmul.f32 %v2413, %v2432
        %2451 = vset.pattern.permute.xlu0 0
        %2452 = vperm.xlu0 %2451, %v2234
        %v2453 = vpop.permute.xlu0 %2452
        %2456 = vset.pattern.permute.xlu0 0
        %2457 = vperm.xlu0 %2456, %v2235
        %v2458 = vpop.permute.xlu0 %2457
        %2461 = vset.pattern.permute.xlu0 0
        %2462 = vperm.xlu0 %2461, %v2236
        %v2463 = vpop.permute.xlu0 %2462
        %2466 = vset.pattern.permute.xlu0 0
        %2467 = vperm.xlu0 %2466, %v2237
        %v2468 = vpop.permute.xlu0 %2467
        %v2470 = vadd.f32 %v2434, %v2453
        %v2471 = vadd.f32 %v2435, %v2453
        %v2472 = vadd.f32 %v2436, %v2453
        %v2473 = vadd.f32 %v2437, %v2453
        %v2474 = vadd.f32 %v2438, %v2458
        %v2475 = vadd.f32 %v2439, %v2458
        %v2476 = vadd.f32 %v2440, %v2458
        %v2477 = vadd.f32 %v2441, %v2458
        %v2478 = vadd.f32 %v2442, %v2463
        %v2479 = vadd.f32 %v2443, %v2463
        %v2480 = vadd.f32 %v2444, %v2463
        %v2481 = vadd.f32 %v2445, %v2463
        %v2482 = vadd.f32 %v2446, %v2468
        %v2483 = vadd.f32 %v2447, %v2468
        %v2484 = vadd.f32 %v2448, %v2468
        %v2485 = vadd.f32 %v2449, %v2468
        %v2486 = vtanh.pop %v2470
        %v2487 = vtanh.pop %v2471
        %v2488 = vtanh.pop %v2472
        %v2489 = vtanh.pop %v2473
        %v2490 = vtanh.pop %v2474
        %v2491 = vtanh.pop %v2475
        %v2492 = vtanh.pop %v2476
        %v2493 = vtanh.pop %v2477
        %v2494 = vtanh.pop %v2478
        %v2495 = vtanh.pop %v2479
        %v2496 = vtanh.pop %v2480
        %v2497 = vtanh.pop %v2481
        %v2498 = vtanh.pop %v2482
        %v2499 = vtanh.pop %v2483
        %v2500 = vtanh.pop %v2484
        %v2501 = vtanh.pop %v2485
        %v2502 = vmul.f32 %v2079, %v2486
        %v2503 = vmul.f32 %v2081, %v2487
        %v2504 = vmul.f32 %v2083, %v2488
        %v2505 = vmul.f32 %v2085, %v2489
        %v2506 = vmul.f32 %v2087, %v2490
        %v2507 = vmul.f32 %v2089, %v2491
        %v2508 = vmul.f32 %v2091, %v2492
        %v2509 = vmul.f32 %v2093, %v2493
        %v2510 = vmul.f32 %v2095, %v2494
        %v2511 = vmul.f32 %v2097, %v2495
        %v2512 = vmul.f32 %v2099, %v2496
        %v2513 = vmul.f32 %v2101, %v2497
        %v2514 = vmul.f32 %v2103, %v2498
        %v2515 = vmul.f32 %v2105, %v2499
        %v2516 = vmul.f32 %v2107, %v2500
        %v2517 = vmul.f32 %v2109, %v2501
        %s2518 = scalar_lea.vmem %s5, 64
        %v2519 = vld [vmem:[%s2518] sm:$0xf]
        %v2520 = vld [vmem:[%s2518 + $0x4] sm:$0xf]
        %v2521 = vld [vmem:[%s2518 + $0x8] sm:$0xf]
        %v2522 = vld [vmem:[%s2518 + $0xc] sm:$0xf]
        %v2523 = vld [vmem:[%s2518 + $0x10] sm:$0xf]
        %v2524 = vld [vmem:[%s2518 + $0x14] sm:$0xf]
        %v2525 = vld [vmem:[%s2518 + $0x18] sm:$0xf]
        %v2526 = vld [vmem:[%s2518 + $0x1c] sm:$0xf]
        %v2527 = vld [vmem:[%s2518 + $0x20] sm:$0xf]
        %v2528 = vld [vmem:[%s2518 + $0x24] sm:$0xf]
        %v2529 = vld [vmem:[%s2518 + $0x28] sm:$0xf]
        %v2530 = vld [vmem:[%s2518 + $0x2c] sm:$0xf]
        %v2531 = vld [vmem:[%s2518 + $0x30] sm:$0xf]
        %v2532 = vld [vmem:[%s2518 + $0x34] sm:$0xf]
        %v2533 = vld [vmem:[%s2518 + $0x38] sm:$0xf]
        %v2534 = vld [vmem:[%s2518 + $0x3c] sm:$0xf]
        %v2535 = vpack.c.bf16 %v2506, %v2502
        %v2536 = vpack.c.bf16 %v2507, %v2503
        %v2537 = vpack.c.bf16 %v2508, %v2504
        %v2538 = vpack.c.bf16 %v2509, %v2505
        %v2539 = vpack.c.bf16 %v2514, %v2510
        %v2540 = vpack.c.bf16 %v2515, %v2511
        %v2541 = vpack.c.bf16 %v2516, %v2512
        %v2542 = vpack.c.bf16 %v2517, %v2513
        %s2543 = scalar_lea.vmem %s6, 128
        %v2544 = vld [vmem:[%s2543] sm:$0xff]
        %v2545 = vld [vmem:[%s2543 + $0x8] sm:$0xff]
        %v2546 = vld [vmem:[%s2543 + $0x10] sm:$0xff]
        %v2547 = vld [vmem:[%s2543 + $0x18] sm:$0xff]
        %v2548 = vld [vmem:[%s2543 + $0x20] sm:$0xff]
        %v2549 = vld [vmem:[%s2543 + $0x28] sm:$0xff]
        %v2550 = vld [vmem:[%s2543 + $0x30] sm:$0xff]
        %v2551 = vld [vmem:[%s2543 + $0x38] sm:$0xff]
        %v2552 = vld [vmem:[%s2543 + $0x40] sm:$0xff]
        %v2553 = vld [vmem:[%s2543 + $0x48] sm:$0xff]
        %v2554 = vld [vmem:[%s2543 + $0x50] sm:$0xff]
        %v2555 = vld [vmem:[%s2543 + $0x58] sm:$0xff]
        %v2556 = vld [vmem:[%s2543 + $0x60] sm:$0xff]
        %v2557 = vld [vmem:[%s2543 + $0x68] sm:$0xff]
        %v2558 = vld [vmem:[%s2543 + $0x70] sm:$0xff]
        %v2559 = vld [vmem:[%s2543 + $0x78] sm:$0xff]
        %2561 = vset.pattern.permute.xlu0 0
        %2562 = vperm.xlu0 %2561, %v2544
        %v2563 = vpop.permute.xlu0 %2562
        %2566 = vset.pattern.permute.xlu0 0
        %2567 = vperm.xlu0 %2566, %v2545
        %v2568 = vpop.permute.xlu0 %2567
        %2571 = vset.pattern.permute.xlu0 0
        %2572 = vperm.xlu0 %2571, %v2546
        %v2573 = vpop.permute.xlu0 %2572
        %2576 = vset.pattern.permute.xlu0 0
        %2577 = vperm.xlu0 %2576, %v2547
        %v2578 = vpop.permute.xlu0 %2577
        %2581 = vset.pattern.permute.xlu0 0
        %2582 = vperm.xlu0 %2581, %v2548
        %v2583 = vpop.permute.xlu0 %2582
        %2586 = vset.pattern.permute.xlu0 0
        %2587 = vperm.xlu0 %2586, %v2549
        %v2588 = vpop.permute.xlu0 %2587
        %2591 = vset.pattern.permute.xlu0 0
        %2592 = vperm.xlu0 %2591, %v2550
        %v2593 = vpop.permute.xlu0 %2592
        %2596 = vset.pattern.permute.xlu0 0
        %2597 = vperm.xlu0 %2596, %v2551
        %v2598 = vpop.permute.xlu0 %2597
        %2601 = vset.pattern.permute.xlu0 0
        %2602 = vperm.xlu0 %2601, %v2552
        %v2603 = vpop.permute.xlu0 %2602
        %2606 = vset.pattern.permute.xlu0 0
        %2607 = vperm.xlu0 %2606, %v2553
        %v2608 = vpop.permute.xlu0 %2607
        %2611 = vset.pattern.permute.xlu0 0
        %2612 = vperm.xlu0 %2611, %v2554
        %v2613 = vpop.permute.xlu0 %2612
        %2616 = vset.pattern.permute.xlu0 0
        %2617 = vperm.xlu0 %2616, %v2555
        %v2618 = vpop.permute.xlu0 %2617
        %2621 = vset.pattern.permute.xlu0 0
        %2622 = vperm.xlu0 %2621, %v2556
        %v2623 = vpop.permute.xlu0 %2622
        %2626 = vset.pattern.permute.xlu0 0
        %2627 = vperm.xlu0 %2626, %v2557
        %v2628 = vpop.permute.xlu0 %2627
        %2631 = vset.pattern.permute.xlu0 0
        %2632 = vperm.xlu0 %2631, %v2558
        %v2633 = vpop.permute.xlu0 %2632
        %2636 = vset.pattern.permute.xlu0 0
        %2637 = vperm.xlu0 %2636, %v2559
        %v2638 = vpop.permute.xlu0 %2637
        %v2656 = vunpack.c.l.b16 %v2519
        %v2657 = vunpack.c.l.b16 %v2520
        %v2658 = vunpack.c.l.b16 %v2521
        %v2659 = vunpack.c.l.b16 %v2522
        %v2660 = vunpack.c.l.b16 %v2523
        %v2661 = vunpack.c.l.b16 %v2524
        %v2662 = vunpack.c.l.b16 %v2525
        %v2663 = vunpack.c.l.b16 %v2526
        %v2664 = vunpack.c.l.b16 %v2527
        %v2665 = vunpack.c.l.b16 %v2528
        %v2666 = vunpack.c.l.b16 %v2529
        %v2667 = vunpack.c.l.b16 %v2530
        %v2668 = vunpack.c.l.b16 %v2531
        %v2669 = vunpack.c.l.b16 %v2532
        %v2670 = vunpack.c.l.b16 %v2533
        %v2671 = vunpack.c.l.b16 %v2534
        %v2672 = vpack.c.b16 %v2657, %v2656
        %v2673 = vpack.c.b16 %v2659, %v2658
        %v2674 = vpack.c.b16 %v2661, %v2660
        %v2675 = vpack.c.b16 %v2663, %v2662
        %v2676 = vpack.c.b16 %v2665, %v2664
        %v2677 = vpack.c.b16 %v2667, %v2666
        %v2678 = vpack.c.b16 %v2669, %v2668
        %v2679 = vpack.c.b16 %v2671, %v2670
        %v2681 = vsel %vm1113, %v2672, 0
        %v2684 = vsel %vm1113, %v2673, 0
        %v2687 = vsel %vm1113, %v2674, 0
        %v2690 = vsel %vm1113, %v2675, 0
        %v2693 = vsel %vm1113, %v2676, 0
        %v2696 = vsel %vm1113, %v2677, 0
        %v2699 = vsel %vm1113, %v2678, 0
        %v2702 = vsel %vm1113, %v2679, 0
        %2704 = vmatprep.subr.bf16.mxu0 0
        %2705 = vmatpush1.bf16.msra.mxu0 0
        %2706 = vmatprep.subr.bf16.mxu0 0
        %2707 = vmatpush1.bf16.msra.mxu0 0
        %2708 = vmatprep.subr.bf16.mxu0 0
        %2709 = vmatpush1.bf16.msra.mxu0 0
        %2710 = vmatprep.subr.bf16.mxu0 0
        %2711 = vmatpush1.bf16.msra.mxu0 0
        %2712 = vmatprep.subr.bf16.mxu0 0
        %2713 = vmatpush1.bf16.msra.mxu0 0
        %2714 = vmatprep.subr.bf16.mxu0 0
        %2715 = vmatpush1.bf16.msra.mxu0 0
        %2716 = vmatprep.subr.bf16.mxu0 %v2540
        %2717 = vmatpush1.bf16.msra.mxu0 %v2539
        %2718 = vmatprep.subr.bf16.mxu0 %v2536
        %2719 = vmatpush1.bf16.msra.mxu0 %v2535
        %2720 = vmatprep.subr.bf16.mxu0 0
        %2721 = vmatpush2.bf16.msra.mxu0 0
        %2722 = vmatprep.subr.bf16.mxu0 0
        %2723 = vmatpush2.bf16.msra.mxu0 0
        %2724 = vmatprep.subr.bf16.mxu0 0
        %2725 = vmatpush2.bf16.msra.mxu0 0
        %2726 = vmatprep.subr.bf16.mxu0 0
        %2727 = vmatpush2.bf16.msra.mxu0 0
        %2728 = vmatprep.subr.bf16.mxu0 0
        %2729 = vmatpush2.bf16.msra.mxu0 0
        %2730 = vmatprep.subr.bf16.mxu0 0
        %2731 = vmatpush2.bf16.msra.mxu0 0
        %2732 = vmatprep.subr.bf16.mxu0 0
        %2733 = vmatpush2.bf16.msra.mxu0 0
        %2734 = vmatprep.subr.bf16.mxu0 0
        %2735 = vmatpush2.bf16.msra.mxu0 0
        %2736 = vmatprep.mubr.bf16.mxu0 0
        %2737 = vmatmul.mubr.bf16.gmra.mxu0 %v2681
        %v2738 = vpop.f32.mrf.mxu0
        %v2739 = vadd.f32 %v2563, %v2738
        %v2740 = vpop.f32.mrf.mxu0
        %v2741 = vadd.f32 %v2563, %v2740
        %v2742 = vpop.f32.mrf.mxu0
        %v2743 = vadd.f32 %v2568, %v2742
        %v2744 = vpop.f32.mrf.mxu0
        %v2745 = vadd.f32 %v2568, %v2744
        %2746 = vmatprep.mubr.bf16.mxu0 0
        %2747 = vmatmul.mubr.bf16.gmra.mxu0 %v2684
        %v2748 = vpop.f32.mrf.mxu0
        %v2749 = vadd.f32 %v2573, %v2748
        %v2750 = vpop.f32.mrf.mxu0
        %v2751 = vadd.f32 %v2573, %v2750
        %v2752 = vpop.f32.mrf.mxu0
        %v2753 = vadd.f32 %v2578, %v2752
        %v2754 = vpop.f32.mrf.mxu0
        %v2755 = vadd.f32 %v2578, %v2754
        %2756 = vmatprep.mubr.bf16.mxu0 0
        %2757 = vmatmul.mubr.bf16.gmra.mxu0 %v2687
        %v2758 = vpop.f32.mrf.mxu0
        %v2759 = vadd.f32 %v2583, %v2758
        %v2760 = vpop.f32.mrf.mxu0
        %v2761 = vadd.f32 %v2583, %v2760
        %v2762 = vpop.f32.mrf.mxu0
        %v2763 = vadd.f32 %v2588, %v2762
        %v2764 = vpop.f32.mrf.mxu0
        %v2765 = vadd.f32 %v2588, %v2764
        %2766 = vmatprep.mubr.bf16.mxu0 0
        %2767 = vmatmul.mubr.bf16.gmra.mxu0 %v2690
        %v2768 = vpop.f32.mrf.mxu0
        %v2769 = vadd.f32 %v2593, %v2768
        %v2770 = vpop.f32.mrf.mxu0
        %v2771 = vadd.f32 %v2593, %v2770
        %v2772 = vpop.f32.mrf.mxu0
        %v2773 = vadd.f32 %v2598, %v2772
        %v2774 = vpop.f32.mrf.mxu0
        %v2775 = vadd.f32 %v2598, %v2774
        %2776 = vmatprep.mubr.bf16.mxu0 0
        %2777 = vmatmul.mubr.bf16.gmra.mxu0 %v2693
        %v2778 = vpop.f32.mrf.mxu0
        %v2779 = vadd.f32 %v2603, %v2778
        %v2780 = vpop.f32.mrf.mxu0
        %v2781 = vadd.f32 %v2603, %v2780
        %v2782 = vpop.f32.mrf.mxu0
        %v2783 = vadd.f32 %v2608, %v2782
        %v2784 = vpop.f32.mrf.mxu0
        %v2785 = vadd.f32 %v2608, %v2784
        %2786 = vmatprep.mubr.bf16.mxu0 0
        %2787 = vmatmul.mubr.bf16.gmra.mxu0 %v2696
        %v2788 = vpop.f32.mrf.mxu0
        %v2789 = vadd.f32 %v2613, %v2788
        %v2790 = vpop.f32.mrf.mxu0
        %v2791 = vadd.f32 %v2613, %v2790
        %v2792 = vpop.f32.mrf.mxu0
        %v2793 = vadd.f32 %v2618, %v2792
        %v2794 = vpop.f32.mrf.mxu0
        %v2795 = vadd.f32 %v2618, %v2794
        %2796 = vmatprep.mubr.bf16.mxu0 0
        %2797 = vmatmul.mubr.bf16.gmra.mxu0 %v2699
        %v2798 = vpop.f32.mrf.mxu0
        %v2799 = vadd.f32 %v2623, %v2798
        %v2800 = vpop.f32.mrf.mxu0
        %v2801 = vadd.f32 %v2623, %v2800
        %v2802 = vpop.f32.mrf.mxu0
        %v2803 = vadd.f32 %v2628, %v2802
        %v2804 = vpop.f32.mrf.mxu0
        %v2805 = vadd.f32 %v2628, %v2804
        %2806 = vmatprep.mubr.bf16.mxu0 0
        %2807 = vmatmul.mubr.bf16.gmra.mxu0 %v2702
        %v2808 = vpop.f32.mrf.mxu0
        %v2809 = vadd.f32 %v2633, %v2808
        %v2810 = vpop.f32.mrf.mxu0
        %v2811 = vadd.f32 %v2633, %v2810
        %v2812 = vpop.f32.mrf.mxu0
        %v2813 = vadd.f32 %v2638, %v2812
        %v2814 = vpop.f32.mrf.mxu0
        %v2815 = vadd.f32 %v2638, %v2814
        %2816 = vdwg.mxu0
        %2817 = vmatprep.subr.bf16.mxu0 0
        %2818 = vmatpush1.bf16.msra.mxu0 0
        %2819 = vmatprep.subr.bf16.mxu0 0
        %2820 = vmatpush1.bf16.msra.mxu0 0
        %2821 = vmatprep.subr.bf16.mxu0 0
        %2822 = vmatpush1.bf16.msra.mxu0 0
        %2823 = vmatprep.subr.bf16.mxu0 0
        %2824 = vmatpush1.bf16.msra.mxu0 0
        %2825 = vmatprep.subr.bf16.mxu0 0
        %2826 = vmatpush1.bf16.msra.mxu0 0
        %2827 = vmatprep.subr.bf16.mxu0 0
        %2828 = vmatpush1.bf16.msra.mxu0 0
        %2829 = vmatprep.subr.bf16.mxu0 %v2542
        %2830 = vmatpush1.bf16.msra.mxu0 %v2541
        %2831 = vmatprep.subr.bf16.mxu0 %v2538
        %2832 = vmatpush1.bf16.msra.mxu0 %v2537
        %2833 = vmatprep.subr.bf16.mxu0 0
        %2834 = vmatpush2.bf16.msra.mxu0 0
        %2835 = vmatprep.subr.bf16.mxu0 0
        %2836 = vmatpush2.bf16.msra.mxu0 0
        %2837 = vmatprep.subr.bf16.mxu0 0
        %2838 = vmatpush2.bf16.msra.mxu0 0
        %2839 = vmatprep.subr.bf16.mxu0 0
        %2840 = vmatpush2.bf16.msra.mxu0 0
        %2841 = vmatprep.subr.bf16.mxu0 0
        %2842 = vmatpush2.bf16.msra.mxu0 0
        %2843 = vmatprep.subr.bf16.mxu0 0
        %2844 = vmatpush2.bf16.msra.mxu0 0
        %2845 = vmatprep.subr.bf16.mxu0 0
        %2846 = vmatpush2.bf16.msra.mxu0 0
        %2847 = vmatprep.subr.bf16.mxu0 0
        %2848 = vmatpush2.bf16.msra.mxu0 0
        %2849 = vmatprep.mubr.bf16.mxu0 0
        %2850 = vmatmul.mubr.bf16.gmra.mxu0 %v2681
        %v2851 = vpop.f32.mrf.mxu0
        %v2852 = vadd.f32 %v2563, %v2851
        %v2853 = vpop.f32.mrf.mxu0
        %v2854 = vadd.f32 %v2563, %v2853
        %v2855 = vpop.f32.mrf.mxu0
        %v2856 = vadd.f32 %v2568, %v2855
        %v2857 = vpop.f32.mrf.mxu0
        %v2858 = vadd.f32 %v2568, %v2857
        %2859 = vmatprep.mubr.bf16.mxu0 0
        %2860 = vmatmul.mubr.bf16.gmra.mxu0 %v2684
        %v2861 = vpop.f32.mrf.mxu0
        %v2862 = vadd.f32 %v2573, %v2861
        %v2863 = vpop.f32.mrf.mxu0
        %v2864 = vadd.f32 %v2573, %v2863
        %v2865 = vpop.f32.mrf.mxu0
        %v2866 = vadd.f32 %v2578, %v2865
        %v2867 = vpop.f32.mrf.mxu0
        %v2868 = vadd.f32 %v2578, %v2867
        %2869 = vmatprep.mubr.bf16.mxu0 0
        %2870 = vmatmul.mubr.bf16.gmra.mxu0 %v2687
        %v2871 = vpop.f32.mrf.mxu0
        %v2872 = vadd.f32 %v2583, %v2871
        %v2873 = vpop.f32.mrf.mxu0
        %v2874 = vadd.f32 %v2583, %v2873
        %v2875 = vpop.f32.mrf.mxu0
        %v2876 = vadd.f32 %v2588, %v2875
        %v2877 = vpop.f32.mrf.mxu0
        %v2878 = vadd.f32 %v2588, %v2877
        %2879 = vmatprep.mubr.bf16.mxu0 0
        %2880 = vmatmul.mubr.bf16.gmra.mxu0 %v2690
        %v2881 = vpop.f32.mrf.mxu0
        %v2882 = vadd.f32 %v2593, %v2881
        %v2883 = vpop.f32.mrf.mxu0
        %v2884 = vadd.f32 %v2593, %v2883
        %v2885 = vpop.f32.mrf.mxu0
        %v2886 = vadd.f32 %v2598, %v2885
        %v2887 = vpop.f32.mrf.mxu0
        %v2888 = vadd.f32 %v2598, %v2887
        %2889 = vmatprep.mubr.bf16.mxu0 0
        %2890 = vmatmul.mubr.bf16.gmra.mxu0 %v2693
        %v2891 = vpop.f32.mrf.mxu0
        %v2892 = vadd.f32 %v2603, %v2891
        %v2893 = vpop.f32.mrf.mxu0
        %v2894 = vadd.f32 %v2603, %v2893
        %v2895 = vpop.f32.mrf.mxu0
        %v2896 = vadd.f32 %v2608, %v2895
        %v2897 = vpop.f32.mrf.mxu0
        %v2898 = vadd.f32 %v2608, %v2897
        %2899 = vmatprep.mubr.bf16.mxu0 0
        %2900 = vmatmul.mubr.bf16.gmra.mxu0 %v2696
        %v2901 = vpop.f32.mrf.mxu0
        %v2902 = vadd.f32 %v2613, %v2901
        %v2903 = vpop.f32.mrf.mxu0
        %v2904 = vadd.f32 %v2613, %v2903
        %v2905 = vpop.f32.mrf.mxu0
        %v2906 = vadd.f32 %v2618, %v2905
        %v2907 = vpop.f32.mrf.mxu0
        %v2908 = vadd.f32 %v2618, %v2907
        %2909 = vmatprep.mubr.bf16.mxu0 0
        %2910 = vmatmul.mubr.bf16.gmra.mxu0 %v2699
        %v2911 = vpop.f32.mrf.mxu0
        %v2912 = vadd.f32 %v2623, %v2911
        %v2913 = vpop.f32.mrf.mxu0
        %v2914 = vadd.f32 %v2623, %v2913
        %v2915 = vpop.f32.mrf.mxu0
        %v2916 = vadd.f32 %v2628, %v2915
        %v2917 = vpop.f32.mrf.mxu0
        %v2918 = vadd.f32 %v2628, %v2917
        %2919 = vmatprep.mubr.bf16.mxu0 0
        %2920 = vmatmul.mubr.bf16.gmra.mxu0 %v2702
        %v2921 = vpop.f32.mrf.mxu0
        %v2922 = vadd.f32 %v2633, %v2921
        %v2923 = vpop.f32.mrf.mxu0
        %v2924 = vadd.f32 %v2633, %v2923
        %v2925 = vpop.f32.mrf.mxu0
        %v2926 = vadd.f32 %v2638, %v2925
        %v2927 = vpop.f32.mrf.mxu0
        %v2928 = vadd.f32 %v2638, %v2927
        %2929 = vdwg.mxu0
        %v2930 = vadd.f32 %v2739, %v2743
        %v2931 = vadd.f32 %v2930, %v2749
        %v2932 = vadd.f32 %v2931, %v2753
        %v2933 = vadd.f32 %v2932, %v2759
        %v2934 = vadd.f32 %v2933, %v2763
        %v2935 = vadd.f32 %v2934, %v2769
        %v2936 = vadd.f32 %v2935, %v2773
        %v2937 = vadd.f32 %v2936, %v2779
        %v2938 = vadd.f32 %v2937, %v2783
        %v2939 = vadd.f32 %v2938, %v2789
        %v2940 = vadd.f32 %v2939, %v2793
        %v2941 = vadd.f32 %v2940, %v2799
        %v2942 = vadd.f32 %v2941, %v2803
        %v2943 = vadd.f32 %v2942, %v2809
        %v2944 = vadd.f32 %v2943, %v2813
        %v2945 = vrot.slane %v2944, 4
        %v2946 = vadd.f32 %v2944, %v2945
        %v2947 = vrot.slane %v2946, 2
        %v2948 = vadd.f32 %v2946, %v2947
        %v2949 = vrot.slane %v2948, 1
        %v2950 = vadd.f32 %v2948, %v2949
        %v2951 = vadd.f32 %v2741, %v2745
        %v2952 = vadd.f32 %v2951, %v2751
        %v2953 = vadd.f32 %v2952, %v2755
        %v2954 = vadd.f32 %v2953, %v2761
        %v2955 = vadd.f32 %v2954, %v2765
        %v2956 = vadd.f32 %v2955, %v2771
        %v2957 = vadd.f32 %v2956, %v2775
        %v2958 = vadd.f32 %v2957, %v2781
        %v2959 = vadd.f32 %v2958, %v2785
        %v2960 = vadd.f32 %v2959, %v2791
        %v2961 = vadd.f32 %v2960, %v2795
        %v2962 = vadd.f32 %v2961, %v2801
        %v2963 = vadd.f32 %v2962, %v2805
        %v2964 = vadd.f32 %v2963, %v2811
        %v2965 = vadd.f32 %v2964, %v2815
        %v2966 = vrot.slane %v2965, 4
        %v2967 = vadd.f32 %v2965, %v2966
        %v2968 = vrot.slane %v2967, 2
        %v2969 = vadd.f32 %v2967, %v2968
        %v2970 = vrot.slane %v2969, 1
        %v2971 = vadd.f32 %v2969, %v2970
        %v2972 = vadd.f32 %v2852, %v2856
        %v2973 = vadd.f32 %v2972, %v2862
        %v2974 = vadd.f32 %v2973, %v2866
        %v2975 = vadd.f32 %v2974, %v2872
        %v2976 = vadd.f32 %v2975, %v2876
        %v2977 = vadd.f32 %v2976, %v2882
        %v2978 = vadd.f32 %v2977, %v2886
        %v2979 = vadd.f32 %v2978, %v2892
        %v2980 = vadd.f32 %v2979, %v2896
        %v2981 = vadd.f32 %v2980, %v2902
        %v2982 = vadd.f32 %v2981, %v2906
        %v2983 = vadd.f32 %v2982, %v2912
        %v2984 = vadd.f32 %v2983, %v2916
        %v2985 = vadd.f32 %v2984, %v2922
        %v2986 = vadd.f32 %v2985, %v2926
        %v2987 = vrot.slane %v2986, 4
        %v2988 = vadd.f32 %v2986, %v2987
        %v2989 = vrot.slane %v2988, 2
        %v2990 = vadd.f32 %v2988, %v2989
        %v2991 = vrot.slane %v2990, 1
        %v2992 = vadd.f32 %v2990, %v2991
        %v2993 = vadd.f32 %v2854, %v2858
        %v2994 = vadd.f32 %v2993, %v2864
        %v2995 = vadd.f32 %v2994, %v2868
        %v2996 = vadd.f32 %v2995, %v2874
        %v2997 = vadd.f32 %v2996, %v2878
        %v2998 = vadd.f32 %v2997, %v2884
        %v2999 = vadd.f32 %v2998, %v2888
        %v3000 = vadd.f32 %v2999, %v2894
        %v3001 = vadd.f32 %v3000, %v2898
        %v3002 = vadd.f32 %v3001, %v2904
        %v3003 = vadd.f32 %v3002, %v2908
        %v3004 = vadd.f32 %v3003, %v2914
        %v3005 = vadd.f32 %v3004, %v2918
        %v3006 = vadd.f32 %v3005, %v2924
        %v3007 = vadd.f32 %v3006, %v2928
        %v3008 = vrot.slane %v3007, 4
        %v3009 = vadd.f32 %v3007, %v3008
        %v3010 = vrot.slane %v3009, 2
        %v3011 = vadd.f32 %v3009, %v3010
        %v3012 = vrot.slane %v3011, 1
        %v3013 = vadd.f32 %v3011, %v3012
        %v3014 = vmul.f32 %v2950, %v1448
        %v3015 = vmul.f32 %v2971, %v1448
        %v3016 = vmul.f32 %v2992, %v1448
        %v3017 = vmul.f32 %v3013, %v1448
        %v3018 = vsub.f32 %v2739, %v3014
        %v3019 = vsub.f32 %v2741, %v3015
        %v3020 = vsub.f32 %v2852, %v3016
        %v3021 = vsub.f32 %v2854, %v3017
        %v3022 = vsub.f32 %v2743, %v3014
        %v3023 = vsub.f32 %v2745, %v3015
        %v3024 = vsub.f32 %v2856, %v3016
        %v3025 = vsub.f32 %v2858, %v3017
        %v3026 = vsub.f32 %v2749, %v3014
        %v3027 = vsub.f32 %v2751, %v3015
        %v3028 = vsub.f32 %v2862, %v3016
        %v3029 = vsub.f32 %v2864, %v3017
        %v3030 = vsub.f32 %v2753, %v3014
        %v3031 = vsub.f32 %v2755, %v3015
        %v3032 = vsub.f32 %v2866, %v3016
        %v3033 = vsub.f32 %v2868, %v3017
        %v3034 = vsub.f32 %v2759, %v3014
        %v3035 = vsub.f32 %v2761, %v3015
        %v3036 = vsub.f32 %v2872, %v3016
        %v3037 = vsub.f32 %v2874, %v3017
        %v3038 = vsub.f32 %v2763, %v3014
        %v3039 = vsub.f32 %v2765, %v3015
        %v3040 = vsub.f32 %v2876, %v3016
        %v3041 = vsub.f32 %v2878, %v3017
        %v3042 = vsub.f32 %v2769, %v3014
        %v3043 = vsub.f32 %v2771, %v3015
        %v3044 = vsub.f32 %v2882, %v3016
        %v3045 = vsub.f32 %v2884, %v3017
        %v3046 = vsub.f32 %v2773, %v3014
        %v3047 = vsub.f32 %v2775, %v3015
        %v3048 = vsub.f32 %v2886, %v3016
        %v3049 = vsub.f32 %v2888, %v3017
        %v3050 = vsub.f32 %v2779, %v3014
        %v3051 = vsub.f32 %v2781, %v3015
        %v3052 = vsub.f32 %v2892, %v3016
        %v3053 = vsub.f32 %v2894, %v3017
        %v3054 = vsub.f32 %v2783, %v3014
        %v3055 = vsub.f32 %v2785, %v3015
        %v3056 = vsub.f32 %v2896, %v3016
        %v3057 = vsub.f32 %v2898, %v3017
        %v3058 = vsub.f32 %v2789, %v3014
        %v3059 = vsub.f32 %v2791, %v3015
        %v3060 = vsub.f32 %v2902, %v3016
        %v3061 = vsub.f32 %v2904, %v3017
        %v3062 = vsub.f32 %v2793, %v3014
        %v3063 = vsub.f32 %v2795, %v3015
        %v3064 = vsub.f32 %v2906, %v3016
        %v3065 = vsub.f32 %v2908, %v3017
        %v3066 = vsub.f32 %v2799, %v3014
        %v3067 = vsub.f32 %v2801, %v3015
        %v3068 = vsub.f32 %v2912, %v3016
        %v3069 = vsub.f32 %v2914, %v3017
        %v3070 = vsub.f32 %v2803, %v3014
        %v3071 = vsub.f32 %v2805, %v3015
        %v3072 = vsub.f32 %v2916, %v3016
        %v3073 = vsub.f32 %v2918, %v3017
        %v3074 = vsub.f32 %v2809, %v3014
        %v3075 = vsub.f32 %v2811, %v3015
        %v3076 = vsub.f32 %v2922, %v3016
        %v3077 = vsub.f32 %v2924, %v3017
        %v3078 = vsub.f32 %v2813, %v3014
        %v3079 = vsub.f32 %v2815, %v3015
        %v3080 = vsub.f32 %v2926, %v3016
        %v3081 = vsub.f32 %v2928, %v3017
        %v3082 = vmul.f32 %v3018, %v3018
        %v3083 = vmul.f32 %v3019, %v3019
        %v3084 = vmul.f32 %v3020, %v3020
        %v3085 = vmul.f32 %v3021, %v3021
        %v3086 = vmul.f32 %v3022, %v3022
        %v3087 = vmul.f32 %v3023, %v3023
        %v3088 = vmul.f32 %v3024, %v3024
        %v3089 = vmul.f32 %v3025, %v3025
        %v3090 = vmul.f32 %v3026, %v3026
        %v3091 = vmul.f32 %v3027, %v3027
        %v3092 = vmul.f32 %v3028, %v3028
        %v3093 = vmul.f32 %v3029, %v3029
        %v3094 = vmul.f32 %v3030, %v3030
        %v3095 = vmul.f32 %v3031, %v3031
        %v3096 = vmul.f32 %v3032, %v3032
        %v3097 = vmul.f32 %v3033, %v3033
        %v3098 = vmul.f32 %v3034, %v3034
        %v3099 = vmul.f32 %v3035, %v3035
        %v3100 = vmul.f32 %v3036, %v3036
        %v3101 = vmul.f32 %v3037, %v3037
        %v3102 = vmul.f32 %v3038, %v3038
        %v3103 = vmul.f32 %v3039, %v3039
        %v3104 = vmul.f32 %v3040, %v3040
        %v3105 = vmul.f32 %v3041, %v3041
        %v3106 = vmul.f32 %v3042, %v3042
        %v3107 = vmul.f32 %v3043, %v3043
        %v3108 = vmul.f32 %v3044, %v3044
        %v3109 = vmul.f32 %v3045, %v3045
        %v3110 = vmul.f32 %v3046, %v3046
        %v3111 = vmul.f32 %v3047, %v3047
        %v3112 = vmul.f32 %v3048, %v3048
        %v3113 = vmul.f32 %v3049, %v3049
        %v3114 = vmul.f32 %v3050, %v3050
        %v3115 = vmul.f32 %v3051, %v3051
        %v3116 = vmul.f32 %v3052, %v3052
        %v3117 = vmul.f32 %v3053, %v3053
        %v3118 = vmul.f32 %v3054, %v3054
        %v3119 = vmul.f32 %v3055, %v3055
        %v3120 = vmul.f32 %v3056, %v3056
        %v3121 = vmul.f32 %v3057, %v3057
        %v3122 = vmul.f32 %v3058, %v3058
        %v3123 = vmul.f32 %v3059, %v3059
        %v3124 = vmul.f32 %v3060, %v3060
        %v3125 = vmul.f32 %v3061, %v3061
        %v3126 = vmul.f32 %v3062, %v3062
        %v3127 = vmul.f32 %v3063, %v3063
        %v3128 = vmul.f32 %v3064, %v3064
        %v3129 = vmul.f32 %v3065, %v3065
        %v3130 = vmul.f32 %v3066, %v3066
        %v3131 = vmul.f32 %v3067, %v3067
        %v3132 = vmul.f32 %v3068, %v3068
        %v3133 = vmul.f32 %v3069, %v3069
        %v3134 = vmul.f32 %v3070, %v3070
        %v3135 = vmul.f32 %v3071, %v3071
        %v3136 = vmul.f32 %v3072, %v3072
        %v3137 = vmul.f32 %v3073, %v3073
        %v3138 = vmul.f32 %v3074, %v3074
        %v3139 = vmul.f32 %v3075, %v3075
        %v3140 = vmul.f32 %v3076, %v3076
        %v3141 = vmul.f32 %v3077, %v3077
        %v3142 = vmul.f32 %v3078, %v3078
        %v3143 = vmul.f32 %v3079, %v3079
        %v3144 = vmul.f32 %v3080, %v3080
        %v3145 = vmul.f32 %v3081, %v3081
        %v3146 = vadd.f32 %v3082, %v3086
        %v3147 = vadd.f32 %v3146, %v3090
        %v3148 = vadd.f32 %v3147, %v3094
        %v3149 = vadd.f32 %v3148, %v3098
        %v3150 = vadd.f32 %v3149, %v3102
        %v3151 = vadd.f32 %v3150, %v3106
        %v3152 = vadd.f32 %v3151, %v3110
        %v3153 = vadd.f32 %v3152, %v3114
        %v3154 = vadd.f32 %v3153, %v3118
        %v3155 = vadd.f32 %v3154, %v3122
        %v3156 = vadd.f32 %v3155, %v3126
        %v3157 = vadd.f32 %v3156, %v3130
        %v3158 = vadd.f32 %v3157, %v3134
        %v3159 = vadd.f32 %v3158, %v3138
        %v3160 = vadd.f32 %v3159, %v3142
        %v3161 = vrot.slane %v3160, 4
        %v3162 = vadd.f32 %v3160, %v3161
        %v3163 = vrot.slane %v3162, 2
        %v3164 = vadd.f32 %v3162, %v3163
        %v3165 = vrot.slane %v3164, 1
        %v3166 = vadd.f32 %v3164, %v3165
        %v3167 = vadd.f32 %v3083, %v3087
        %v3168 = vadd.f32 %v3167, %v3091
        %v3169 = vadd.f32 %v3168, %v3095
        %v3170 = vadd.f32 %v3169, %v3099
        %v3171 = vadd.f32 %v3170, %v3103
        %v3172 = vadd.f32 %v3171, %v3107
        %v3173 = vadd.f32 %v3172, %v3111
        %v3174 = vadd.f32 %v3173, %v3115
        %v3175 = vadd.f32 %v3174, %v3119
        %v3176 = vadd.f32 %v3175, %v3123
        %v3177 = vadd.f32 %v3176, %v3127
        %v3178 = vadd.f32 %v3177, %v3131
        %v3179 = vadd.f32 %v3178, %v3135
        %v3180 = vadd.f32 %v3179, %v3139
        %v3181 = vadd.f32 %v3180, %v3143
        %v3182 = vrot.slane %v3181, 4
        %v3183 = vadd.f32 %v3181, %v3182
        %v3184 = vrot.slane %v3183, 2
        %v3185 = vadd.f32 %v3183, %v3184
        %v3186 = vrot.slane %v3185, 1
        %v3187 = vadd.f32 %v3185, %v3186
        %v3188 = vadd.f32 %v3084, %v3088
        %v3189 = vadd.f32 %v3188, %v3092
        %v3190 = vadd.f32 %v3189, %v3096
        %v3191 = vadd.f32 %v3190, %v3100
        %v3192 = vadd.f32 %v3191, %v3104
        %v3193 = vadd.f32 %v3192, %v3108
        %v3194 = vadd.f32 %v3193, %v3112
        %v3195 = vadd.f32 %v3194, %v3116
        %v3196 = vadd.f32 %v3195, %v3120
        %v3197 = vadd.f32 %v3196, %v3124
        %v3198 = vadd.f32 %v3197, %v3128
        %v3199 = vadd.f32 %v3198, %v3132
        %v3200 = vadd.f32 %v3199, %v3136
        %v3201 = vadd.f32 %v3200, %v3140
        %v3202 = vadd.f32 %v3201, %v3144
        %v3203 = vrot.slane %v3202, 4
        %v3204 = vadd.f32 %v3202, %v3203
        %v3205 = vrot.slane %v3204, 2
        %v3206 = vadd.f32 %v3204, %v3205
        %v3207 = vrot.slane %v3206, 1
        %v3208 = vadd.f32 %v3206, %v3207
        %v3209 = vadd.f32 %v3085, %v3089
        %v3210 = vadd.f32 %v3209, %v3093
        %v3211 = vadd.f32 %v3210, %v3097
        %v3212 = vadd.f32 %v3211, %v3101
        %v3213 = vadd.f32 %v3212, %v3105
        %v3214 = vadd.f32 %v3213, %v3109
        %v3215 = vadd.f32 %v3214, %v3113
        %v3216 = vadd.f32 %v3215, %v3117
        %v3217 = vadd.f32 %v3216, %v3121
        %v3218 = vadd.f32 %v3217, %v3125
        %v3219 = vadd.f32 %v3218, %v3129
        %v3220 = vadd.f32 %v3219, %v3133
        %v3221 = vadd.f32 %v3220, %v3137
        %v3222 = vadd.f32 %v3221, %v3141
        %v3223 = vadd.f32 %v3222, %v3145
        %v3224 = vrot.slane %v3223, 4
        %v3225 = vadd.f32 %v3223, %v3224
        %v3226 = vrot.slane %v3225, 2
        %v3227 = vadd.f32 %v3225, %v3226
        %v3228 = vrot.slane %v3227, 1
        %v3229 = vadd.f32 %v3227, %v3228
        %v3230 = vmul.f32 %v3166, %v1665
        %v3231 = vmul.f32 %v3187, %v1665
        %v3232 = vmul.f32 %v3208, %v1665
        %v3233 = vmul.f32 %v3229, %v1665
        %v3234 = vrsqrt.pop %v3230
        %v3235 = vmul.f32 %v3230, %v3234
        %vm3236 = vcmp.eq.f32.partialorder %v3230, inf
        %v3237 = vsel %vm3236, %v3230, %v3235
        %vm3238 = vcmp.eq.f32.partialorder %v3230, 0.0
        %v3239 = vand.u32 %v3230, 2147483648
        %v3240 = vsel %vm3238, %v3239, %v3237
        %v3241 = vrsqrt.pop %v3231
        %v3242 = vmul.f32 %v3231, %v3241
        %vm3243 = vcmp.eq.f32.partialorder %v3231, inf
        %v3244 = vsel %vm3243, %v3231, %v3242
        %vm3245 = vcmp.eq.f32.partialorder %v3231, 0.0
        %v3246 = vand.u32 %v3231, 2147483648
        %v3247 = vsel %vm3245, %v3246, %v3244
        %v3248 = vrsqrt.pop %v3232
        %v3249 = vmul.f32 %v3232, %v3248
        %vm3250 = vcmp.eq.f32.partialorder %v3232, inf
        %v3251 = vsel %vm3250, %v3232, %v3249
        %vm3252 = vcmp.eq.f32.partialorder %v3232, 0.0
        %v3253 = vand.u32 %v3232, 2147483648
        %v3254 = vsel %vm3252, %v3253, %v3251
        %v3255 = vrsqrt.pop %v3233
        %v3256 = vmul.f32 %v3233, %v3255
        %vm3257 = vcmp.eq.f32.partialorder %v3233, inf
        %v3258 = vsel %vm3257, %v3233, %v3256
        %vm3259 = vcmp.eq.f32.partialorder %v3233, 0.0
        %v3260 = vand.u32 %v3233, 2147483648
        %v3261 = vsel %vm3259, %v3260, %v3258
        %v3262 = vadd.f32 %v3240, 1e-05
        %v3263 = vadd.f32 %v3247, 1e-05
        %v3264 = vadd.f32 %v3254, 1e-05
        %v3265 = vadd.f32 %v3261, 1e-05
        %v3266 = vrcp.pop %v3262
        %v3267 = vrcp.pop %v3263
        %v3268 = vrcp.pop %v3264
        %v3269 = vrcp.pop %v3265
        %v3270 = vmul.f32 %v3262, %v3266
        %v3271 = vmul.f32 %v3263, %v3267
        %v3272 = vmul.f32 %v3264, %v3268
        %v3273 = vmul.f32 %v3265, %v3269
        %v3274 = vsub.f32 2.0, %v3270
        %v3275 = vsub.f32 2.0, %v3271
        %v3276 = vsub.f32 2.0, %v3272
        %v3277 = vsub.f32 2.0, %v3273
        %v3278 = vmul.f32 %v3266, %v3274
        %v3279 = vmul.f32 %v3267, %v3275
        %v3280 = vmul.f32 %v3268, %v3276
        %v3281 = vmul.f32 %v3269, %v3277
        %s3282 = scalar_lea.vmem %s7, 128
        %v3283 = vld [vmem:[%s3282] sm:$0xff]
        %v3284 = vld [vmem:[%s3282 + $0x8] sm:$0xff]
        %v3285 = vld [vmem:[%s3282 + $0x10] sm:$0xff]
        %v3286 = vld [vmem:[%s3282 + $0x18] sm:$0xff]
        %v3287 = vld [vmem:[%s3282 + $0x40] sm:$0xff]
        %v3288 = vld [vmem:[%s3282 + $0x48] sm:$0xff]
        %v3289 = vld [vmem:[%s3282 + $0x50] sm:$0xff]
        %v3290 = vld [vmem:[%s3282 + $0x58] sm:$0xff]
        %v3291 = vld [vmem:[%s3282 + $0x60] sm:$0xff]
        %v3292 = vld [vmem:[%s3282 + $0x68] sm:$0xff]
        %v3293 = vld [vmem:[%s3282 + $0x70] sm:$0xff]
        %v3294 = vld [vmem:[%s3282 + $0x78] sm:$0xff]
        %s3295 = scalar_lea.vmem %s8, 128
        %v3296 = vld [vmem:[%s3295] sm:$0xff]
        %v3297 = vld [vmem:[%s3295 + $0x8] sm:$0xff]
        %v3298 = vld [vmem:[%s3295 + $0x10] sm:$0xff]
        %v3299 = vld [vmem:[%s3295 + $0x18] sm:$0xff]
        %v3300 = vld [vmem:[%s3295 + $0x40] sm:$0xff]
        %v3301 = vld [vmem:[%s3295 + $0x48] sm:$0xff]
        %v3302 = vld [vmem:[%s3295 + $0x50] sm:$0xff]
        %v3303 = vld [vmem:[%s3295 + $0x58] sm:$0xff]
        %v3304 = vld [vmem:[%s3295 + $0x60] sm:$0xff]
        %v3305 = vld [vmem:[%s3295 + $0x68] sm:$0xff]
        %v3306 = vld [vmem:[%s3295 + $0x70] sm:$0xff]
        %v3307 = vld [vmem:[%s3295 + $0x78] sm:$0xff]
        %v3308 = vmul.f32 %v3018, %v3278
        %v3309 = vmul.f32 %v3019, %v3279
        %v3310 = vmul.f32 %v3020, %v3280
        %v3311 = vmul.f32 %v3021, %v3281
        %v3312 = vmul.f32 %v3022, %v3278
        %v3313 = vmul.f32 %v3023, %v3279
        %v3314 = vmul.f32 %v3024, %v3280
        %v3315 = vmul.f32 %v3025, %v3281
        %v3316 = vmul.f32 %v3026, %v3278
        %v3317 = vmul.f32 %v3027, %v3279
        %v3318 = vmul.f32 %v3028, %v3280
        %v3319 = vmul.f32 %v3029, %v3281
        %v3320 = vmul.f32 %v3030, %v3278
        %v3321 = vmul.f32 %v3031, %v3279
        %v3322 = vmul.f32 %v3032, %v3280
        %v3323 = vmul.f32 %v3033, %v3281
        %3325 = vset.pattern.permute.xlu0 0
        %3326 = vperm.xlu0 %3325, %v3283
        %v3327 = vpop.permute.xlu0 %3326
        %3330 = vset.pattern.permute.xlu0 0
        %3331 = vperm.xlu0 %3330, %v3284
        %v3332 = vpop.permute.xlu0 %3331
        %3335 = vset.pattern.permute.xlu0 0
        %3336 = vperm.xlu0 %3335, %v3285
        %v3337 = vpop.permute.xlu0 %3336
        %3340 = vset.pattern.permute.xlu0 0
        %3341 = vperm.xlu0 %3340, %v3286
        %v3342 = vpop.permute.xlu0 %3341
        %v3344 = vmul.f32 %v3308, %v3327
        %v3345 = vmul.f32 %v3309, %v3327
        %v3346 = vmul.f32 %v3310, %v3327
        %v3347 = vmul.f32 %v3311, %v3327
        %v3348 = vmul.f32 %v3312, %v3332
        %v3349 = vmul.f32 %v3313, %v3332
        %v3350 = vmul.f32 %v3314, %v3332
        %v3351 = vmul.f32 %v3315, %v3332
        %v3352 = vmul.f32 %v3316, %v3337
        %v3353 = vmul.f32 %v3317, %v3337
        %v3354 = vmul.f32 %v3318, %v3337
        %v3355 = vmul.f32 %v3319, %v3337
        %v3356 = vmul.f32 %v3320, %v3342
        %v3357 = vmul.f32 %v3321, %v3342
        %v3358 = vmul.f32 %v3322, %v3342
        %v3359 = vmul.f32 %v3323, %v3342
        %3361 = vset.pattern.permute.xlu0 0
        %3362 = vperm.xlu0 %3361, %v3296
        %v3363 = vpop.permute.xlu0 %3362
        %3366 = vset.pattern.permute.xlu0 0
        %3367 = vperm.xlu0 %3366, %v3297
        %v3368 = vpop.permute.xlu0 %3367
        %3371 = vset.pattern.permute.xlu0 0
        %3372 = vperm.xlu0 %3371, %v3298
        %v3373 = vpop.permute.xlu0 %3372
        %3376 = vset.pattern.permute.xlu0 0
        %3377 = vperm.xlu0 %3376, %v3299
        %v3378 = vpop.permute.xlu0 %3377
        %v3380 = vadd.f32 %v3344, %v3363
        %v3381 = vadd.f32 %v3345, %v3363
        %v3382 = vadd.f32 %v3346, %v3363
        %v3383 = vadd.f32 %v3347, %v3363
        %v3384 = vadd.f32 %v3348, %v3368
        %v3385 = vadd.f32 %v3349, %v3368
        %v3386 = vadd.f32 %v3350, %v3368
        %v3387 = vadd.f32 %v3351, %v3368
        %v3388 = vadd.f32 %v3352, %v3373
        %v3389 = vadd.f32 %v3353, %v3373
        %v3390 = vadd.f32 %v3354, %v3373
        %v3391 = vadd.f32 %v3355, %v3373
        %v3392 = vadd.f32 %v3356, %v3378
        %v3393 = vadd.f32 %v3357, %v3378
        %v3394 = vadd.f32 %v3358, %v3378
        %v3395 = vadd.f32 %v3359, %v3378
        %v3396 = vxor.u32 %v3380, 2147483648
        %v3397 = vxor.u32 %v3381, 2147483648
        %v3398 = vxor.u32 %v3382, 2147483648
        %v3399 = vxor.u32 %v3383, 2147483648
        %v3400 = vxor.u32 %v3384, 2147483648
        %v3401 = vxor.u32 %v3385, 2147483648
        %v3402 = vxor.u32 %v3386, 2147483648
        %v3403 = vxor.u32 %v3387, 2147483648
        %v3404 = vxor.u32 %v3388, 2147483648
        %v3405 = vxor.u32 %v3389, 2147483648
        %v3406 = vxor.u32 %v3390, 2147483648
        %v3407 = vxor.u32 %v3391, 2147483648
        %v3408 = vxor.u32 %v3392, 2147483648
        %v3409 = vxor.u32 %v3393, 2147483648
        %v3410 = vxor.u32 %v3394, 2147483648
        %v3411 = vxor.u32 %v3395, 2147483648
        %v3412 = vmul.f32 %v3396, 1.442695
        %v3413 = vpow.pop %v3412
        %v3414 = vmul.f32 %v3397, 1.442695
        %v3415 = vpow.pop %v3414
        %v3416 = vmul.f32 %v3398, 1.442695
        %v3417 = vpow.pop %v3416
        %v3418 = vmul.f32 %v3399, 1.442695
        %v3419 = vpow.pop %v3418
        %v3420 = vmul.f32 %v3400, 1.442695
        %v3421 = vpow.pop %v3420
        %v3422 = vmul.f32 %v3401, 1.442695
        %v3423 = vpow.pop %v3422
        %v3424 = vmul.f32 %v3402, 1.442695
        %v3425 = vpow.pop %v3424
        %v3426 = vmul.f32 %v3403, 1.442695
        %v3427 = vpow.pop %v3426
        %v3428 = vmul.f32 %v3404, 1.442695
        %v3429 = vpow.pop %v3428
        %v3430 = vmul.f32 %v3405, 1.442695
        %v3431 = vpow.pop %v3430
        %v3432 = vmul.f32 %v3406, 1.442695
        %v3433 = vpow.pop %v3432
        %v3434 = vmul.f32 %v3407, 1.442695
        %v3435 = vpow.pop %v3434
        %v3436 = vmul.f32 %v3408, 1.442695
        %v3437 = vpow.pop %v3436
        %v3438 = vmul.f32 %v3409, 1.442695
        %v3439 = vpow.pop %v3438
        %v3440 = vmul.f32 %v3410, 1.442695
        %v3441 = vpow.pop %v3440
        %v3442 = vmul.f32 %v3411, 1.442695
        %v3443 = vpow.pop %v3442
        %v3444 = vadd.f32 %v3413, 1.0
        %v3445 = vadd.f32 %v3415, 1.0
        %v3446 = vadd.f32 %v3417, 1.0
        %v3447 = vadd.f32 %v3419, 1.0
        %v3448 = vadd.f32 %v3421, 1.0
        %v3449 = vadd.f32 %v3423, 1.0
        %v3450 = vadd.f32 %v3425, 1.0
        %v3451 = vadd.f32 %v3427, 1.0
        %v3452 = vadd.f32 %v3429, 1.0
        %v3453 = vadd.f32 %v3431, 1.0
        %v3454 = vadd.f32 %v3433, 1.0
        %v3455 = vadd.f32 %v3435, 1.0
        %v3456 = vadd.f32 %v3437, 1.0
        %v3457 = vadd.f32 %v3439, 1.0
        %v3458 = vadd.f32 %v3441, 1.0
        %v3459 = vadd.f32 %v3443, 1.0
        %v3460 = vrcp.pop %v3444
        %v3461 = vmul.f32 1.0, %v3460
        %v3462 = vrcp.pop %v3445
        %v3463 = vmul.f32 1.0, %v3462
        %v3464 = vrcp.pop %v3446
        %v3465 = vmul.f32 1.0, %v3464
        %v3466 = vrcp.pop %v3447
        %v3467 = vmul.f32 1.0, %v3466
        %v3468 = vrcp.pop %v3448
        %v3469 = vmul.f32 1.0, %v3468
        %v3470 = vrcp.pop %v3449
        %v3471 = vmul.f32 1.0, %v3470
        %v3472 = vrcp.pop %v3450
        %v3473 = vmul.f32 1.0, %v3472
        %v3474 = vrcp.pop %v3451
        %v3475 = vmul.f32 1.0, %v3474
        %v3476 = vrcp.pop %v3452
        %v3477 = vmul.f32 1.0, %v3476
        %v3478 = vrcp.pop %v3453
        %v3479 = vmul.f32 1.0, %v3478
        %v3480 = vrcp.pop %v3454
        %v3481 = vmul.f32 1.0, %v3480
        %v3482 = vrcp.pop %v3455
        %v3483 = vmul.f32 1.0, %v3482
        %v3484 = vrcp.pop %v3456
        %v3485 = vmul.f32 1.0, %v3484
        %v3486 = vrcp.pop %v3457
        %v3487 = vmul.f32 1.0, %v3486
        %v3488 = vrcp.pop %v3458
        %v3489 = vmul.f32 1.0, %v3488
        %v3490 = vrcp.pop %v3459
        %v3491 = vmul.f32 1.0, %v3490
        %v3492 = vmul.f32 %v3050, %v3278
        %v3493 = vmul.f32 %v3051, %v3279
        %v3494 = vmul.f32 %v3052, %v3280
        %v3495 = vmul.f32 %v3053, %v3281
        %v3496 = vmul.f32 %v3054, %v3278
        %v3497 = vmul.f32 %v3055, %v3279
        %v3498 = vmul.f32 %v3056, %v3280
        %v3499 = vmul.f32 %v3057, %v3281
        %v3500 = vmul.f32 %v3058, %v3278
        %v3501 = vmul.f32 %v3059, %v3279
        %v3502 = vmul.f32 %v3060, %v3280
        %v3503 = vmul.f32 %v3061, %v3281
        %v3504 = vmul.f32 %v3062, %v3278
        %v3505 = vmul.f32 %v3063, %v3279
        %v3506 = vmul.f32 %v3064, %v3280
        %v3507 = vmul.f32 %v3065, %v3281
        %3509 = vset.pattern.permute.xlu0 0
        %3510 = vperm.xlu0 %3509, %v3287
        %v3511 = vpop.permute.xlu0 %3510
        %3514 = vset.pattern.permute.xlu0 0
        %3515 = vperm.xlu0 %3514, %v3288
        %v3516 = vpop.permute.xlu0 %3515
        %3519 = vset.pattern.permute.xlu0 0
        %3520 = vperm.xlu0 %3519, %v3289
        %v3521 = vpop.permute.xlu0 %3520
        %3524 = vset.pattern.permute.xlu0 0
        %3525 = vperm.xlu0 %3524, %v3290
        %v3526 = vpop.permute.xlu0 %3525
        %v3528 = vmul.f32 %v3492, %v3511
        %v3529 = vmul.f32 %v3493, %v3511
        %v3530 = vmul.f32 %v3494, %v3511
        %v3531 = vmul.f32 %v3495, %v3511
        %v3532 = vmul.f32 %v3496, %v3516
        %v3533 = vmul.f32 %v3497, %v3516
        %v3534 = vmul.f32 %v3498, %v3516
        %v3535 = vmul.f32 %v3499, %v3516
        %v3536 = vmul.f32 %v3500, %v3521
        %v3537 = vmul.f32 %v3501, %v3521
        %v3538 = vmul.f32 %v3502, %v3521
        %v3539 = vmul.f32 %v3503, %v3521
        %v3540 = vmul.f32 %v3504, %v3526
        %v3541 = vmul.f32 %v3505, %v3526
        %v3542 = vmul.f32 %v3506, %v3526
        %v3543 = vmul.f32 %v3507, %v3526
        %3545 = vset.pattern.permute.xlu0 0
        %3546 = vperm.xlu0 %3545, %v3300
        %v3547 = vpop.permute.xlu0 %3546
        %3550 = vset.pattern.permute.xlu0 0
        %3551 = vperm.xlu0 %3550, %v3301
        %v3552 = vpop.permute.xlu0 %3551
        %3555 = vset.pattern.permute.xlu0 0
        %3556 = vperm.xlu0 %3555, %v3302
        %v3557 = vpop.permute.xlu0 %3556
        %3560 = vset.pattern.permute.xlu0 0
        %3561 = vperm.xlu0 %3560, %v3303
        %v3562 = vpop.permute.xlu0 %3561
        %v3564 = vadd.f32 %v3528, %v3547
        %v3565 = vadd.f32 %v3529, %v3547
        %v3566 = vadd.f32 %v3530, %v3547
        %v3567 = vadd.f32 %v3531, %v3547
        %v3568 = vadd.f32 %v3532, %v3552
        %v3569 = vadd.f32 %v3533, %v3552
        %v3570 = vadd.f32 %v3534, %v3552
        %v3571 = vadd.f32 %v3535, %v3552
        %v3572 = vadd.f32 %v3536, %v3557
        %v3573 = vadd.f32 %v3537, %v3557
        %v3574 = vadd.f32 %v3538, %v3557
        %v3575 = vadd.f32 %v3539, %v3557
        %v3576 = vadd.f32 %v3540, %v3562
        %v3577 = vadd.f32 %v3541, %v3562
        %v3578 = vadd.f32 %v3542, %v3562
        %v3579 = vadd.f32 %v3543, %v3562
        %v3580 = vxor.u32 %v3564, 2147483648
        %v3581 = vxor.u32 %v3565, 2147483648
        %v3582 = vxor.u32 %v3566, 2147483648
        %v3583 = vxor.u32 %v3567, 2147483648
        %v3584 = vxor.u32 %v3568, 2147483648
        %v3585 = vxor.u32 %v3569, 2147483648
        %v3586 = vxor.u32 %v3570, 2147483648
        %v3587 = vxor.u32 %v3571, 2147483648
        %v3588 = vxor.u32 %v3572, 2147483648
        %v3589 = vxor.u32 %v3573, 2147483648
        %v3590 = vxor.u32 %v3574, 2147483648
        %v3591 = vxor.u32 %v3575, 2147483648
        %v3592 = vxor.u32 %v3576, 2147483648
        %v3593 = vxor.u32 %v3577, 2147483648
        %v3594 = vxor.u32 %v3578, 2147483648
        %v3595 = vxor.u32 %v3579, 2147483648
        %v3596 = vmul.f32 %v3580, 1.442695
        %v3597 = vpow.pop %v3596
        %v3598 = vmul.f32 %v3581, 1.442695
        %v3599 = vpow.pop %v3598
        %v3600 = vmul.f32 %v3582, 1.442695
        %v3601 = vpow.pop %v3600
        %v3602 = vmul.f32 %v3583, 1.442695
        %v3603 = vpow.pop %v3602
        %v3604 = vmul.f32 %v3584, 1.442695
        %v3605 = vpow.pop %v3604
        %v3606 = vmul.f32 %v3585, 1.442695
        %v3607 = vpow.pop %v3606
        %v3608 = vmul.f32 %v3586, 1.442695
        %v3609 = vpow.pop %v3608
        %v3610 = vmul.f32 %v3587, 1.442695
        %v3611 = vpow.pop %v3610
        %v3612 = vmul.f32 %v3588, 1.442695
        %v3613 = vpow.pop %v3612
        %v3614 = vmul.f32 %v3589, 1.442695
        %v3615 = vpow.pop %v3614
        %v3616 = vmul.f32 %v3590, 1.442695
        %v3617 = vpow.pop %v3616
        %v3618 = vmul.f32 %v3591, 1.442695
        %v3619 = vpow.pop %v3618
        %v3620 = vmul.f32 %v3592, 1.442695
        %v3621 = vpow.pop %v3620
        %v3622 = vmul.f32 %v3593, 1.442695
        %v3623 = vpow.pop %v3622
        %v3624 = vmul.f32 %v3594, 1.442695
        %v3625 = vpow.pop %v3624
        %v3626 = vmul.f32 %v3595, 1.442695
        %v3627 = vpow.pop %v3626
        %v3628 = vadd.f32 %v3597, 1.0
        %v3629 = vadd.f32 %v3599, 1.0
        %v3630 = vadd.f32 %v3601, 1.0
        %v3631 = vadd.f32 %v3603, 1.0
        %v3632 = vadd.f32 %v3605, 1.0
        %v3633 = vadd.f32 %v3607, 1.0
        %v3634 = vadd.f32 %v3609, 1.0
        %v3635 = vadd.f32 %v3611, 1.0
        %v3636 = vadd.f32 %v3613, 1.0
        %v3637 = vadd.f32 %v3615, 1.0
        %v3638 = vadd.f32 %v3617, 1.0
        %v3639 = vadd.f32 %v3619, 1.0
        %v3640 = vadd.f32 %v3621, 1.0
        %v3641 = vadd.f32 %v3623, 1.0
        %v3642 = vadd.f32 %v3625, 1.0
        %v3643 = vadd.f32 %v3627, 1.0
        %v3644 = vrcp.pop %v3628
        %v3645 = vmul.f32 1.0, %v3644
        %v3646 = vrcp.pop %v3629
        %v3647 = vmul.f32 1.0, %v3646
        %v3648 = vrcp.pop %v3630
        %v3649 = vmul.f32 1.0, %v3648
        %v3650 = vrcp.pop %v3631
        %v3651 = vmul.f32 1.0, %v3650
        %v3652 = vrcp.pop %v3632
        %v3653 = vmul.f32 1.0, %v3652
        %v3654 = vrcp.pop %v3633
        %v3655 = vmul.f32 1.0, %v3654
        %v3656 = vrcp.pop %v3634
        %v3657 = vmul.f32 1.0, %v3656
        %v3658 = vrcp.pop %v3635
        %v3659 = vmul.f32 1.0, %v3658
        %v3660 = vrcp.pop %v3636
        %v3661 = vmul.f32 1.0, %v3660
        %v3662 = vrcp.pop %v3637
        %v3663 = vmul.f32 1.0, %v3662
        %v3664 = vrcp.pop %v3638
        %v3665 = vmul.f32 1.0, %v3664
        %v3666 = vrcp.pop %v3639
        %v3667 = vmul.f32 1.0, %v3666
        %v3668 = vrcp.pop %v3640
        %v3669 = vmul.f32 1.0, %v3668
        %v3670 = vrcp.pop %v3641
        %v3671 = vmul.f32 1.0, %v3670
        %v3672 = vrcp.pop %v3642
        %v3673 = vmul.f32 1.0, %v3672
        %v3674 = vrcp.pop %v3643
        %v3675 = vmul.f32 1.0, %v3674
        %v3676 = vmul.f32 %v3066, %v3278
        %v3677 = vmul.f32 %v3067, %v3279
        %v3678 = vmul.f32 %v3068, %v3280
        %v3679 = vmul.f32 %v3069, %v3281
        %v3680 = vmul.f32 %v3070, %v3278
        %v3681 = vmul.f32 %v3071, %v3279
        %v3682 = vmul.f32 %v3072, %v3280
        %v3683 = vmul.f32 %v3073, %v3281
        %v3684 = vmul.f32 %v3074, %v3278
        %v3685 = vmul.f32 %v3075, %v3279
        %v3686 = vmul.f32 %v3076, %v3280
        %v3687 = vmul.f32 %v3077, %v3281
        %v3688 = vmul.f32 %v3078, %v3278
        %v3689 = vmul.f32 %v3079, %v3279
        %v3690 = vmul.f32 %v3080, %v3280
        %v3691 = vmul.f32 %v3081, %v3281
        %3693 = vset.pattern.permute.xlu0 0
        %3694 = vperm.xlu0 %3693, %v3291
        %v3695 = vpop.permute.xlu0 %3694
        %3698 = vset.pattern.permute.xlu0 0
        %3699 = vperm.xlu0 %3698, %v3292
        %v3700 = vpop.permute.xlu0 %3699
        %3703 = vset.pattern.permute.xlu0 0
        %3704 = vperm.xlu0 %3703, %v3293
        %v3705 = vpop.permute.xlu0 %3704
        %3708 = vset.pattern.permute.xlu0 0
        %3709 = vperm.xlu0 %3708, %v3294
        %v3710 = vpop.permute.xlu0 %3709
        %v3712 = vmul.f32 %v3676, %v3695
        %v3713 = vmul.f32 %v3677, %v3695
        %v3714 = vmul.f32 %v3678, %v3695
        %v3715 = vmul.f32 %v3679, %v3695
        %v3716 = vmul.f32 %v3680, %v3700
        %v3717 = vmul.f32 %v3681, %v3700
        %v3718 = vmul.f32 %v3682, %v3700
        %v3719 = vmul.f32 %v3683, %v3700
        %v3720 = vmul.f32 %v3684, %v3705
        %v3721 = vmul.f32 %v3685, %v3705
        %v3722 = vmul.f32 %v3686, %v3705
        %v3723 = vmul.f32 %v3687, %v3705
        %v3724 = vmul.f32 %v3688, %v3710
        %v3725 = vmul.f32 %v3689, %v3710
        %v3726 = vmul.f32 %v3690, %v3710
        %v3727 = vmul.f32 %v3691, %v3710
        %3729 = vset.pattern.permute.xlu0 0
        %3730 = vperm.xlu0 %3729, %v3304
        %v3731 = vpop.permute.xlu0 %3730
        %3734 = vset.pattern.permute.xlu0 0
        %3735 = vperm.xlu0 %3734, %v3305
        %v3736 = vpop.permute.xlu0 %3735
        %3739 = vset.pattern.permute.xlu0 0
        %3740 = vperm.xlu0 %3739, %v3306
        %v3741 = vpop.permute.xlu0 %3740
        %3744 = vset.pattern.permute.xlu0 0
        %3745 = vperm.xlu0 %3744, %v3307
        %v3746 = vpop.permute.xlu0 %3745
        %v3748 = vadd.f32 %v3712, %v3731
        %v3749 = vadd.f32 %v3713, %v3731
        %v3750 = vadd.f32 %v3714, %v3731
        %v3751 = vadd.f32 %v3715, %v3731
        %v3752 = vadd.f32 %v3716, %v3736
        %v3753 = vadd.f32 %v3717, %v3736
        %v3754 = vadd.f32 %v3718, %v3736
        %v3755 = vadd.f32 %v3719, %v3736
        %v3756 = vadd.f32 %v3720, %v3741
        %v3757 = vadd.f32 %v3721, %v3741
        %v3758 = vadd.f32 %v3722, %v3741
        %v3759 = vadd.f32 %v3723, %v3741
        %v3760 = vadd.f32 %v3724, %v3746
        %v3761 = vadd.f32 %v3725, %v3746
        %v3762 = vadd.f32 %v3726, %v3746
        %v3763 = vadd.f32 %v3727, %v3746
        %v3764 = vtanh.pop %v3748
        %v3765 = vtanh.pop %v3749
        %v3766 = vtanh.pop %v3750
        %v3767 = vtanh.pop %v3751
        %v3768 = vtanh.pop %v3752
        %v3769 = vtanh.pop %v3753
        %v3770 = vtanh.pop %v3754
        %v3771 = vtanh.pop %v3755
        %v3772 = vtanh.pop %v3756
        %v3773 = vtanh.pop %v3757
        %v3774 = vtanh.pop %v3758
        %v3775 = vtanh.pop %v3759
        %v3776 = vtanh.pop %v3760
        %v3777 = vtanh.pop %v3761
        %v3778 = vtanh.pop %v3762
        %v3779 = vtanh.pop %v3763
        %v3780 = vmul.f32 %v3461, %v3764
        %v3781 = vmul.f32 %v3463, %v3765
        %v3782 = vmul.f32 %v3465, %v3766
        %v3783 = vmul.f32 %v3467, %v3767
        %v3784 = vmul.f32 %v3469, %v3768
        %v3785 = vmul.f32 %v3471, %v3769
        %v3786 = vmul.f32 %v3473, %v3770
        %v3787 = vmul.f32 %v3475, %v3771
        %v3788 = vmul.f32 %v3477, %v3772
        %v3789 = vmul.f32 %v3479, %v3773
        %v3790 = vmul.f32 %v3481, %v3774
        %v3791 = vmul.f32 %v3483, %v3775
        %v3792 = vmul.f32 %v3485, %v3776
        %v3793 = vmul.f32 %v3487, %v3777
        %v3794 = vmul.f32 %v3489, %v3778
        %v3795 = vmul.f32 %v3491, %v3779
        %s3796 = scalar_lea.vmem %s9, 32
        %v3797 = vld [vmem:[%s3796] sm:$0xff]
        %v3798 = vld [vmem:[%s3796 + $0x8] sm:$0xff]
        %v3799 = vld [vmem:[%s3796 + $0x10] sm:$0xff]
        %v3800 = vld [vmem:[%s3796 + $0x18] sm:$0xff]
        %s3801 = scalar_lea.vmem %s10, 32
        %v3802 = vld [vmem:[%s3801] sm:$0xff]
        %v3803 = vld [vmem:[%s3801 + $0x8] sm:$0xff]
        %v3804 = vld [vmem:[%s3801 + $0x10] sm:$0xff]
        %v3805 = vld [vmem:[%s3801 + $0x18] sm:$0xff]
        %v3806 = vadd.f32 %v3780, %v3784
        %v3807 = vadd.f32 %v3806, %v3788
        %v3808 = vadd.f32 %v3807, %v3792
        %v3809 = vrot.slane %v3808, 4
        %v3810 = vadd.f32 %v3808, %v3809
        %v3811 = vrot.slane %v3810, 2
        %v3812 = vadd.f32 %v3810, %v3811
        %v3813 = vrot.slane %v3812, 1
        %v3814 = vadd.f32 %v3812, %v3813
        %v3815 = vadd.f32 %v3781, %v3785
        %v3816 = vadd.f32 %v3815, %v3789
        %v3817 = vadd.f32 %v3816, %v3793
        %v3818 = vrot.slane %v3817, 4
        %v3819 = vadd.f32 %v3817, %v3818
        %v3820 = vrot.slane %v3819, 2
        %v3821 = vadd.f32 %v3819, %v3820
        %v3822 = vrot.slane %v3821, 1
        %v3823 = vadd.f32 %v3821, %v3822
        %v3824 = vadd.f32 %v3782, %v3786
        %v3825 = vadd.f32 %v3824, %v3790
        %v3826 = vadd.f32 %v3825, %v3794
        %v3827 = vrot.slane %v3826, 4
        %v3828 = vadd.f32 %v3826, %v3827
        %v3829 = vrot.slane %v3828, 2
        %v3830 = vadd.f32 %v3828, %v3829
        %v3831 = vrot.slane %v3830, 1
        %v3832 = vadd.f32 %v3830, %v3831
        %v3833 = vadd.f32 %v3783, %v3787
        %v3834 = vadd.f32 %v3833, %v3791
        %v3835 = vadd.f32 %v3834, %v3795
        %v3836 = vrot.slane %v3835, 4
        %v3837 = vadd.f32 %v3835, %v3836
        %v3838 = vrot.slane %v3837, 2
        %v3839 = vadd.f32 %v3837, %v3838
        %v3840 = vrot.slane %v3839, 1
        %v3841 = vadd.f32 %v3839, %v3840
        %v3842 = vmul.f32 %v3814, %v723
        %v3843 = vmul.f32 %v3823, %v723
        %v3844 = vmul.f32 %v3832, %v723
        %v3845 = vmul.f32 %v3841, %v723
        %v3846 = vsub.f32 %v3780, %v3842
        %v3847 = vsub.f32 %v3781, %v3843
        %v3848 = vsub.f32 %v3782, %v3844
        %v3849 = vsub.f32 %v3783, %v3845
        %v3850 = vsub.f32 %v3784, %v3842
        %v3851 = vsub.f32 %v3785, %v3843
        %v3852 = vsub.f32 %v3786, %v3844
        %v3853 = vsub.f32 %v3787, %v3845
        %v3854 = vsub.f32 %v3788, %v3842
        %v3855 = vsub.f32 %v3789, %v3843
        %v3856 = vsub.f32 %v3790, %v3844
        %v3857 = vsub.f32 %v3791, %v3845
        %v3858 = vsub.f32 %v3792, %v3842
        %v3859 = vsub.f32 %v3793, %v3843
        %v3860 = vsub.f32 %v3794, %v3844
        %v3861 = vsub.f32 %v3795, %v3845
        %v3862 = vmul.f32 %v3846, %v3846
        %v3863 = vmul.f32 %v3847, %v3847
        %v3864 = vmul.f32 %v3848, %v3848
        %v3865 = vmul.f32 %v3849, %v3849
        %v3866 = vmul.f32 %v3850, %v3850
        %v3867 = vmul.f32 %v3851, %v3851
        %v3868 = vmul.f32 %v3852, %v3852
        %v3869 = vmul.f32 %v3853, %v3853
        %v3870 = vmul.f32 %v3854, %v3854
        %v3871 = vmul.f32 %v3855, %v3855
        %v3872 = vmul.f32 %v3856, %v3856
        %v3873 = vmul.f32 %v3857, %v3857
        %v3874 = vmul.f32 %v3858, %v3858
        %v3875 = vmul.f32 %v3859, %v3859
        %v3876 = vmul.f32 %v3860, %v3860
        %v3877 = vmul.f32 %v3861, %v3861
        %v3878 = vadd.f32 %v3862, %v3866
        %v3879 = vadd.f32 %v3878, %v3870
        %v3880 = vadd.f32 %v3879, %v3874
        %v3881 = vrot.slane %v3880, 4
        %v3882 = vadd.f32 %v3880, %v3881
        %v3883 = vrot.slane %v3882, 2
        %v3884 = vadd.f32 %v3882, %v3883
        %v3885 = vrot.slane %v3884, 1
        %v3886 = vadd.f32 %v3884, %v3885
        %v3887 = vadd.f32 %v3863, %v3867
        %v3888 = vadd.f32 %v3887, %v3871
        %v3889 = vadd.f32 %v3888, %v3875
        %v3890 = vrot.slane %v3889, 4
        %v3891 = vadd.f32 %v3889, %v3890
        %v3892 = vrot.slane %v3891, 2
        %v3893 = vadd.f32 %v3891, %v3892
        %v3894 = vrot.slane %v3893, 1
        %v3895 = vadd.f32 %v3893, %v3894
        %v3896 = vadd.f32 %v3864, %v3868
        %v3897 = vadd.f32 %v3896, %v3872
        %v3898 = vadd.f32 %v3897, %v3876
        %v3899 = vrot.slane %v3898, 4
        %v3900 = vadd.f32 %v3898, %v3899
        %v3901 = vrot.slane %v3900, 2
        %v3902 = vadd.f32 %v3900, %v3901
        %v3903 = vrot.slane %v3902, 1
        %v3904 = vadd.f32 %v3902, %v3903
        %v3905 = vadd.f32 %v3865, %v3869
        %v3906 = vadd.f32 %v3905, %v3873
        %v3907 = vadd.f32 %v3906, %v3877
        %v3908 = vrot.slane %v3907, 4
        %v3909 = vadd.f32 %v3907, %v3908
        %v3910 = vrot.slane %v3909, 2
        %v3911 = vadd.f32 %v3909, %v3910
        %v3912 = vrot.slane %v3911, 1
        %v3913 = vadd.f32 %v3911, %v3912
        %v3914 = vmul.f32 %v3886, %v796
        %v3915 = vmul.f32 %v3895, %v796
        %v3916 = vmul.f32 %v3904, %v796
        %v3917 = vmul.f32 %v3913, %v796
        %v3918 = vrsqrt.pop %v3914
        %v3919 = vmul.f32 %v3914, %v3918
        %vm3920 = vcmp.eq.f32.partialorder %v3914, inf
        %v3921 = vsel %vm3920, %v3914, %v3919
        %vm3922 = vcmp.eq.f32.partialorder %v3914, 0.0
        %v3923 = vand.u32 %v3914, 2147483648
        %v3924 = vsel %vm3922, %v3923, %v3921
        %v3925 = vrsqrt.pop %v3915
        %v3926 = vmul.f32 %v3915, %v3925
        %vm3927 = vcmp.eq.f32.partialorder %v3915, inf
        %v3928 = vsel %vm3927, %v3915, %v3926
        %vm3929 = vcmp.eq.f32.partialorder %v3915, 0.0
        %v3930 = vand.u32 %v3915, 2147483648
        %v3931 = vsel %vm3929, %v3930, %v3928
        %v3932 = vrsqrt.pop %v3916
        %v3933 = vmul.f32 %v3916, %v3932
        %vm3934 = vcmp.eq.f32.partialorder %v3916, inf
        %v3935 = vsel %vm3934, %v3916, %v3933
        %vm3936 = vcmp.eq.f32.partialorder %v3916, 0.0
        %v3937 = vand.u32 %v3916, 2147483648
        %v3938 = vsel %vm3936, %v3937, %v3935
        %v3939 = vrsqrt.pop %v3917
        %v3940 = vmul.f32 %v3917, %v3939
        %vm3941 = vcmp.eq.f32.partialorder %v3917, inf
        %v3942 = vsel %vm3941, %v3917, %v3940
        %vm3943 = vcmp.eq.f32.partialorder %v3917, 0.0
        %v3944 = vand.u32 %v3917, 2147483648
        %v3945 = vsel %vm3943, %v3944, %v3942
        %v3946 = vadd.f32 %v3924, 1e-05
        %v3947 = vadd.f32 %v3931, 1e-05
        %v3948 = vadd.f32 %v3938, 1e-05
        %v3949 = vadd.f32 %v3945, 1e-05
        %v3950 = vrcp.pop %v3946
        %v3951 = vrcp.pop %v3947
        %v3952 = vrcp.pop %v3948
        %v3953 = vrcp.pop %v3949
        %v3954 = vmul.f32 %v3946, %v3950
        %v3955 = vmul.f32 %v3947, %v3951
        %v3956 = vmul.f32 %v3948, %v3952
        %v3957 = vmul.f32 %v3949, %v3953
        %v3958 = vsub.f32 2.0, %v3954
        %v3959 = vsub.f32 2.0, %v3955
        %v3960 = vsub.f32 2.0, %v3956
        %v3961 = vsub.f32 2.0, %v3957
        %v3962 = vmul.f32 %v3950, %v3958
        %v3963 = vmul.f32 %v3951, %v3959
        %v3964 = vmul.f32 %v3952, %v3960
        %v3965 = vmul.f32 %v3953, %v3961
        %v3966 = vmul.f32 %v3846, %v3962
        %v3967 = vmul.f32 %v3847, %v3963
        %v3968 = vmul.f32 %v3848, %v3964
        %v3969 = vmul.f32 %v3849, %v3965
        %v3970 = vmul.f32 %v3850, %v3962
        %v3971 = vmul.f32 %v3851, %v3963
        %v3972 = vmul.f32 %v3852, %v3964
        %v3973 = vmul.f32 %v3853, %v3965
        %v3974 = vmul.f32 %v3854, %v3962
        %v3975 = vmul.f32 %v3855, %v3963
        %v3976 = vmul.f32 %v3856, %v3964
        %v3977 = vmul.f32 %v3857, %v3965
        %v3978 = vmul.f32 %v3858, %v3962
        %v3979 = vmul.f32 %v3859, %v3963
        %v3980 = vmul.f32 %v3860, %v3964
        %v3981 = vmul.f32 %v3861, %v3965
        %3983 = vset.pattern.permute.xlu0 0
        %3984 = vperm.xlu0 %3983, %v3797
        %v3985 = vpop.permute.xlu0 %3984
        %3988 = vset.pattern.permute.xlu0 0
        %3989 = vperm.xlu0 %3988, %v3798
        %v3990 = vpop.permute.xlu0 %3989
        %3993 = vset.pattern.permute.xlu0 0
        %3994 = vperm.xlu0 %3993, %v3799
        %v3995 = vpop.permute.xlu0 %3994
        %3998 = vset.pattern.permute.xlu0 0
        %3999 = vperm.xlu0 %3998, %v3800
        %v4000 = vpop.permute.xlu0 %3999
        %v4002 = vmul.f32 %v3966, %v3985
        %v4003 = vmul.f32 %v3967, %v3985
        %v4004 = vmul.f32 %v3968, %v3985
        %v4005 = vmul.f32 %v3969, %v3985
        %v4006 = vmul.f32 %v3970, %v3990
        %v4007 = vmul.f32 %v3971, %v3990
        %v4008 = vmul.f32 %v3972, %v3990
        %v4009 = vmul.f32 %v3973, %v3990
        %v4010 = vmul.f32 %v3974, %v3995
        %v4011 = vmul.f32 %v3975, %v3995
        %v4012 = vmul.f32 %v3976, %v3995
        %v4013 = vmul.f32 %v3977, %v3995
        %v4014 = vmul.f32 %v3978, %v4000
        %v4015 = vmul.f32 %v3979, %v4000
        %v4016 = vmul.f32 %v3980, %v4000
        %v4017 = vmul.f32 %v3981, %v4000
        %4019 = vset.pattern.permute.xlu0 0
        %4020 = vperm.xlu0 %4019, %v3802
        %v4021 = vpop.permute.xlu0 %4020
        %4024 = vset.pattern.permute.xlu0 0
        %4025 = vperm.xlu0 %4024, %v3803
        %v4026 = vpop.permute.xlu0 %4025
        %4029 = vset.pattern.permute.xlu0 0
        %4030 = vperm.xlu0 %4029, %v3804
        %v4031 = vpop.permute.xlu0 %4030
        %4034 = vset.pattern.permute.xlu0 0
        %4035 = vperm.xlu0 %4034, %v3805
        %v4036 = vpop.permute.xlu0 %4035
        %v4038 = vadd.f32 %v4002, %v4021
        %v4039 = vadd.f32 %v4003, %v4021
        %v4040 = vadd.f32 %v4004, %v4021
        %v4041 = vadd.f32 %v4005, %v4021
        %v4042 = vadd.f32 %v4006, %v4026
        %v4043 = vadd.f32 %v4007, %v4026
        %v4044 = vadd.f32 %v4008, %v4026
        %v4045 = vadd.f32 %v4009, %v4026
        %v4046 = vadd.f32 %v4010, %v4031
        %v4047 = vadd.f32 %v4011, %v4031
        %v4048 = vadd.f32 %v4012, %v4031
        %v4049 = vadd.f32 %v4013, %v4031
        %v4050 = vadd.f32 %v4014, %v4036
        %v4051 = vadd.f32 %v4015, %v4036
        %v4052 = vadd.f32 %v4016, %v4036
        %v4053 = vadd.f32 %v4017, %v4036
        %v4054 = vtanh.pop %v4038
        %v4055 = vtanh.pop %v4039
        %v4056 = vtanh.pop %v4040
        %v4057 = vtanh.pop %v4041
        %v4058 = vtanh.pop %v4042
        %v4059 = vtanh.pop %v4043
        %v4060 = vtanh.pop %v4044
        %v4061 = vtanh.pop %v4045
        %v4062 = vtanh.pop %v4046
        %v4063 = vtanh.pop %v4047
        %v4064 = vtanh.pop %v4048
        %v4065 = vtanh.pop %v4049
        %v4066 = vtanh.pop %v4050
        %v4067 = vtanh.pop %v4051
        %v4068 = vtanh.pop %v4052
        %v4069 = vtanh.pop %v4053
        %v4070 = vmul.f32 %v3645, %v4054
        %v4071 = vmul.f32 %v3647, %v4055
        %v4072 = vmul.f32 %v3649, %v4056
        %v4073 = vmul.f32 %v3651, %v4057
        %v4074 = vmul.f32 %v3653, %v4058
        %v4075 = vmul.f32 %v3655, %v4059
        %v4076 = vmul.f32 %v3657, %v4060
        %v4077 = vmul.f32 %v3659, %v4061
        %v4078 = vmul.f32 %v3661, %v4062
        %v4079 = vmul.f32 %v3663, %v4063
        %v4080 = vmul.f32 %v3665, %v4064
        %v4081 = vmul.f32 %v3667, %v4065
        %v4082 = vmul.f32 %v3669, %v4066
        %v4083 = vmul.f32 %v3671, %v4067
        %v4084 = vmul.f32 %v3673, %v4068
        %v4085 = vmul.f32 %v3675, %v4069
        %v4086 = vld [vmem:[%s11] sm:$0xff]
        %v4087 = vld [vmem:[%s11 + $0x8] sm:$0xff]
        %v4088 = vld [vmem:[%s11 + $0x10] sm:$0xff]
        %v4089 = vld [vmem:[%s11 + $0x18] sm:$0xff]
        %4091 = vset.pattern.permute.xlu0 0
        %4092 = vperm.xlu0 %4091, %v4086
        %v4093 = vpop.permute.xlu0 %4092
        %4096 = vset.pattern.permute.xlu0 0
        %4097 = vperm.xlu0 %4096, %v4087
        %v4098 = vpop.permute.xlu0 %4097
        %4101 = vset.pattern.permute.xlu0 0
        %4102 = vperm.xlu0 %4101, %v4088
        %v4103 = vpop.permute.xlu0 %4102
        %4106 = vset.pattern.permute.xlu0 0
        %4107 = vperm.xlu0 %4106, %v4089
        %v4108 = vpop.permute.xlu0 %4107
        %v4110 = vmul.f32 %v4093, %v4070
        %v4111 = vmul.f32 %v4093, %v4071
        %v4112 = vmul.f32 %v4093, %v4072
        %v4113 = vmul.f32 %v4093, %v4073
        %v4114 = vmul.f32 %v4098, %v4074
        %v4115 = vmul.f32 %v4098, %v4075
        %v4116 = vmul.f32 %v4098, %v4076
        %v4117 = vmul.f32 %v4098, %v4077
        %v4118 = vmul.f32 %v4103, %v4078
        %v4119 = vmul.f32 %v4103, %v4079
        %v4120 = vmul.f32 %v4103, %v4080
        %v4121 = vmul.f32 %v4103, %v4081
        %v4122 = vmul.f32 %v4108, %v4082
        %v4123 = vmul.f32 %v4108, %v4083
        %v4124 = vmul.f32 %v4108, %v4084
        %v4125 = vmul.f32 %v4108, %v4085
        %v4126 = vadd.f32 %v4110, %v4114
        %v4127 = vadd.f32 %v4126, %v4118
        %v4128 = vadd.f32 %v4127, %v4122
        %v4129 = vrot.slane %v4128, 4
        %v4130 = vadd.f32 %v4128, %v4129
        %v4131 = vrot.slane %v4130, 2
        %v4132 = vadd.f32 %v4130, %v4131
        %v4133 = vrot.slane %v4132, 1
        %v4134 = vadd.f32 %v4132, %v4133
        %v4135 = vadd.f32 %v4111, %v4115
        %v4136 = vadd.f32 %v4135, %v4119
        %v4137 = vadd.f32 %v4136, %v4123
        %v4138 = vrot.slane %v4137, 4
        %v4139 = vadd.f32 %v4137, %v4138
        %v4140 = vrot.slane %v4139, 2
        %v4141 = vadd.f32 %v4139, %v4140
        %v4142 = vrot.slane %v4141, 1
        %v4143 = vadd.f32 %v4141, %v4142
        %v4144 = vadd.f32 %v4112, %v4116
        %v4145 = vadd.f32 %v4144, %v4120
        %v4146 = vadd.f32 %v4145, %v4124
        %v4147 = vrot.slane %v4146, 4
        %v4148 = vadd.f32 %v4146, %v4147
        %v4149 = vrot.slane %v4148, 2
        %v4150 = vadd.f32 %v4148, %v4149
        %v4151 = vrot.slane %v4150, 1
        %v4152 = vadd.f32 %v4150, %v4151
        %v4153 = vadd.f32 %v4113, %v4117
        %v4154 = vadd.f32 %v4153, %v4121
        %v4155 = vadd.f32 %v4154, %v4125
        %v4156 = vrot.slane %v4155, 4
        %v4157 = vadd.f32 %v4155, %v4156
        %v4158 = vrot.slane %v4157, 2
        %v4159 = vadd.f32 %v4157, %v4158
        %v4160 = vrot.slane %v4159, 1
        %v4161 = vadd.f32 %v4159, %v4160
        %v4162 = vld [vmem:[#allocation2] sm:$0x1]
        %4164 = vset.pattern.permute.xlu0 0
        %4165 = vperm.xlu0 %4164, %v4162
        %v4166 = vpop.permute.xlu0 %4165
        %v4168 = vlaneseq
        %v4169 = vshrl.u32 %v4168, 7
        %v4170 = vsub.s32 0, %v4169
        %v4171 = vrot.slane %v4166, %v4170
        %v4172 = vadd.f32 %v4134, %v4171
        %v4173 = vadd.f32 %v4143, %v4171
        %v4174 = vadd.f32 %v4152, %v4171
        %v4175 = vadd.f32 %v4161, %v4171
        %v4180 = vcombine.low %v4172, %v4173
        %v4181 = vcombine.low %v4174, %v4175
        %v4183 = vunpack.c.l.s4 1966171168
        %v4184 = vunpack.c.0.s8 %v4183
        %v4185 = vlaneseq
        %v4186 = vshrl.u32 %v4185, 7
        %v4187 = vsub.s32 %v4184, %v4186
        %v4188 = vrot.slane %v4180, %v4187
        %v4190 = vunpack.c.l.s4 1966171168
        %v4191 = vunpack.c.0.s8 %v4190
        %v4192 = vlaneseq
        %v4193 = vshrl.u32 %v4192, 7
        %v4194 = vsub.s32 %v4191, %v4193
        %v4195 = vrot.slane %v4181, %v4194
        %v4196 = vcombine.low %v4188, %v4195
        %v4198 = vunpack.c.l.s4 1966171168
        %v4199 = vunpack.c.0.s8 %v4198
        %v4200 = vlaneseq
        %v4201 = vshrl.u32 %v4200, 7
        %v4202 = vsub.s32 %v4199, %v4201
        %v4203 = vrot.slane %v4196, %v4202
        %v4205 = vlaneseq
        %vm4206 = vcmp.ge.s32.totalorder %v4205, 0
        %vm4207 = vcmp.lt.s32.totalorder %v4205, 512
        %vm4208 = vmand %vm4206, %vm4207
        %4209 = vst.msk [vmem:[%s436] sm:$0xf] %vm4208, %v4203
        %s4210 = sand.u32 %s315, 1
        %s4211 = scalar_lea.sflag [#allocation4], %s4210
        %s4212 = sand.u32 %s315, 1
        %s4213 = smul.addr %s4212, 4
        %s4214 = scalar_lea.vmem [#allocation3], %s4213
        // Predicated region
        $region73: #{tpu_custom_call.1} parent=71 // pred_check
          %p4215 = pneg %p325
        $region74: #{tpu_custom_call.1} parent=71 // pred_check_branch
          %4217 = sbr.rel (%p4215) target = $region76
        $region75: #{tpu_custom_call.1} parent=71 // pred_region
          %s4218 = smul.u32 4, %s29
          %s4220 = ssub.s32 64, 64
          %4221 = vsyncadd %s4211, %s4220
          %s4222 = smul.addr %s4218, 16
          %s4223 = scalar_lea.hbm %s13, %s4222
          %s4225 = sshll.u32 %s4214, 4
          %s4226 = int_to_ptr.vmem [resolvable:$true] %s4225
          %4228 = dma.vmem_to_hbm [thread:$0]  %s4226, 64, %s4223, %s4211
        $region76: #{tpu_custom_call.1} parent=71 // pred_fallthru
          _
      $region72: #{tpu_custom_call.1} parent=5 // pred_fallthru
        _
      %p4229 = scmp.le.s32.totalorder 2, %s24
      // Predicated region
      $region77: #{tpu_custom_call.1} parent=5 // pred_check
        %p4230 = pneg %p4229
      $region78: #{tpu_custom_call.1} parent=5 // pred_check_branch
        %4232 = sbr.rel (%p4230) target = $region80
      $region79: #{tpu_custom_call.1} parent=5 // pred_region
        %s4233 = ssub.s32 %s24, 2
        // Predicated region
        $region81: #{tpu_custom_call.1} parent=79 // pred_check
          %p4234 = pneg %p331
        $region82: #{tpu_custom_call.1} parent=79 // pred_check_branch
          %4236 = sbr.rel (%p4234) target = $region84
        $region83: #{tpu_custom_call.1} parent=79 // pred_region
          %s4237 = sand.u32 %s316, 1
          %s4238 = scalar_lea.sflag [#allocation4], %s4237
          %s4239 = sand.u32 %s316, 1
          %s4240 = smul.addr %s4239, 4
          %s4241 = scalar_lea.vmem [#allocation3], %s4240
          %4242 = dma.done %s4238, 64
        $region84: #{tpu_custom_call.1} parent=79 // pred_fallthru
          _
      $region80: #{tpu_custom_call.1} parent=5 // pred_fallthru
        _
    $region6: #{tpu_custom_call.1} parent=1 // loop_footer
      %s28 = sadd.s32 1, %s24
    $region7: #{tpu_custom_call.1} parent=1 // loop_footer_branch
      %23 = sbr.rel target = $region3
    $region8: #{tpu_custom_call.1} parent=1 // loop_exit
      _
    %4243 = vsyncpa [#allocation4], 1
    %s4244 = scalar_lea.sflag [#allocation4], 1
    %4245 = vsyncpa %s4244, 1

</llo_original>
